<compile_context>
chip_gen: v7x
topology: tpu7x:2x2x1
jax: 0.10.0
libtpu: 0.0.40
codegen_flags: <defaults>
</compile_context>

<pallas_src>
import functools

import jax
import jax.numpy as jnp
from jax import lax
from jax.experimental import pallas as pl
from jax.experimental.pallas import tpu as pltpu

EPS_PCONV = 1e-8   # PartialConv: slide_winsize / (update_mask + 1e-8)
EPS_BN = 1e-5      # nn.BatchNorm3d default eps


# ------------------------------------------------------------------- kernel
def _bottleneck_kernel(x_ref, m_ref, w1_ref, w2_ref, w3_ref,
                       rdc_ref, expp_ref, expc_ref,
                       s1_ref, b1_ref, s2_ref, b2_ref, s3_ref, b3_ref,
                       out_ref, omask_ref,
                       pad_ref, hole_ref, col_ref,
                       *, D, H, W, P, CIN, COUT):
    """One batch element.  Packed lane-dense layout: column index = w*C + c."""
    WP = W * P
    x = x_ref[0]                                     # (D*H, W*CIN)
    m = m_ref[0]                                     # (D*H, W*CIN)

    # ---------------- conv1 (1x1x1 partial) + bn1 + relu -------------------
    # channel counts / broadcasts via exact 0/1 matmuls (no cross-lane reduces)
    cnt1 = jnp.dot(m, rdc_ref[...], preferred_element_type=jnp.float32)       # (DH, W)
    cnt1e = jnp.dot(cnt1, expp_ref[...], preferred_element_type=jnp.float32)  # (DH, W*P)
    hole1 = jnp.clip(cnt1, 0.0, 1.0)                 # spatial update mask
    hole1e = jnp.clip(cnt1e, 0.0, 1.0)               # broadcast over P channels
    ratio1 = float(CIN) * pl.reciprocal(cnt1e + EPS_PCONV, approx=True) * hole1e
    h1 = jnp.dot(x * m, w1_ref[...], preferred_element_type=jnp.float32)      # (DH, W*P)
    h1 = jnp.maximum(h1 * ratio1 * s1_ref[...] + b1_ref[...], 0.0)

    # ---------------- conv2 (3x3x3 partial, pad=1) + bn2 + relu ------------
    # halo pad folded into VMEM scratches (zero border, write interior)
    pad_ref[...] = jnp.zeros_like(pad_ref)
    hole_ref[...] = jnp.zeros_like(hole_ref)
    pad_ref[1:1 + D, 1:1 + H, P:(W + 1) * P] = (h1 * hole1e).reshape(D, H, WP)
    hole_ref[1:1 + D, 1:1 + H, 1:1 + W] = hole1.reshape(D, H, W)
    xpad = pad_ref[...]                              # (D+2, H+2, (W+2)*P)
    hpad = hole_ref[...]                             # (D+2, H+2, W+2)

    cnt2 = jnp.zeros((D * H, W), jnp.float32)
    for k in range(27):                              # im2col built in VMEM scratch
        kd, kh, kw = k // 9, (k // 3) % 3, k % 3
        col_ref[:, k * WP:(k + 1) * WP] = (
            xpad[kd:kd + D, kh:kh + H, kw * P:(kw + W) * P].reshape(D * H, WP))
        cnt2 = cnt2 + hpad[kd:kd + D, kh:kh + H, kw:kw + W].reshape(D * H, W)
    cnt2 = float(P) * cnt2                           # channel-uniform mask count
    cnt2e = jnp.dot(cnt2, expp_ref[...], preferred_element_type=jnp.float32)
    hole2 = jnp.clip(cnt2, 0.0, 1.0)
    hole2e = jnp.clip(cnt2e, 0.0, 1.0)
    ratio2 = float(27 * P) * pl.reciprocal(cnt2e + EPS_PCONV, approx=True) * hole2e
    h2 = jnp.dot(col_ref[...], w2_ref[...], preferred_element_type=jnp.float32)
    h2 = jnp.maximum(h2 * ratio2 * s2_ref[...] + b2_ref[...], 0.0)            # (DH, W*P)

    # ---------- conv3 (1x1x1 partial) + bn3 + residual/mask add + relu -----
    cnt3 = float(P) * hole2                                                   # (DH, W)
    cnt3e = jnp.dot(cnt3, expc_ref[...], preferred_element_type=jnp.float32)  # (DH, W*COUT)
    hole3e = jnp.clip(cnt3e, 0.0, 1.0)
    ratio3 = float(P) * pl.reciprocal(cnt3e + EPS_PCONV, approx=True) * hole3e
    out = jnp.dot(h2 * hole2e, w3_ref[...], preferred_element_type=jnp.float32)
    out = out * ratio3 * s3_ref[...] + b3_ref[...] + x         # residual (CIN == COUT)
    out_ref[0] = jnp.maximum(out, 0.0)               # lane-dense (DH, W*COUT) store
    omask_ref[0] = hole3e + m                        # final per-channel mask


# ------------------------------------------------------------------ wrapper
def bottleneck_forward(x, x_mask, params):
    """Fused Bottleneck forward.

    x, x_mask: (N, D, H, W, Cin) channels-last float32 (kept channels-last end
    to end -- no NCDHW<->NDHWC transposes anywhere in the pipeline).
    Returns (out, out_mask) in the same layout with Cout = Cin.
    """
    N, D, H, W, cin = x.shape
    p = params["w1"].shape[1]
    cout = params["w3"].shape[1]
    assert cin == cout, "residual/mask add requires inplanes == planes*expansion"
    # TODO(synk): stride>1 / downsample path not implemented.

    DH, WCI, WP, WCO = D * H, W * cin, W * p, W * cout

    # Pack the W axis into lanes: Kronecker (block-diagonal) expanded weights
    # keep every MXU operand and HBM block lane-dense despite tiny C.
    eye_w = jnp.eye(W, dtype=jnp.float32)
    w1e = jnp.kron(eye_w, params["w1"])                                # (W*cin, W*p)
    w2e = jnp.concatenate(
        [jnp.kron(eye_w, params["w2"][k]) for k in range(27)], axis=0)  # (27*W*p, W*p)
    w3e = jnp.kron(eye_w, params["w3"])                                # (W*p, W*cout)
    rdc = jnp.kron(eye_w, jnp.ones((cin, 1), jnp.float32))             # (W*cin, W)
    expp = jnp.kron(eye_w, jnp.ones((1, p), jnp.float32))              # (W, W*p)
    expc = jnp.kron(eye_w, jnp.ones((1, cout), jnp.float32))           # (W, W*cout)
    s1t, b1t = jnp.tile(params["s1"], (1, W)), jnp.tile(params["b1"], (1, W))
    s2t, b2t = jnp.tile(params["s2"], (1, W)), jnp.tile(params["b2"], (1, W))
    s3t, b3t = jnp.tile(params["s3"], (1, W)), jnp.tile(params["b3"], (1, W))

    kernel = functools.partial(_bottleneck_kernel,
                               D=D, H=H, W=W, P=p, CIN=cin, COUT=cout)
    full2d = lambda n: (0, 0)
    batch3d = lambda n: (n, 0, 0)

    out, omask = pl.pallas_call(
        kernel,
        out_shape=(jax.ShapeDtypeStruct((N, DH, WCO), jnp.float32),
                   jax.ShapeDtypeStruct((N, DH, WCO), jnp.float32)),
        grid=(N,),
        in_specs=[
            pl.BlockSpec((1, DH, WCI), batch3d),        # x  (lane-dense)
            pl.BlockSpec((1, DH, WCI), batch3d),        # mask
            pl.BlockSpec((WCI, WP), full2d),            # w1 kron-expanded
            pl.BlockSpec((27 * WP, WP), full2d),        # w2 im2col kron-expanded
            pl.BlockSpec((WP, WCO), full2d),            # w3 kron-expanded
            pl.BlockSpec((WCI, W), full2d),             # per-w channel count matrix
            pl.BlockSpec((W, WP), full2d),              # spatial -> P-channel expand
            pl.BlockSpec((W, WCO), full2d),             # spatial -> Cout-channel expand
            pl.BlockSpec((1, WP), full2d),              # bn1 scale
            pl.BlockSpec((1, WP), full2d),              # bn1 bias
            pl.BlockSpec((1, WP), full2d),              # bn2 scale
            pl.BlockSpec((1, WP), full2d),              # bn2 bias
            pl.BlockSpec((1, WCO), full2d),             # bn3 scale
            pl.BlockSpec((1, WCO), full2d),             # bn3 bias
        ],
        out_specs=(pl.BlockSpec((1, DH, WCO), batch3d),
                   pl.BlockSpec((1, DH, WCO), batch3d)),
        scratch_shapes=[
            pltpu.VMEM((D + 2, H + 2, (W + 2) * p), jnp.float32),  # padded h1*mask
            pltpu.VMEM((D + 2, H + 2, W + 2), jnp.float32),        # padded spatial hole
            pltpu.VMEM((DH, 27 * WP), jnp.float32),                # im2col patches
        ],
        compiler_params=pltpu.CompilerParams(
            dimension_semantics=("parallel",),           # batch across TCs on v7x
            vmem_limit_bytes=32 * 1024 * 1024),
    )(x.reshape(N, DH, WCI), x_mask.reshape(N, DH, WCI),
      w1e, w2e, w3e, rdc, expp, expc, s1t, b1t, s2t, b2t, s3t, b3t)

    return (out.reshape(N, D, H, W, cout), omask.reshape(N, D, H, W, cout))


# ------------------------------------------------------- pure-JAX reference
def _ref_partial_conv3d(x, mask, w, stride=1, padding=0):
    dn = lax.conv_dimension_numbers(x.shape, w.shape, ("NCDHW", "OIDHW", "NCDHW"))
    raw = lax.conv_general_dilated(x * mask, w, (stride,) * 3,
                                   [(padding, padding)] * 3,
                                   dimension_numbers=dn)
    cnt = lax.conv_general_dilated(mask, jnp.ones_like(w), (stride,) * 3,
                                   [(padding, padding)] * 3,
                                   dimension_numbers=dn)
    slide = w.shape[1] * w.shape[2] * w.shape[3] * w.shape[4]
    hole = jnp.clip(cnt, 0.0, 1.0)
    ratio = (slide / (cnt + EPS_PCONV)) * hole
    return raw * ratio, hole


def _ref_bn(x, scale, bias):
    return x * scale[None, :, None, None, None] + bias[None, :, None, None, None]


def _ref_bottleneck(x, xm, w1, w2, w3, s1, b1, s2, b2, s3, b3):
    out, m = _ref_partial_conv3d(x, xm, w1)
    out = jnp.maximum(_ref_bn(out, s1, b1), 0.0)
    out, m = _ref_partial_conv3d(out, m, w2, stride=1, padding=1)
    out = jnp.maximum(_ref_bn(out, s2, b2), 0.0)
    out, m = _ref_partial_conv3d(out, m, w3)
    out = _ref_bn(out, s3, b3)
    out = jnp.maximum(out + x, 0.0)
    m = m + xm
    return out, m


# ---------------------------------------------------------------------- main
def _bn_fold(key, c):
    k1, k2, k3, k4 = jax.random.split(key, 4)
    gamma = 1.0 + 0.1 * jax.random.normal(k1, (c,), jnp.float32)
    beta = 0.1 * jax.random.normal(k2, (c,), jnp.float32)
    rmean = 0.1 * jax.random.normal(k3, (c,), jnp.float32)
    rvar = 0.5 + jax.random.uniform(k4, (c,), jnp.float32)
    scale = gamma * lax.rsqrt(rvar + EPS_BN)
    bias = beta - rmean * scale
    return scale, bias


if __name__ == "__main__":
    inplanes, planes, expansion = 16, 4, 4
    N, D, H, W = 2, 4, 8, 8                     # small 3D volume

    key = jax.random.PRNGKey(0)
    ks = jax.random.split(key, 8)

    # PyTorch-format weights (bias=False)
    w1_t = 0.1 * jax.random.normal(ks[0], (planes, inplanes, 1, 1, 1), jnp.float32)
    w2_t = 0.1 * jax.random.normal(ks[1], (planes, planes, 3, 3, 3), jnp.float32)
    w3_t = 0.1 * jax.random.normal(ks[2], (planes * expansion, planes, 1, 1, 1),
                                   jnp.float32)
    s1, b1 = _bn_fold(ks[3], planes)
    s2, b2 = _bn_fold(ks[4], planes)
    s3, b3 = _bn_fold(ks[5], planes * expansion)

    params = {
        "w1": w1_t.reshape(planes, inplanes).T,                        # (Cin, Cout)
        "w2": jnp.transpose(w2_t, (2, 3, 4, 1, 0)).reshape(27, planes, planes),
        "w3": w3_t.reshape(planes * expansion, planes).T,
        "s1": s1.reshape(1, -1), "b1": b1.reshape(1, -1),
        "s2": s2.reshape(1, -1), "b2": b2.reshape(1, -1),
        "s3": s3.reshape(1, -1), "b3": b3.reshape(1, -1),
    }

    # channels-last (NDHWC) activations/masks, kept channels-last end to end
    x_l = jax.random.normal(ks[6], (N, D, H, W, inplanes), jnp.float32)
    m_l = (jax.random.uniform(ks[7], (N, D, H, W, inplanes)) > 0.3
           ).astype(jnp.float32)

    fwd = jax.jit(bottleneck_forward)
    out, out_mask = fwd(x_l, m_l, params)
    out, out_mask = jax.block_until_ready((out, out_mask))

    # reference runs in the original NCDHW layout (transposes are verification
    # only, not part of the kernel pipeline)
    x_t = jnp.transpose(x_l, (0, 4, 1, 2, 3))
    m_t = jnp.transpose(m_l, (0, 4, 1, 2, 3))
    ref_out, ref_mask = _ref_bottleneck(x_t, m_t, w1_t, w2_t, w3_t,
                                        s1, b1, s2, b2, s3, b3)
    ref_out = jnp.transpose(ref_out, (0, 2, 3, 4, 1))
    ref_mask = jnp.transpose(ref_mask, (0, 2, 3, 4, 1))

    assert out.shape == (N, D, H, W, planes * expansion)
    assert out_mask.shape == (N, D, H, W, planes * expansion)
    assert jnp.allclose(out, ref_out, atol=1e-3, rtol=1e-3), "output mismatch"
    assert jnp.allclose(out_mask, ref_mask, atol=1e-5), "mask mismatch"
    print("KERNEL_OK")
</pallas_src>

<mosaic_0001>
module attributes {stable_mosaic.version = 11 : i64} {
  func.func @_bottleneck_kernel(%arg0: i32, %arg1: memref<1x32x128xf32, #tpu.memory_space<vmem>>, %arg2: memref<1x32x128xf32, #tpu.memory_space<vmem>>, %arg3: memref<128x32xf32, #tpu.memory_space<vmem>>, %arg4: memref<864x32xf32, #tpu.memory_space<vmem>>, %arg5: memref<32x128xf32, #tpu.memory_space<vmem>>, %arg6: memref<128x8xf32, #tpu.memory_space<vmem>>, %arg7: memref<8x32xf32, #tpu.memory_space<vmem>>, %arg8: memref<8x128xf32, #tpu.memory_space<vmem>>, %arg9: memref<1x32xf32, #tpu.memory_space<vmem>>, %arg10: memref<1x32xf32, #tpu.memory_space<vmem>>, %arg11: memref<1x32xf32, #tpu.memory_space<vmem>>, %arg12: memref<1x32xf32, #tpu.memory_space<vmem>>, %arg13: memref<1x128xf32, #tpu.memory_space<vmem>>, %arg14: memref<1x128xf32, #tpu.memory_space<vmem>>, %arg15: memref<1x32x128xf32, #tpu.memory_space<vmem>>, %arg16: memref<1x32x128xf32, #tpu.memory_space<vmem>>, %arg17: memref<6x10x40xf32, #tpu.memory_space<vmem>>, %arg18: memref<6x10x10xf32, #tpu.memory_space<vmem>>, %arg19: memref<32x864xf32, #tpu.memory_space<vmem>>) attributes {dimension_semantics = [#tpu.dimension_semantics<parallel>], iteration_bounds = array<i64: 2>, scalar_prefetch = 0 : i64, scratch_operands = 3 : i64, tpu.core_type = #tpu.core_type<tc>, window_params = [{transform_indices = @transform_0, window_bounds = array<i64: 1, 32, 128>}, {transform_indices = @transform_1, window_bounds = array<i64: 1, 32, 128>}, {pipeline_mode = #tpu.pipeline_mode<synchronous>, transform_indices = @transform_2, window_bounds = array<i64: 128, 32>}, {pipeline_mode = #tpu.pipeline_mode<synchronous>, transform_indices = @transform_3, window_bounds = array<i64: 864, 32>}, {pipeline_mode = #tpu.pipeline_mode<synchronous>, transform_indices = @transform_4, window_bounds = array<i64: 32, 128>}, {pipeline_mode = #tpu.pipeline_mode<synchronous>, transform_indices = @transform_5, window_bounds = array<i64: 128, 8>}, {pipeline_mode = #tpu.pipeline_mode<synchronous>, transform_indices = @transform_6, window_bounds = array<i64: 8, 32>}, {pipeline_mode = #tpu.pipeline_mode<synchronous>, transform_indices = @transform_7, window_bounds = array<i64: 8, 128>}, {pipeline_mode = #tpu.pipeline_mode<synchronous>, transform_indices = @transform_8, window_bounds = array<i64: 1, 32>}, {pipeline_mode = #tpu.pipeline_mode<synchronous>, transform_indices = @transform_9, window_bounds = array<i64: 1, 32>}, {pipeline_mode = #tpu.pipeline_mode<synchronous>, transform_indices = @transform_10, window_bounds = array<i64: 1, 32>}, {pipeline_mode = #tpu.pipeline_mode<synchronous>, transform_indices = @transform_11, window_bounds = array<i64: 1, 32>}, {pipeline_mode = #tpu.pipeline_mode<synchronous>, transform_indices = @transform_12, window_bounds = array<i64: 1, 128>}, {pipeline_mode = #tpu.pipeline_mode<synchronous>, transform_indices = @transform_13, window_bounds = array<i64: 1, 128>}, {transform_indices = @transform_14, window_bounds = array<i64: 1, 32, 128>}, {transform_indices = @transform_15, window_bounds = array<i64: 1, 32, 128>}]} {
    %c0 = arith.constant 0 : index
    %c0_0 = arith.constant 0 : index
    %c0_1 = arith.constant 0 : index
    %0 = vector.load %arg1[%c0, %c0_0, %c0_1] : memref<1x32x128xf32, #tpu.memory_space<vmem>>, vector<1x32x128xf32>
    %1 = vector.shape_cast %0 : vector<1x32x128xf32> to vector<32x128xf32>
    %c0_2 = arith.constant 0 : index
    %c0_3 = arith.constant 0 : index
    %c0_4 = arith.constant 0 : index
    %2 = vector.load %arg2[%c0_2, %c0_3, %c0_4] : memref<1x32x128xf32, #tpu.memory_space<vmem>>, vector<1x32x128xf32>
    %3 = vector.shape_cast %2 : vector<1x32x128xf32> to vector<32x128xf32>
    %c0_5 = arith.constant 0 : index
    %c0_6 = arith.constant 0 : index
    %4 = vector.load %arg6[%c0_5, %c0_6] : memref<128x8xf32, #tpu.memory_space<vmem>>, vector<128x8xf32>
    %cst = arith.constant dense<0.000000e+00> : vector<32x8xf32>
    %5 = tpu.matmul %3, %4, %cst {dimension_numbers = #tpu.dot_dimension_numbers<[1], [0], [0], [1], [0, 0, 1, 1], [], []>} : vector<32x128xf32>, vector<128x8xf32>, vector<32x8xf32> -> vector<32x8xf32>
    %c0_7 = arith.constant 0 : index
    %c0_8 = arith.constant 0 : index
    %6 = vector.load %arg7[%c0_7, %c0_8] : memref<8x32xf32, #tpu.memory_space<vmem>>, vector<8x32xf32>
    %cst_9 = arith.constant dense<0.000000e+00> : vector<32x32xf32>
    %7 = tpu.matmul %5, %6, %cst_9 {dimension_numbers = #tpu.dot_dimension_numbers<[1], [0], [0], [1], [0, 0, 1, 1], [], []>} : vector<32x8xf32>, vector<8x32xf32>, vector<32x32xf32> -> vector<32x32xf32>
    %cst_10 = arith.constant 0.000000e+00 : f32
    %cst_11 = arith.constant 1.000000e+00 : f32
    %8 = vector.broadcast %cst_10 : f32 to vector<32x8xf32>
    %9 = arith.maximumf %8, %5 : vector<32x8xf32>
    %10 = vector.broadcast %cst_11 : f32 to vector<32x8xf32>
    %11 = arith.minimumf %10, %9 : vector<32x8xf32>
    %cst_12 = arith.constant 0.000000e+00 : f32
    %cst_13 = arith.constant 1.000000e+00 : f32
    %12 = vector.broadcast %cst_12 : f32 to vector<32x32xf32>
    %13 = arith.maximumf %12, %7 : vector<32x32xf32>
    %14 = vector.broadcast %cst_13 : f32 to vector<32x32xf32>
    %15 = arith.minimumf %14, %13 : vector<32x32xf32>
    %cst_14 = arith.constant 9.99999993E-9 : f32
    %16 = vector.broadcast %cst_14 : f32 to vector<32x32xf32>
    %17 = arith.addf %7, %16 : vector<32x32xf32>
    %18 = tpu.reciprocal %17 {approx = true} : vector<32x32xf32> -> vector<32x32xf32>
    %cst_15 = arith.constant 1.600000e+01 : f32
    %19 = vector.broadcast %cst_15 : f32 to vector<32x32xf32>
    %20 = arith.mulf %19, %18 : vector<32x32xf32>
    %21 = arith.mulf %20, %15 : vector<32x32xf32>
    %22 = arith.mulf %1, %3 : vector<32x128xf32>
    %c0_16 = arith.constant 0 : index
    %c0_17 = arith.constant 0 : index
    %23 = vector.load %arg3[%c0_16, %c0_17] : memref<128x32xf32, #tpu.memory_space<vmem>>, vector<128x32xf32>
    %cst_18 = arith.constant dense<0.000000e+00> : vector<32x32xf32>
    %24 = tpu.matmul %22, %23, %cst_18 {dimension_numbers = #tpu.dot_dimension_numbers<[1], [0], [0], [1], [0, 0, 1, 1], [], []>} : vector<32x128xf32>, vector<128x32xf32>, vector<32x32xf32> -> vector<32x32xf32>
    %25 = arith.mulf %24, %21 : vector<32x32xf32>
    %c0_19 = arith.constant 0 : index
    %c0_20 = arith.constant 0 : index
    %26 = vector.load %arg9[%c0_19, %c0_20] : memref<1x32xf32, #tpu.memory_space<vmem>>, vector<1x32xf32>
    %27 = vector.broadcast %26 : vector<1x32xf32> to vector<32x32xf32>
    %28 = arith.mulf %25, %27 : vector<32x32xf32>
    %c0_21 = arith.constant 0 : index
    %c0_22 = arith.constant 0 : index
    %29 = vector.load %arg10[%c0_21, %c0_22] : memref<1x32xf32, #tpu.memory_space<vmem>>, vector<1x32xf32>
    %30 = vector.broadcast %29 : vector<1x32xf32> to vector<32x32xf32>
    %31 = arith.addf %28, %30 : vector<32x32xf32>
    %cst_23 = arith.constant 0.000000e+00 : f32
    %32 = vector.broadcast %cst_23 : f32 to vector<32x32xf32>
    %33 = arith.maximumf %31, %32 : vector<32x32xf32>
    %cst_24 = arith.constant 0.000000e+00 : f32
    %34 = vector.broadcast %cst_24 : f32 to vector<6x10x40xf32>
    %c0_25 = arith.constant 0 : index
    %c0_26 = arith.constant 0 : index
    %c0_27 = arith.constant 0 : index
    %35 = vector.load %arg17[%c0_25, %c0_26, %c0_27] : memref<6x10x40xf32, #tpu.memory_space<vmem>>, vector<6x10x40xf32>
    tpu.vector_store %arg17[%c0_25, %c0_26, %c0_27], %34 {strides = array<i32>} : memref<6x10x40xf32, #tpu.memory_space<vmem>>, vector<6x10x40xf32>,
    %cst_28 = arith.constant 0.000000e+00 : f32
    %36 = vector.broadcast %cst_28 : f32 to vector<6x10x10xf32>
    %c0_29 = arith.constant 0 : index
    %c0_30 = arith.constant 0 : index
    %c0_31 = arith.constant 0 : index
    %37 = vector.load %arg18[%c0_29, %c0_30, %c0_31] : memref<6x10x10xf32, #tpu.memory_space<vmem>>, vector<6x10x10xf32>
    tpu.vector_store %arg18[%c0_29, %c0_30, %c0_31], %36 {strides = array<i32>} : memref<6x10x10xf32, #tpu.memory_space<vmem>>, vector<6x10x10xf32>,
    %38 = arith.mulf %33, %15 : vector<32x32xf32>
    %39 = vector.shape_cast %38 : vector<32x32xf32> to vector<4x8x32xf32>
    %c1 = arith.constant 1 : index
    %c1_32 = arith.constant 1 : index
    %c4 = arith.constant 4 : index
    %40 = vector.load %arg17[%c1, %c1_32, %c4] : memref<6x10x40xf32, #tpu.memory_space<vmem>>, vector<4x8x32xf32>
    tpu.vector_store %arg17[%c1, %c1_32, %c4], %39 {strides = array<i32>} : memref<6x10x40xf32, #tpu.memory_space<vmem>>, vector<4x8x32xf32>,
    %41 = vector.shape_cast %11 : vector<32x8xf32> to vector<4x8x8xf32>
    %c1_33 = arith.constant 1 : index
    %c1_34 = arith.constant 1 : index
    %c1_35 = arith.constant 1 : index
    %42 = vector.load %arg18[%c1_33, %c1_34, %c1_35] : memref<6x10x10xf32, #tpu.memory_space<vmem>>, vector<4x8x8xf32>
    tpu.vector_store %arg18[%c1_33, %c1_34, %c1_35], %41 {strides = array<i32>} : memref<6x10x10xf32, #tpu.memory_space<vmem>>, vector<4x8x8xf32>,
    %c0_36 = arith.constant 0 : index
    %c0_37 = arith.constant 0 : index
    %c0_38 = arith.constant 0 : index
    %43 = vector.load %arg17[%c0_36, %c0_37, %c0_38] : memref<6x10x40xf32, #tpu.memory_space<vmem>>, vector<6x10x40xf32>
    %c0_39 = arith.constant 0 : index
    %c0_40 = arith.constant 0 : index
    %c0_41 = arith.constant 0 : index
    %44 = vector.load %arg18[%c0_39, %c0_40, %c0_41] : memref<6x10x10xf32, #tpu.memory_space<vmem>>, vector<6x10x10xf32>
    %cst_42 = arith.constant 0.000000e+00 : f32
    %45 = vector.broadcast %cst_42 : f32 to vector<32x8xf32>
    %46 = vector.extract_strided_slice %43 {offsets = [0, 0, 0], sizes = [4, 8, 32], strides = [1, 1, 1]} : vector<6x10x40xf32> to vector<4x8x32xf32>
    %47 = vector.shape_cast %46 : vector<4x8x32xf32> to vector<32x32xf32>
    %c0_43 = arith.constant 0 : index
    %c0_44 = arith.constant 0 : index
    %48 = vector.load %arg19[%c0_43, %c0_44] : memref<32x864xf32, #tpu.memory_space<vmem>>, vector<32x32xf32>
    tpu.vector_store %arg19[%c0_43, %c0_44], %47 {strides = array<i32>} : memref<32x864xf32, #tpu.memory_space<vmem>>, vector<32x32xf32>,
    %49 = vector.extract_strided_slice %44 {offsets = [0, 0, 0], sizes = [4, 8, 8], strides = [1, 1, 1]} : vector<6x10x10xf32> to vector<4x8x8xf32>
    %50 = vector.shape_cast %49 : vector<4x8x8xf32> to vector<32x8xf32>
    %51 = arith.addf %45, %50 : vector<32x8xf32>
    %52 = vector.extract_strided_slice %43 {offsets = [0, 0, 4], sizes = [4, 8, 32], strides = [1, 1, 1]} : vector<6x10x40xf32> to vector<4x8x32xf32>
    %53 = vector.shape_cast %52 : vector<4x8x32xf32> to vector<32x32xf32>
    %c0_45 = arith.constant 0 : index
    %c32 = arith.constant 32 : index
    %54 = vector.load %arg19[%c0_45, %c32] : memref<32x864xf32, #tpu.memory_space<vmem>>, vector<32x32xf32>
    tpu.vector_store %arg19[%c0_45, %c32], %53 {strides = array<i32>} : memref<32x864xf32, #tpu.memory_space<vmem>>, vector<32x32xf32>,
    %55 = vector.extract_strided_slice %44 {offsets = [0, 0, 1], sizes = [4, 8, 8], strides = [1, 1, 1]} : vector<6x10x10xf32> to vector<4x8x8xf32>
    %56 = vector.shape_cast %55 : vector<4x8x8xf32> to vector<32x8xf32>
    %57 = arith.addf %51, %56 : vector<32x8xf32>
    %58 = vector.extract_strided_slice %43 {offsets = [0, 0, 8], sizes = [4, 8, 32], strides = [1, 1, 1]} : vector<6x10x40xf32> to vector<4x8x32xf32>
    %59 = vector.shape_cast %58 : vector<4x8x32xf32> to vector<32x32xf32>
    %c0_46 = arith.constant 0 : index
    %c64 = arith.constant 64 : index
    %60 = vector.load %arg19[%c0_46, %c64] : memref<32x864xf32, #tpu.memory_space<vmem>>, vector<32x32xf32>
    tpu.vector_store %arg19[%c0_46, %c64], %59 {strides = array<i32>} : memref<32x864xf32, #tpu.memory_space<vmem>>, vector<32x32xf32>,
    %61 = vector.extract_strided_slice %44 {offsets = [0, 0, 2], sizes = [4, 8, 8], strides = [1, 1, 1]} : vector<6x10x10xf32> to vector<4x8x8xf32>
    %62 = vector.shape_cast %61 : vector<4x8x8xf32> to vector<32x8xf32>
    %63 = arith.addf %57, %62 : vector<32x8xf32>
    %64 = vector.extract_strided_slice %43 {offsets = [0, 1, 0], sizes = [4, 8, 32], strides = [1, 1, 1]} : vector<6x10x40xf32> to vector<4x8x32xf32>
    %65 = vector.shape_cast %64 : vector<4x8x32xf32> to vector<32x32xf32>
    %c0_47 = arith.constant 0 : index
    %c96 = arith.constant 96 : index
    %66 = vector.load %arg19[%c0_47, %c96] : memref<32x864xf32, #tpu.memory_space<vmem>>, vector<32x32xf32>
    tpu.vector_store %arg19[%c0_47, %c96], %65 {strides = array<i32>} : memref<32x864xf32, #tpu.memory_space<vmem>>, vector<32x32xf32>,
    %67 = vector.extract_strided_slice %44 {offsets = [0, 1, 0], sizes = [4, 8, 8], strides = [1, 1, 1]} : vector<6x10x10xf32> to vector<4x8x8xf32>
    %68 = vector.shape_cast %67 : vector<4x8x8xf32> to vector<32x8xf32>
    %69 = arith.addf %63, %68 : vector<32x8xf32>
    %70 = vector.extract_strided_slice %43 {offsets = [0, 1, 4], sizes = [4, 8, 32], strides = [1, 1, 1]} : vector<6x10x40xf32> to vector<4x8x32xf32>
    %71 = vector.shape_cast %70 : vector<4x8x32xf32> to vector<32x32xf32>
    %c0_48 = arith.constant 0 : index
    %c128 = arith.constant 128 : index
    %72 = vector.load %arg19[%c0_48, %c128] : memref<32x864xf32, #tpu.memory_space<vmem>>, vector<32x32xf32>
    tpu.vector_store %arg19[%c0_48, %c128], %71 {strides = array<i32>} : memref<32x864xf32, #tpu.memory_space<vmem>>, vector<32x32xf32>,
    %73 = vector.extract_strided_slice %44 {offsets = [0, 1, 1], sizes = [4, 8, 8], strides = [1, 1, 1]} : vector<6x10x10xf32> to vector<4x8x8xf32>
    %74 = vector.shape_cast %73 : vector<4x8x8xf32> to vector<32x8xf32>
    %75 = arith.addf %69, %74 : vector<32x8xf32>
    %76 = vector.extract_strided_slice %43 {offsets = [0, 1, 8], sizes = [4, 8, 32], strides = [1, 1, 1]} : vector<6x10x40xf32> to vector<4x8x32xf32>
    %77 = vector.shape_cast %76 : vector<4x8x32xf32> to vector<32x32xf32>
    %c0_49 = arith.constant 0 : index
    %c160 = arith.constant 160 : index
    %78 = vector.load %arg19[%c0_49, %c160] : memref<32x864xf32, #tpu.memory_space<vmem>>, vector<32x32xf32>
    tpu.vector_store %arg19[%c0_49, %c160], %77 {strides = array<i32>} : memref<32x864xf32, #tpu.memory_space<vmem>>, vector<32x32xf32>,
    %79 = vector.extract_strided_slice %44 {offsets = [0, 1, 2], sizes = [4, 8, 8], strides = [1, 1, 1]} : vector<6x10x10xf32> to vector<4x8x8xf32>
    %80 = vector.shape_cast %79 : vector<4x8x8xf32> to vector<32x8xf32>
    %81 = arith.addf %75, %80 : vector<32x8xf32>
    %82 = vector.extract_strided_slice %43 {offsets = [0, 2, 0], sizes = [4, 8, 32], strides = [1, 1, 1]} : vector<6x10x40xf32> to vector<4x8x32xf32>
    %83 = vector.shape_cast %82 : vector<4x8x32xf32> to vector<32x32xf32>
    %c0_50 = arith.constant 0 : index
    %c192 = arith.constant 192 : index
    %84 = vector.load %arg19[%c0_50, %c192] : memref<32x864xf32, #tpu.memory_space<vmem>>, vector<32x32xf32>
    tpu.vector_store %arg19[%c0_50, %c192], %83 {strides = array<i32>} : memref<32x864xf32, #tpu.memory_space<vmem>>, vector<32x32xf32>,
    %85 = vector.extract_strided_slice %44 {offsets = [0, 2, 0], sizes = [4, 8, 8], strides = [1, 1, 1]} : vector<6x10x10xf32> to vector<4x8x8xf32>
    %86 = vector.shape_cast %85 : vector<4x8x8xf32> to vector<32x8xf32>
    %87 = arith.addf %81, %86 : vector<32x8xf32>
    %88 = vector.extract_strided_slice %43 {offsets = [0, 2, 4], sizes = [4, 8, 32], strides = [1, 1, 1]} : vector<6x10x40xf32> to vector<4x8x32xf32>
    %89 = vector.shape_cast %88 : vector<4x8x32xf32> to vector<32x32xf32>
    %c0_51 = arith.constant 0 : index
    %c224 = arith.constant 224 : index
    %90 = vector.load %arg19[%c0_51, %c224] : memref<32x864xf32, #tpu.memory_space<vmem>>, vector<32x32xf32>
    tpu.vector_store %arg19[%c0_51, %c224], %89 {strides = array<i32>} : memref<32x864xf32, #tpu.memory_space<vmem>>, vector<32x32xf32>,
    %91 = vector.extract_strided_slice %44 {offsets = [0, 2, 1], sizes = [4, 8, 8], strides = [1, 1, 1]} : vector<6x10x10xf32> to vector<4x8x8xf32>
    %92 = vector.shape_cast %91 : vector<4x8x8xf32> to vector<32x8xf32>
    %93 = arith.addf %87, %92 : vector<32x8xf32>
    %94 = vector.extract_strided_slice %43 {offsets = [0, 2, 8], sizes = [4, 8, 32], strides = [1, 1, 1]} : vector<6x10x40xf32> to vector<4x8x32xf32>
    %95 = vector.shape_cast %94 : vector<4x8x32xf32> to vector<32x32xf32>
    %c0_52 = arith.constant 0 : index
    %c256 = arith.constant 256 : index
    %96 = vector.load %arg19[%c0_52, %c256] : memref<32x864xf32, #tpu.memory_space<vmem>>, vector<32x32xf32>
    tpu.vector_store %arg19[%c0_52, %c256], %95 {strides = array<i32>} : memref<32x864xf32, #tpu.memory_space<vmem>>, vector<32x32xf32>,
    %97 = vector.extract_strided_slice %44 {offsets = [0, 2, 2], sizes = [4, 8, 8], strides = [1, 1, 1]} : vector<6x10x10xf32> to vector<4x8x8xf32>
    %98 = vector.shape_cast %97 : vector<4x8x8xf32> to vector<32x8xf32>
    %99 = arith.addf %93, %98 : vector<32x8xf32>
    %100 = vector.extract_strided_slice %43 {offsets = [1, 0, 0], sizes = [4, 8, 32], strides = [1, 1, 1]} : vector<6x10x40xf32> to vector<4x8x32xf32>
    %101 = vector.shape_cast %100 : vector<4x8x32xf32> to vector<32x32xf32>
    %c0_53 = arith.constant 0 : index
    %c288 = arith.constant 288 : index
    %102 = vector.load %arg19[%c0_53, %c288] : memref<32x864xf32, #tpu.memory_space<vmem>>, vector<32x32xf32>
    tpu.vector_store %arg19[%c0_53, %c288], %101 {strides = array<i32>} : memref<32x864xf32, #tpu.memory_space<vmem>>, vector<32x32xf32>,
    %103 = vector.extract_strided_slice %44 {offsets = [1, 0, 0], sizes = [4, 8, 8], strides = [1, 1, 1]} : vector<6x10x10xf32> to vector<4x8x8xf32>
    %104 = vector.shape_cast %103 : vector<4x8x8xf32> to vector<32x8xf32>
    %105 = arith.addf %99, %104 : vector<32x8xf32>
    %106 = vector.extract_strided_slice %43 {offsets = [1, 0, 4], sizes = [4, 8, 32], strides = [1, 1, 1]} : vector<6x10x40xf32> to vector<4x8x32xf32>
    %107 = vector.shape_cast %106 : vector<4x8x32xf32> to vector<32x32xf32>
    %c0_54 = arith.constant 0 : index
    %c320 = arith.constant 320 : index
    %108 = vector.load %arg19[%c0_54, %c320] : memref<32x864xf32, #tpu.memory_space<vmem>>, vector<32x32xf32>
    tpu.vector_store %arg19[%c0_54, %c320], %107 {strides = array<i32>} : memref<32x864xf32, #tpu.memory_space<vmem>>, vector<32x32xf32>,
    %109 = vector.extract_strided_slice %44 {offsets = [1, 0, 1], sizes = [4, 8, 8], strides = [1, 1, 1]} : vector<6x10x10xf32> to vector<4x8x8xf32>
    %110 = vector.shape_cast %109 : vector<4x8x8xf32> to vector<32x8xf32>
    %111 = arith.addf %105, %110 : vector<32x8xf32>
    %112 = vector.extract_strided_slice %43 {offsets = [1, 0, 8], sizes = [4, 8, 32], strides = [1, 1, 1]} : vector<6x10x40xf32> to vector<4x8x32xf32>
    %113 = vector.shape_cast %112 : vector<4x8x32xf32> to vector<32x32xf32>
    %c0_55 = arith.constant 0 : index
    %c352 = arith.constant 352 : index
    %114 = vector.load %arg19[%c0_55, %c352] : memref<32x864xf32, #tpu.memory_space<vmem>>, vector<32x32xf32>
    tpu.vector_store %arg19[%c0_55, %c352], %113 {strides = array<i32>} : memref<32x864xf32, #tpu.memory_space<vmem>>, vector<32x32xf32>,
    %115 = vector.extract_strided_slice %44 {offsets = [1, 0, 2], sizes = [4, 8, 8], strides = [1, 1, 1]} : vector<6x10x10xf32> to vector<4x8x8xf32>
    %116 = vector.shape_cast %115 : vector<4x8x8xf32> to vector<32x8xf32>
    %117 = arith.addf %111, %116 : vector<32x8xf32>
    %118 = vector.extract_strided_slice %43 {offsets = [1, 1, 0], sizes = [4, 8, 32], strides = [1, 1, 1]} : vector<6x10x40xf32> to vector<4x8x32xf32>
    %119 = vector.shape_cast %118 : vector<4x8x32xf32> to vector<32x32xf32>
    %c0_56 = arith.constant 0 : index
    %c384 = arith.constant 384 : index
    %120 = vector.load %arg19[%c0_56, %c384] : memref<32x864xf32, #tpu.memory_space<vmem>>, vector<32x32xf32>
    tpu.vector_store %arg19[%c0_56, %c384], %119 {strides = array<i32>} : memref<32x864xf32, #tpu.memory_space<vmem>>, vector<32x32xf32>,
    %121 = vector.extract_strided_slice %44 {offsets = [1, 1, 0], sizes = [4, 8, 8], strides = [1, 1, 1]} : vector<6x10x10xf32> to vector<4x8x8xf32>
    %122 = vector.shape_cast %121 : vector<4x8x8xf32> to vector<32x8xf32>
    %123 = arith.addf %117, %122 : vector<32x8xf32>
    %124 = vector.extract_strided_slice %43 {offsets = [1, 1, 4], sizes = [4, 8, 32], strides = [1, 1, 1]} : vector<6x10x40xf32> to vector<4x8x32xf32>
    %125 = vector.shape_cast %124 : vector<4x8x32xf32> to vector<32x32xf32>
    %c0_57 = arith.constant 0 : index
    %c416 = arith.constant 416 : index
    %126 = vector.load %arg19[%c0_57, %c416] : memref<32x864xf32, #tpu.memory_space<vmem>>, vector<32x32xf32>
    tpu.vector_store %arg19[%c0_57, %c416], %125 {strides = array<i32>} : memref<32x864xf32, #tpu.memory_space<vmem>>, vector<32x32xf32>,
    %127 = vector.extract_strided_slice %44 {offsets = [1, 1, 1], sizes = [4, 8, 8], strides = [1, 1, 1]} : vector<6x10x10xf32> to vector<4x8x8xf32>
    %128 = vector.shape_cast %127 : vector<4x8x8xf32> to vector<32x8xf32>
    %129 = arith.addf %123, %128 : vector<32x8xf32>
    %130 = vector.extract_strided_slice %43 {offsets = [1, 1, 8], sizes = [4, 8, 32], strides = [1, 1, 1]} : vector<6x10x40xf32> to vector<4x8x32xf32>
    %131 = vector.shape_cast %130 : vector<4x8x32xf32> to vector<32x32xf32>
    %c0_58 = arith.constant 0 : index
    %c448 = arith.constant 448 : index
    %132 = vector.load %arg19[%c0_58, %c448] : memref<32x864xf32, #tpu.memory_space<vmem>>, vector<32x32xf32>
    tpu.vector_store %arg19[%c0_58, %c448], %131 {strides = array<i32>} : memref<32x864xf32, #tpu.memory_space<vmem>>, vector<32x32xf32>,
    %133 = vector.extract_strided_slice %44 {offsets = [1, 1, 2], sizes = [4, 8, 8], strides = [1, 1, 1]} : vector<6x10x10xf32> to vector<4x8x8xf32>
    %134 = vector.shape_cast %133 : vector<4x8x8xf32> to vector<32x8xf32>
    %135 = arith.addf %129, %134 : vector<32x8xf32>
    %136 = vector.extract_strided_slice %43 {offsets = [1, 2, 0], sizes = [4, 8, 32], strides = [1, 1, 1]} : vector<6x10x40xf32> to vector<4x8x32xf32>
    %137 = vector.shape_cast %136 : vector<4x8x32xf32> to vector<32x32xf32>
    %c0_59 = arith.constant 0 : index
    %c480 = arith.constant 480 : index
    %138 = vector.load %arg19[%c0_59, %c480] : memref<32x864xf32, #tpu.memory_space<vmem>>, vector<32x32xf32>
    tpu.vector_store %arg19[%c0_59, %c480], %137 {strides = array<i32>} : memref<32x864xf32, #tpu.memory_space<vmem>>, vector<32x32xf32>,
    %139 = vector.extract_strided_slice %44 {offsets = [1, 2, 0], sizes = [4, 8, 8], strides = [1, 1, 1]} : vector<6x10x10xf32> to vector<4x8x8xf32>
    %140 = vector.shape_cast %139 : vector<4x8x8xf32> to vector<32x8xf32>
    %141 = arith.addf %135, %140 : vector<32x8xf32>
    %142 = vector.extract_strided_slice %43 {offsets = [1, 2, 4], sizes = [4, 8, 32], strides = [1, 1, 1]} : vector<6x10x40xf32> to vector<4x8x32xf32>
    %143 = vector.shape_cast %142 : vector<4x8x32xf32> to vector<32x32xf32>
    %c0_60 = arith.constant 0 : index
    %c512 = arith.constant 512 : index
    %144 = vector.load %arg19[%c0_60, %c512] : memref<32x864xf32, #tpu.memory_space<vmem>>, vector<32x32xf32>
    tpu.vector_store %arg19[%c0_60, %c512], %143 {strides = array<i32>} : memref<32x864xf32, #tpu.memory_space<vmem>>, vector<32x32xf32>,
    %145 = vector.extract_strided_slice %44 {offsets = [1, 2, 1], sizes = [4, 8, 8], strides = [1, 1, 1]} : vector<6x10x10xf32> to vector<4x8x8xf32>
    %146 = vector.shape_cast %145 : vector<4x8x8xf32> to vector<32x8xf32>
    %147 = arith.addf %141, %146 : vector<32x8xf32>
    %148 = vector.extract_strided_slice %43 {offsets = [1, 2, 8], sizes = [4, 8, 32], strides = [1, 1, 1]} : vector<6x10x40xf32> to vector<4x8x32xf32>
    %149 = vector.shape_cast %148 : vector<4x8x32xf32> to vector<32x32xf32>
    %c0_61 = arith.constant 0 : index
    %c544 = arith.constant 544 : index
    %150 = vector.load %arg19[%c0_61, %c544] : memref<32x864xf32, #tpu.memory_space<vmem>>, vector<32x32xf32>
    tpu.vector_store %arg19[%c0_61, %c544], %149 {strides = array<i32>} : memref<32x864xf32, #tpu.memory_space<vmem>>, vector<32x32xf32>,
    %151 = vector.extract_strided_slice %44 {offsets = [1, 2, 2], sizes = [4, 8, 8], strides = [1, 1, 1]} : vector<6x10x10xf32> to vector<4x8x8xf32>
    %152 = vector.shape_cast %151 : vector<4x8x8xf32> to vector<32x8xf32>
    %153 = arith.addf %147, %152 : vector<32x8xf32>
    %154 = vector.extract_strided_slice %43 {offsets = [2, 0, 0], sizes = [4, 8, 32], strides = [1, 1, 1]} : vector<6x10x40xf32> to vector<4x8x32xf32>
    %155 = vector.shape_cast %154 : vector<4x8x32xf32> to vector<32x32xf32>
    %c0_62 = arith.constant 0 : index
    %c576 = arith.constant 576 : index
    %156 = vector.load %arg19[%c0_62, %c576] : memref<32x864xf32, #tpu.memory_space<vmem>>, vector<32x32xf32>
    tpu.vector_store %arg19[%c0_62, %c576], %155 {strides = array<i32>} : memref<32x864xf32, #tpu.memory_space<vmem>>, vector<32x32xf32>,
    %157 = vector.extract_strided_slice %44 {offsets = [2, 0, 0], sizes = [4, 8, 8], strides = [1, 1, 1]} : vector<6x10x10xf32> to vector<4x8x8xf32>
    %158 = vector.shape_cast %157 : vector<4x8x8xf32> to vector<32x8xf32>
    %159 = arith.addf %153, %158 : vector<32x8xf32>
    %160 = vector.extract_strided_slice %43 {offsets = [2, 0, 4], sizes = [4, 8, 32], strides = [1, 1, 1]} : vector<6x10x40xf32> to vector<4x8x32xf32>
    %161 = vector.shape_cast %160 : vector<4x8x32xf32> to vector<32x32xf32>
    %c0_63 = arith.constant 0 : index
    %c608 = arith.constant 608 : index
    %162 = vector.load %arg19[%c0_63, %c608] : memref<32x864xf32, #tpu.memory_space<vmem>>, vector<32x32xf32>
    tpu.vector_store %arg19[%c0_63, %c608], %161 {strides = array<i32>} : memref<32x864xf32, #tpu.memory_space<vmem>>, vector<32x32xf32>,
    %163 = vector.extract_strided_slice %44 {offsets = [2, 0, 1], sizes = [4, 8, 8], strides = [1, 1, 1]} : vector<6x10x10xf32> to vector<4x8x8xf32>
    %164 = vector.shape_cast %163 : vector<4x8x8xf32> to vector<32x8xf32>
    %165 = arith.addf %159, %164 : vector<32x8xf32>
    %166 = vector.extract_strided_slice %43 {offsets = [2, 0, 8], sizes = [4, 8, 32], strides = [1, 1, 1]} : vector<6x10x40xf32> to vector<4x8x32xf32>
    %167 = vector.shape_cast %166 : vector<4x8x32xf32> to vector<32x32xf32>
    %c0_64 = arith.constant 0 : index
    %c640 = arith.constant 640 : index
    %168 = vector.load %arg19[%c0_64, %c640] : memref<32x864xf32, #tpu.memory_space<vmem>>, vector<32x32xf32>
    tpu.vector_store %arg19[%c0_64, %c640], %167 {strides = array<i32>} : memref<32x864xf32, #tpu.memory_space<vmem>>, vector<32x32xf32>,
    %169 = vector.extract_strided_slice %44 {offsets = [2, 0, 2], sizes = [4, 8, 8], strides = [1, 1, 1]} : vector<6x10x10xf32> to vector<4x8x8xf32>
    %170 = vector.shape_cast %169 : vector<4x8x8xf32> to vector<32x8xf32>
    %171 = arith.addf %165, %170 : vector<32x8xf32>
    %172 = vector.extract_strided_slice %43 {offsets = [2, 1, 0], sizes = [4, 8, 32], strides = [1, 1, 1]} : vector<6x10x40xf32> to vector<4x8x32xf32>
    %173 = vector.shape_cast %172 : vector<4x8x32xf32> to vector<32x32xf32>
    %c0_65 = arith.constant 0 : index
    %c672 = arith.constant 672 : index
    %174 = vector.load %arg19[%c0_65, %c672] : memref<32x864xf32, #tpu.memory_space<vmem>>, vector<32x32xf32>
    tpu.vector_store %arg19[%c0_65, %c672], %173 {strides = array<i32>} : memref<32x864xf32, #tpu.memory_space<vmem>>, vector<32x32xf32>,
    %175 = vector.extract_strided_slice %44 {offsets = [2, 1, 0], sizes = [4, 8, 8], strides = [1, 1, 1]} : vector<6x10x10xf32> to vector<4x8x8xf32>
    %176 = vector.shape_cast %175 : vector<4x8x8xf32> to vector<32x8xf32>
    %177 = arith.addf %171, %176 : vector<32x8xf32>
    %178 = vector.extract_strided_slice %43 {offsets = [2, 1, 4], sizes = [4, 8, 32], strides = [1, 1, 1]} : vector<6x10x40xf32> to vector<4x8x32xf32>
    %179 = vector.shape_cast %178 : vector<4x8x32xf32> to vector<32x32xf32>
    %c0_66 = arith.constant 0 : index
    %c704 = arith.constant 704 : index
    %180 = vector.load %arg19[%c0_66, %c704] : memref<32x864xf32, #tpu.memory_space<vmem>>, vector<32x32xf32>
    tpu.vector_store %arg19[%c0_66, %c704], %179 {strides = array<i32>} : memref<32x864xf32, #tpu.memory_space<vmem>>, vector<32x32xf32>,
    %181 = vector.extract_strided_slice %44 {offsets = [2, 1, 1], sizes = [4, 8, 8], strides = [1, 1, 1]} : vector<6x10x10xf32> to vector<4x8x8xf32>
    %182 = vector.shape_cast %181 : vector<4x8x8xf32> to vector<32x8xf32>
    %183 = arith.addf %177, %182 : vector<32x8xf32>
    %184 = vector.extract_strided_slice %43 {offsets = [2, 1, 8], sizes = [4, 8, 32], strides = [1, 1, 1]} : vector<6x10x40xf32> to vector<4x8x32xf32>
    %185 = vector.shape_cast %184 : vector<4x8x32xf32> to vector<32x32xf32>
    %c0_67 = arith.constant 0 : index
    %c736 = arith.constant 736 : index
    %186 = vector.load %arg19[%c0_67, %c736] : memref<32x864xf32, #tpu.memory_space<vmem>>, vector<32x32xf32>
    tpu.vector_store %arg19[%c0_67, %c736], %185 {strides = array<i32>} : memref<32x864xf32, #tpu.memory_space<vmem>>, vector<32x32xf32>,
    %187 = vector.extract_strided_slice %44 {offsets = [2, 1, 2], sizes = [4, 8, 8], strides = [1, 1, 1]} : vector<6x10x10xf32> to vector<4x8x8xf32>
    %188 = vector.shape_cast %187 : vector<4x8x8xf32> to vector<32x8xf32>
    %189 = arith.addf %183, %188 : vector<32x8xf32>
    %190 = vector.extract_strided_slice %43 {offsets = [2, 2, 0], sizes = [4, 8, 32], strides = [1, 1, 1]} : vector<6x10x40xf32> to vector<4x8x32xf32>
    %191 = vector.shape_cast %190 : vector<4x8x32xf32> to vector<32x32xf32>
    %c0_68 = arith.constant 0 : index
    %c768 = arith.constant 768 : index
    %192 = vector.load %arg19[%c0_68, %c768] : memref<32x864xf32, #tpu.memory_space<vmem>>, vector<32x32xf32>
    tpu.vector_store %arg19[%c0_68, %c768], %191 {strides = array<i32>} : memref<32x864xf32, #tpu.memory_space<vmem>>, vector<32x32xf32>,
    %193 = vector.extract_strided_slice %44 {offsets = [2, 2, 0], sizes = [4, 8, 8], strides = [1, 1, 1]} : vector<6x10x10xf32> to vector<4x8x8xf32>
    %194 = vector.shape_cast %193 : vector<4x8x8xf32> to vector<32x8xf32>
    %195 = arith.addf %189, %194 : vector<32x8xf32>
    %196 = vector.extract_strided_slice %43 {offsets = [2, 2, 4], sizes = [4, 8, 32], strides = [1, 1, 1]} : vector<6x10x40xf32> to vector<4x8x32xf32>
    %197 = vector.shape_cast %196 : vector<4x8x32xf32> to vector<32x32xf32>
    %c0_69 = arith.constant 0 : index
    %c800 = arith.constant 800 : index
    %198 = vector.load %arg19[%c0_69, %c800] : memref<32x864xf32, #tpu.memory_space<vmem>>, vector<32x32xf32>
    tpu.vector_store %arg19[%c0_69, %c800], %197 {strides = array<i32>} : memref<32x864xf32, #tpu.memory_space<vmem>>, vector<32x32xf32>,
    %199 = vector.extract_strided_slice %44 {offsets = [2, 2, 1], sizes = [4, 8, 8], strides = [1, 1, 1]} : vector<6x10x10xf32> to vector<4x8x8xf32>
    %200 = vector.shape_cast %199 : vector<4x8x8xf32> to vector<32x8xf32>
    %201 = arith.addf %195, %200 : vector<32x8xf32>
    %202 = vector.extract_strided_slice %43 {offsets = [2, 2, 8], sizes = [4, 8, 32], strides = [1, 1, 1]} : vector<6x10x40xf32> to vector<4x8x32xf32>
    %203 = vector.shape_cast %202 : vector<4x8x32xf32> to vector<32x32xf32>
    %c0_70 = arith.constant 0 : index
    %c832 = arith.constant 832 : index
    %204 = vector.load %arg19[%c0_70, %c832] : memref<32x864xf32, #tpu.memory_space<vmem>>, vector<32x32xf32>
    tpu.vector_store %arg19[%c0_70, %c832], %203 {strides = array<i32>} : memref<32x864xf32, #tpu.memory_space<vmem>>, vector<32x32xf32>,
    %205 = vector.extract_strided_slice %44 {offsets = [2, 2, 2], sizes = [4, 8, 8], strides = [1, 1, 1]} : vector<6x10x10xf32> to vector<4x8x8xf32>
    %206 = vector.shape_cast %205 : vector<4x8x8xf32> to vector<32x8xf32>
    %207 = arith.addf %201, %206 : vector<32x8xf32>
    %cst_71 = arith.constant 4.000000e+00 : f32
    %208 = vector.broadcast %cst_71 : f32 to vector<32x8xf32>
    %209 = arith.mulf %208, %207 : vector<32x8xf32>
    %c0_72 = arith.constant 0 : index
    %c0_73 = arith.constant 0 : index
    %210 = vector.load %arg7[%c0_72, %c0_73] : memref<8x32xf32, #tpu.memory_space<vmem>>, vector<8x32xf32>
    %cst_74 = arith.constant dense<0.000000e+00> : vector<32x32xf32>
    %211 = tpu.matmul %209, %210, %cst_74 {dimension_numbers = #tpu.dot_dimension_numbers<[1], [0], [0], [1], [0, 0, 1, 1], [], []>} : vector<32x8xf32>, vector<8x32xf32>, vector<32x32xf32> -> vector<32x32xf32>
    %cst_75 = arith.constant 0.000000e+00 : f32
    %cst_76 = arith.constant 1.000000e+00 : f32
    %212 = vector.broadcast %cst_75 : f32 to vector<32x8xf32>
    %213 = arith.maximumf %212, %209 : vector<32x8xf32>
    %214 = vector.broadcast %cst_76 : f32 to vector<32x8xf32>
    %215 = arith.minimumf %214, %213 : vector<32x8xf32>
    %cst_77 = arith.constant 0.000000e+00 : f32
    %cst_78 = arith.constant 1.000000e+00 : f32
    %216 = vector.broadcast %cst_77 : f32 to vector<32x32xf32>
    %217 = arith.maximumf %216, %211 : vector<32x32xf32>
    %218 = vector.broadcast %cst_78 : f32 to vector<32x32xf32>
    %219 = arith.minimumf %218, %217 : vector<32x32xf32>
    %cst_79 = arith.constant 9.99999993E-9 : f32
    %220 = vector.broadcast %cst_79 : f32 to vector<32x32xf32>
    %221 = arith.addf %211, %220 : vector<32x32xf32>
    %222 = tpu.reciprocal %221 {approx = true} : vector<32x32xf32> -> vector<32x32xf32>
    %cst_80 = arith.constant 1.080000e+02 : f32
    %223 = vector.broadcast %cst_80 : f32 to vector<32x32xf32>
    %224 = arith.mulf %223, %222 : vector<32x32xf32>
    %225 = arith.mulf %224, %219 : vector<32x32xf32>
    %c0_81 = arith.constant 0 : index
    %c0_82 = arith.constant 0 : index
    %226 = vector.load %arg19[%c0_81, %c0_82] : memref<32x864xf32, #tpu.memory_space<vmem>>, vector<32x864xf32>
    %c0_83 = arith.constant 0 : index
    %c0_84 = arith.constant 0 : index
    %227 = vector.load %arg4[%c0_83, %c0_84] : memref<864x32xf32, #tpu.memory_space<vmem>>, vector<864x32xf32>
    %cst_85 = arith.constant dense<0.000000e+00> : vector<32x32xf32>
    %228 = tpu.matmul %226, %227, %cst_85 {dimension_numbers = #tpu.dot_dimension_numbers<[1], [0], [0], [1], [0, 0, 1, 1], [], []>} : vector<32x864xf32>, vector<864x32xf32>, vector<32x32xf32> -> vector<32x32xf32>
    %229 = arith.mulf %228, %225 : vector<32x32xf32>
    %c0_86 = arith.constant 0 : index
    %c0_87 = arith.constant 0 : index
    %230 = vector.load %arg11[%c0_86, %c0_87] : memref<1x32xf32, #tpu.memory_space<vmem>>, vector<1x32xf32>
    %231 = vector.broadcast %230 : vector<1x32xf32> to vector<32x32xf32>
    %232 = arith.mulf %229, %231 : vector<32x32xf32>
    %c0_88 = arith.constant 0 : index
    %c0_89 = arith.constant 0 : index
    %233 = vector.load %arg12[%c0_88, %c0_89] : memref<1x32xf32, #tpu.memory_space<vmem>>, vector<1x32xf32>
    %234 = vector.broadcast %233 : vector<1x32xf32> to vector<32x32xf32>
    %235 = arith.addf %232, %234 : vector<32x32xf32>
    %cst_90 = arith.constant 0.000000e+00 : f32
    %236 = vector.broadcast %cst_90 : f32 to vector<32x32xf32>
    %237 = arith.maximumf %235, %236 : vector<32x32xf32>
    %cst_91 = arith.constant 4.000000e+00 : f32
    %238 = vector.broadcast %cst_91 : f32 to vector<32x8xf32>
    %239 = arith.mulf %238, %215 : vector<32x8xf32>
    %c0_92 = arith.constant 0 : index
    %c0_93 = arith.constant 0 : index
    %240 = vector.load %arg8[%c0_92, %c0_93] : memref<8x128xf32, #tpu.memory_space<vmem>>, vector<8x128xf32>
    %cst_94 = arith.constant dense<0.000000e+00> : vector<32x128xf32>
    %241 = tpu.matmul %239, %240, %cst_94 {dimension_numbers = #tpu.dot_dimension_numbers<[1], [0], [0], [1], [0, 0, 1, 1], [], []>} : vector<32x8xf32>, vector<8x128xf32>, vector<32x128xf32> -> vector<32x128xf32>
    %cst_95 = arith.constant 0.000000e+00 : f32
    %cst_96 = arith.constant 1.000000e+00 : f32
    %242 = vector.broadcast %cst_95 : f32 to vector<32x128xf32>
    %243 = arith.maximumf %242, %241 : vector<32x128xf32>
    %244 = vector.broadcast %cst_96 : f32 to vector<32x128xf32>
    %245 = arith.minimumf %244, %243 : vector<32x128xf32>
    %cst_97 = arith.constant 9.99999993E-9 : f32
    %246 = vector.broadcast %cst_97 : f32 to vector<32x128xf32>
    %247 = arith.addf %241, %246 : vector<32x128xf32>
    %248 = tpu.reciprocal %247 {approx = true} : vector<32x128xf32> -> vector<32x128xf32>
    %cst_98 = arith.constant 4.000000e+00 : f32
    %249 = vector.broadcast %cst_98 : f32 to vector<32x128xf32>
    %250 = arith.mulf %249, %248 : vector<32x128xf32>
    %251 = arith.mulf %250, %245 : vector<32x128xf32>
    %252 = arith.mulf %237, %219 : vector<32x32xf32>
    %c0_99 = arith.constant 0 : index
    %c0_100 = arith.constant 0 : index
    %253 = vector.load %arg5[%c0_99, %c0_100] : memref<32x128xf32, #tpu.memory_space<vmem>>, vector<32x128xf32>
    %cst_101 = arith.constant dense<0.000000e+00> : vector<32x128xf32>
    %254 = tpu.matmul %252, %253, %cst_101 {dimension_numbers = #tpu.dot_dimension_numbers<[1], [0], [0], [1], [0, 0, 1, 1], [], []>} : vector<32x32xf32>, vector<32x128xf32>, vector<32x128xf32> -> vector<32x128xf32>
    %255 = arith.mulf %254, %251 : vector<32x128xf32>
    %c0_102 = arith.constant 0 : index
    %c0_103 = arith.constant 0 : index
    %256 = vector.load %arg13[%c0_102, %c0_103] : memref<1x128xf32, #tpu.memory_space<vmem>>, vector<1x128xf32>
    %257 = vector.broadcast %256 : vector<1x128xf32> to vector<32x128xf32>
    %258 = arith.mulf %255, %257 : vector<32x128xf32>
    %c0_104 = arith.constant 0 : index
    %c0_105 = arith.constant 0 : index
    %259 = vector.load %arg14[%c0_104, %c0_105] : memref<1x128xf32, #tpu.memory_space<vmem>>, vector<1x128xf32>
    %260 = vector.broadcast %259 : vector<1x128xf32> to vector<32x128xf32>
    %261 = arith.addf %258, %260 : vector<32x128xf32>
    %262 = arith.addf %261, %1 : vector<32x128xf32>
    %cst_106 = arith.constant 0.000000e+00 : f32
    %263 = vector.broadcast %cst_106 : f32 to vector<32x128xf32>
    %264 = arith.maximumf %262, %263 : vector<32x128xf32>
    %c0_107 = arith.constant 0 : index
    %c0_108 = arith.constant 0 : index
    %c0_109 = arith.constant 0 : index
    %265 = vector.load %arg15[%c0_107, %c0_108, %c0_109] : memref<1x32x128xf32, #tpu.memory_space<vmem>>, vector<1x32x128xf32>
    %266 = vector.shape_cast %265 : vector<1x32x128xf32> to vector<32x128xf32>
    %267 = vector.shape_cast %264 : vector<32x128xf32> to vector<1x32x128xf32>
    tpu.vector_store %arg15[%c0_107, %c0_108, %c0_109], %267 {strides = array<i32>} : memref<1x32x128xf32, #tpu.memory_space<vmem>>, vector<1x32x128xf32>,
    %268 = arith.addf %245, %3 : vector<32x128xf32>
    %c0_110 = arith.constant 0 : index
    %c0_111 = arith.constant 0 : index
    %c0_112 = arith.constant 0 : index
    %269 = vector.load %arg16[%c0_110, %c0_111, %c0_112] : memref<1x32x128xf32, #tpu.memory_space<vmem>>, vector<1x32x128xf32>
    %270 = vector.shape_cast %269 : vector<1x32x128xf32> to vector<32x128xf32>
    %271 = vector.shape_cast %268 : vector<32x128xf32> to vector<1x32x128xf32>
    tpu.vector_store %arg16[%c0_110, %c0_111, %c0_112], %271 {strides = array<i32>} : memref<1x32x128xf32, #tpu.memory_space<vmem>>, vector<1x32x128xf32>,
    return
  }
  func.func @transform_0(%arg0: i32) -> (i32, i32, i32) {
    %c0_i32 = arith.constant 0 : i32
    %c0_i32_0 = arith.constant 0 : i32
    %c0_i32_1 = arith.constant 0 : i32
    return %arg0, %c0_i32, %c0_i32_0 : i32, i32, i32
  }
  func.func @transform_1(%arg0: i32) -> (i32, i32, i32) {
    %c0_i32 = arith.constant 0 : i32
    %c0_i32_0 = arith.constant 0 : i32
    %c0_i32_1 = arith.constant 0 : i32
    return %arg0, %c0_i32, %c0_i32_0 : i32, i32, i32
  }
  func.func @transform_2(%arg0: i32) -> (i32, i32) {
    %c0_i32 = arith.constant 0 : i32
    %c0_i32_0 = arith.constant 0 : i32
    %c0_i32_1 = arith.constant 0 : i32
    return %c0_i32, %c0_i32_0 : i32, i32
  }
  func.func @transform_3(%arg0: i32) -> (i32, i32) {
    %c0_i32 = arith.constant 0 : i32
    %c0_i32_0 = arith.constant 0 : i32
    %c0_i32_1 = arith.constant 0 : i32
    return %c0_i32, %c0_i32_0 : i32, i32
  }
  func.func @transform_4(%arg0: i32) -> (i32, i32) {
    %c0_i32 = arith.constant 0 : i32
    %c0_i32_0 = arith.constant 0 : i32
    %c0_i32_1 = arith.constant 0 : i32
    return %c0_i32, %c0_i32_0 : i32, i32
  }
  func.func @transform_5(%arg0: i32) -> (i32, i32) {
    %c0_i32 = arith.constant 0 : i32
    %c0_i32_0 = arith.constant 0 : i32
    %c0_i32_1 = arith.constant 0 : i32
    return %c0_i32, %c0_i32_0 : i32, i32
  }
  func.func @transform_6(%arg0: i32) -> (i32, i32) {
    %c0_i32 = arith.constant 0 : i32
    %c0_i32_0 = arith.constant 0 : i32
    %c0_i32_1 = arith.constant 0 : i32
    return %c0_i32, %c0_i32_0 : i32, i32
  }
  func.func @transform_7(%arg0: i32) -> (i32, i32) {
    %c0_i32 = arith.constant 0 : i32
    %c0_i32_0 = arith.constant 0 : i32
    %c0_i32_1 = arith.constant 0 : i32
    return %c0_i32, %c0_i32_0 : i32, i32
  }
  func.func @transform_8(%arg0: i32) -> (i32, i32) {
    %c0_i32 = arith.constant 0 : i32
    %c0_i32_0 = arith.constant 0 : i32
    %c0_i32_1 = arith.constant 0 : i32
    return %c0_i32, %c0_i32_0 : i32, i32
  }
  func.func @transform_9(%arg0: i32) -> (i32, i32) {
    %c0_i32 = arith.constant 0 : i32
    %c0_i32_0 = arith.constant 0 : i32
    %c0_i32_1 = arith.constant 0 : i32
    return %c0_i32, %c0_i32_0 : i32, i32
  }
  func.func @transform_10(%arg0: i32) -> (i32, i32) {
    %c0_i32 = arith.constant 0 : i32
    %c0_i32_0 = arith.constant 0 : i32
    %c0_i32_1 = arith.constant 0 : i32
    return %c0_i32, %c0_i32_0 : i32, i32
  }
  func.func @transform_11(%arg0: i32) -> (i32, i32) {
    %c0_i32 = arith.constant 0 : i32
    %c0_i32_0 = arith.constant 0 : i32
    %c0_i32_1 = arith.constant 0 : i32
    return %c0_i32, %c0_i32_0 : i32, i32
  }
  func.func @transform_12(%arg0: i32) -> (i32, i32) {
    %c0_i32 = arith.constant 0 : i32
    %c0_i32_0 = arith.constant 0 : i32
    %c0_i32_1 = arith.constant 0 : i32
    return %c0_i32, %c0_i32_0 : i32, i32
  }
  func.func @transform_13(%arg0: i32) -> (i32, i32) {
    %c0_i32 = arith.constant 0 : i32
    %c0_i32_0 = arith.constant 0 : i32
    %c0_i32_1 = arith.constant 0 : i32
    return %c0_i32, %c0_i32_0 : i32, i32
  }
  func.func @transform_14(%arg0: i32) -> (i32, i32, i32) {
    %c0_i32 = arith.constant 0 : i32
    %c0_i32_0 = arith.constant 0 : i32
    %c0_i32_1 = arith.constant 0 : i32
    return %arg0, %c0_i32, %c0_i32_0 : i32, i32, i32
  }
  func.func @transform_15(%arg0: i32) -> (i32, i32, i32) {
    %c0_i32 = arith.constant 0 : i32
    %c0_i32_0 = arith.constant 0 : i32
    %c0_i32_1 = arith.constant 0 : i32
    return %arg0, %c0_i32, %c0_i32_0 : i32, i32, i32
  }
}

</mosaic_0001>

<llo_original>
// kernel: bottleneck_forward.1
$region0: #{bottleneck_forward.1}
  #allocation0 [shape = 'u32[]', space=smem, size = 0x4, offset = 0x4, fixed_abs, tag = 'smem constant byte address 0x4 - core index']
  #allocation1 [shape = 'u32[144,128]{1,0:T(1,128)}', space=vmem, size = 0x12000, scoped, tag = 'internal scratch']
  #allocation2 [shape = 'f32[6,10,40]{2,1,0:T(8,128)}', space=vmem, size = 0xc000, scoped, tag = 'scratch operand']
  #allocation3 [shape = 'f32[6,10,10]{2,1,0:T(8,128)}', space=vmem, size = 0xc000, scoped, tag = 'scratch operand']
  #allocation4 [shape = 'f32[32,864]{1,0:T(8,128)}', space=vmem, size = 0x1c000, scoped, tag = 'scratch operand']
  %s0 = inlined_call_operand.vmem [shape: f32[2,32,128], index: 0, kind: input, shape index: {}]
  %s1 = inlined_call_operand.vmem [shape: f32[2,32,128], index: 1, kind: input, shape index: {}]
  %s2 = inlined_call_operand.vmem [shape: f32[128,32], index: 2, kind: input, shape index: {}]
  %s3 = inlined_call_operand.vmem [shape: f32[864,32], index: 3, kind: input, shape index: {}]
  %s4 = inlined_call_operand.vmem [shape: f32[32,128], index: 4, kind: input, shape index: {}]
  %s5 = inlined_call_operand.vmem [shape: f32[128,8], index: 5, kind: input, shape index: {}]
  %s6 = inlined_call_operand.vmem [shape: f32[8,32], index: 6, kind: input, shape index: {}]
  %s7 = inlined_call_operand.vmem [shape: f32[8,128], index: 7, kind: input, shape index: {}]
  %s8 = inlined_call_operand.vmem [shape: f32[1,32], index: 8, kind: input, shape index: {}]
  %s9 = inlined_call_operand.vmem [shape: f32[1,32], index: 9, kind: input, shape index: {}]
  %s10 = inlined_call_operand.vmem [shape: f32[1,32], index: 10, kind: input, shape index: {}]
  %s11 = inlined_call_operand.vmem [shape: f32[1,32], index: 11, kind: input, shape index: {}]
  %s12 = inlined_call_operand.vmem [shape: f32[1,128], index: 12, kind: input, shape index: {}]
  %s13 = inlined_call_operand.vmem [shape: f32[1,128], index: 13, kind: input, shape index: {}]
  %s14 = inlined_call_operand.vmem [shape: f32[2,32,128], index: 14, kind: output, shape index: {0}]
  %s15 = inlined_call_operand.vmem [shape: f32[2,32,128], index: 15, kind: output, shape index: {1}]
  %16 = xla_tuple %s14, %s15
  %s17 = sld [smem:[#allocation0]]
  $region97: #{bottleneck_forward.1} parent=0
    _
  %s19 = ssub.s32 1, %s17
  %s20 = scalar_select 0, %s19, %s17
  loop: start=0, step=1, limit=4
  $region2: #{bottleneck_forward.1} parent=0 // loop_pre_header
    _
  $region3: #{bottleneck_forward.1} parent=0 // loop_header
    %s22 = sphi 0, %s26
    %p23 = scmp.ge.s32.totalorder %s22, 4
    %s32 = sphi 0, %s34
    %s35 = sphi 0, %s32
    %s36 = sphi 0, %s35
    %s52 = sphi 0, %s36
    %s58 = sphi 0, %s60
    %s61 = sphi 0, %s58
    %s62 = sphi 0, %s61
    %s78 = sphi 0, %s62
    %s82 = sphi 0, %s82
    %s84 = sphi 0, %s82
    %s85 = sphi 0, %s84
    %s99 = sphi 0, %s85
    %s103 = sphi 0, %s103
    %s105 = sphi 0, %s103
    %s106 = sphi 0, %s105
    %s120 = sphi 0, %s106
    %s124 = sphi 0, %s124
    %s126 = sphi 0, %s124
    %s127 = sphi 0, %s126
    %s141 = sphi 0, %s127
    %s145 = sphi 0, %s145
    %s147 = sphi 0, %s145
    %s148 = sphi 0, %s147
    %s162 = sphi 0, %s148
    %s166 = sphi 0, %s166
    %s168 = sphi 0, %s166
    %s169 = sphi 0, %s168
    %s183 = sphi 0, %s169
    %s187 = sphi 0, %s187
    %s189 = sphi 0, %s187
    %s190 = sphi 0, %s189
    %s204 = sphi 0, %s190
    %s208 = sphi 0, %s208
    %s210 = sphi 0, %s208
    %s211 = sphi 0, %s210
    %s225 = sphi 0, %s211
    %s229 = sphi 0, %s229
    %s231 = sphi 0, %s229
    %s232 = sphi 0, %s231
    %s246 = sphi 0, %s232
    %s250 = sphi 0, %s250
    %s252 = sphi 0, %s250
    %s253 = sphi 0, %s252
    %s267 = sphi 0, %s253
    %s271 = sphi 0, %s271
    %s273 = sphi 0, %s271
    %s274 = sphi 0, %s273
    %s288 = sphi 0, %s274
    %s292 = sphi 0, %s292
    %s294 = sphi 0, %s292
    %s295 = sphi 0, %s294
    %s309 = sphi 0, %s295
    %s313 = sphi 0, %s313
    %s315 = sphi 0, %s313
    %s316 = sphi 0, %s315
    %s330 = sphi 0, %s316
    %s336 = sphi 0, %s338
    %s339 = sphi 0, %s336
    %s340 = sphi 0, %s339
    %s356 = sphi 0, %s340
    %s362 = sphi 0, %s364
    %s365 = sphi 0, %s362
    %s366 = sphi 0, %s365
    %s382 = sphi 0, %s366
  $region4: #{bottleneck_forward.1} parent=0 // loop_header_branch
    %25 = sbr.rel (%p23) target = $region8
  $region5: #{bottleneck_forward.1} parent=0 // loop_body
    %s27 = ssub.s32 %s22, 1
    %s28 = ssub.s32 %s22, 2
    %s29 = sadd.s32 %s22, 1
    %s30 = ssub.s32 %s22, %s29
    %p31 = scmp.eq.s32.totalorder %s30, 0
    %s33 = sadd.s32 %s32, 1
    %s34 = scalar_select %p31, %s32, %s33
    %p37 = pneg %p31
    %p38 = scmp.eq.s32.totalorder %s22, 1
    %p39 = por %p37, %p38
    %p40 = scmp.ne.s32.totalorder %s32, %s35
    %p41 = scmp.eq.s32.totalorder %s22, 0
    %p42 = por %p40, %p41
    %p43 = scmp.ne.s32.totalorder %s32, %s35
    %p44 = scmp.eq.s32.totalorder %s27, 1
    %p45 = por %p43, %p44
    %p46 = scmp.ne.s32.totalorder %s35, %s36
    %p47 = scmp.eq.s32.totalorder %s27, 0
    %p48 = por %p46, %p47
    %p49 = scmp.ne.s32.totalorder %s35, %s36
    %p50 = scmp.eq.s32.totalorder %s28, 1
    %p51 = por %p49, %p50
    %p53 = scmp.ne.s32.totalorder %s36, %s52
    %p54 = scmp.eq.s32.totalorder %s28, 0
    %p55 = por %p53, %p54
    %s56 = ssub.s32 %s22, %s29
    %p57 = scmp.eq.s32.totalorder %s56, 0
    %s59 = sadd.s32 %s58, 1
    %s60 = scalar_select %p57, %s58, %s59
    %p63 = pneg %p57
    %p64 = scmp.eq.s32.totalorder %s22, 1
    %p65 = por %p63, %p64
    %p66 = scmp.ne.s32.totalorder %s58, %s61
    %p67 = scmp.eq.s32.totalorder %s22, 0
    %p68 = por %p66, %p67
    %p69 = scmp.ne.s32.totalorder %s58, %s61
    %p70 = scmp.eq.s32.totalorder %s27, 1
    %p71 = por %p69, %p70
    %p72 = scmp.ne.s32.totalorder %s61, %s62
    %p73 = scmp.eq.s32.totalorder %s27, 0
    %p74 = por %p72, %p73
    %p75 = scmp.ne.s32.totalorder %s61, %s62
    %p76 = scmp.eq.s32.totalorder %s28, 1
    %p77 = por %p75, %p76
    %p79 = scmp.ne.s32.totalorder %s62, %s78
    %p80 = scmp.eq.s32.totalorder %s28, 0
    %p81 = por %p79, %p80
    %s83 = sadd.s32 %s82, 1
    %p86 = scmp.eq.s32.totalorder %s22, 1
    %p87 = scmp.ne.s32.totalorder %s82, %s84
    %p88 = scmp.eq.s32.totalorder %s22, 0
    %p89 = por %p87, %p88
    %p90 = scmp.ne.s32.totalorder %s82, %s84
    %p91 = scmp.eq.s32.totalorder %s27, 1
    %p92 = por %p90, %p91
    %p93 = scmp.ne.s32.totalorder %s84, %s85
    %p94 = scmp.eq.s32.totalorder %s27, 0
    %p95 = por %p93, %p94
    %p96 = scmp.ne.s32.totalorder %s84, %s85
    %p97 = scmp.eq.s32.totalorder %s28, 1
    %p98 = por %p96, %p97
    %p100 = scmp.ne.s32.totalorder %s85, %s99
    %p101 = scmp.eq.s32.totalorder %s28, 0
    %p102 = por %p100, %p101
    %s104 = sadd.s32 %s103, 1
    %p107 = scmp.eq.s32.totalorder %s22, 1
    %p108 = scmp.ne.s32.totalorder %s103, %s105
    %p109 = scmp.eq.s32.totalorder %s22, 0
    %p110 = por %p108, %p109
    %p111 = scmp.ne.s32.totalorder %s103, %s105
    %p112 = scmp.eq.s32.totalorder %s27, 1
    %p113 = por %p111, %p112
    %p114 = scmp.ne.s32.totalorder %s105, %s106
    %p115 = scmp.eq.s32.totalorder %s27, 0
    %p116 = por %p114, %p115
    %p117 = scmp.ne.s32.totalorder %s105, %s106
    %p118 = scmp.eq.s32.totalorder %s28, 1
    %p119 = por %p117, %p118
    %p121 = scmp.ne.s32.totalorder %s106, %s120
    %p122 = scmp.eq.s32.totalorder %s28, 0
    %p123 = por %p121, %p122
    %s125 = sadd.s32 %s124, 1
    %p128 = scmp.eq.s32.totalorder %s22, 1
    %p129 = scmp.ne.s32.totalorder %s124, %s126
    %p130 = scmp.eq.s32.totalorder %s22, 0
    %p131 = por %p129, %p130
    %p132 = scmp.ne.s32.totalorder %s124, %s126
    %p133 = scmp.eq.s32.totalorder %s27, 1
    %p134 = por %p132, %p133
    %p135 = scmp.ne.s32.totalorder %s126, %s127
    %p136 = scmp.eq.s32.totalorder %s27, 0
    %p137 = por %p135, %p136
    %p138 = scmp.ne.s32.totalorder %s126, %s127
    %p139 = scmp.eq.s32.totalorder %s28, 1
    %p140 = por %p138, %p139
    %p142 = scmp.ne.s32.totalorder %s127, %s141
    %p143 = scmp.eq.s32.totalorder %s28, 0
    %p144 = por %p142, %p143
    %s146 = sadd.s32 %s145, 1
    %p149 = scmp.eq.s32.totalorder %s22, 1
    %p150 = scmp.ne.s32.totalorder %s145, %s147
    %p151 = scmp.eq.s32.totalorder %s22, 0
    %p152 = por %p150, %p151
    %p153 = scmp.ne.s32.totalorder %s145, %s147
    %p154 = scmp.eq.s32.totalorder %s27, 1
    %p155 = por %p153, %p154
    %p156 = scmp.ne.s32.totalorder %s147, %s148
    %p157 = scmp.eq.s32.totalorder %s27, 0
    %p158 = por %p156, %p157
    %p159 = scmp.ne.s32.totalorder %s147, %s148
    %p160 = scmp.eq.s32.totalorder %s28, 1
    %p161 = por %p159, %p160
    %p163 = scmp.ne.s32.totalorder %s148, %s162
    %p164 = scmp.eq.s32.totalorder %s28, 0
    %p165 = por %p163, %p164
    %s167 = sadd.s32 %s166, 1
    %p170 = scmp.eq.s32.totalorder %s22, 1
    %p171 = scmp.ne.s32.totalorder %s166, %s168
    %p172 = scmp.eq.s32.totalorder %s22, 0
    %p173 = por %p171, %p172
    %p174 = scmp.ne.s32.totalorder %s166, %s168
    %p175 = scmp.eq.s32.totalorder %s27, 1
    %p176 = por %p174, %p175
    %p177 = scmp.ne.s32.totalorder %s168, %s169
    %p178 = scmp.eq.s32.totalorder %s27, 0
    %p179 = por %p177, %p178
    %p180 = scmp.ne.s32.totalorder %s168, %s169
    %p181 = scmp.eq.s32.totalorder %s28, 1
    %p182 = por %p180, %p181
    %p184 = scmp.ne.s32.totalorder %s169, %s183
    %p185 = scmp.eq.s32.totalorder %s28, 0
    %p186 = por %p184, %p185
    %s188 = sadd.s32 %s187, 1
    %p191 = scmp.eq.s32.totalorder %s22, 1
    %p192 = scmp.ne.s32.totalorder %s187, %s189
    %p193 = scmp.eq.s32.totalorder %s22, 0
    %p194 = por %p192, %p193
    %p195 = scmp.ne.s32.totalorder %s187, %s189
    %p196 = scmp.eq.s32.totalorder %s27, 1
    %p197 = por %p195, %p196
    %p198 = scmp.ne.s32.totalorder %s189, %s190
    %p199 = scmp.eq.s32.totalorder %s27, 0
    %p200 = por %p198, %p199
    %p201 = scmp.ne.s32.totalorder %s189, %s190
    %p202 = scmp.eq.s32.totalorder %s28, 1
    %p203 = por %p201, %p202
    %p205 = scmp.ne.s32.totalorder %s190, %s204
    %p206 = scmp.eq.s32.totalorder %s28, 0
    %p207 = por %p205, %p206
    %s209 = sadd.s32 %s208, 1
    %p212 = scmp.eq.s32.totalorder %s22, 1
    %p213 = scmp.ne.s32.totalorder %s208, %s210
    %p214 = scmp.eq.s32.totalorder %s22, 0
    %p215 = por %p213, %p214
    %p216 = scmp.ne.s32.totalorder %s208, %s210
    %p217 = scmp.eq.s32.totalorder %s27, 1
    %p218 = por %p216, %p217
    %p219 = scmp.ne.s32.totalorder %s210, %s211
    %p220 = scmp.eq.s32.totalorder %s27, 0
    %p221 = por %p219, %p220
    %p222 = scmp.ne.s32.totalorder %s210, %s211
    %p223 = scmp.eq.s32.totalorder %s28, 1
    %p224 = por %p222, %p223
    %p226 = scmp.ne.s32.totalorder %s211, %s225
    %p227 = scmp.eq.s32.totalorder %s28, 0
    %p228 = por %p226, %p227
    %s230 = sadd.s32 %s229, 1
    %p233 = scmp.eq.s32.totalorder %s22, 1
    %p234 = scmp.ne.s32.totalorder %s229, %s231
    %p235 = scmp.eq.s32.totalorder %s22, 0
    %p236 = por %p234, %p235
    %p237 = scmp.ne.s32.totalorder %s229, %s231
    %p238 = scmp.eq.s32.totalorder %s27, 1
    %p239 = por %p237, %p238
    %p240 = scmp.ne.s32.totalorder %s231, %s232
    %p241 = scmp.eq.s32.totalorder %s27, 0
    %p242 = por %p240, %p241
    %p243 = scmp.ne.s32.totalorder %s231, %s232
    %p244 = scmp.eq.s32.totalorder %s28, 1
    %p245 = por %p243, %p244
    %p247 = scmp.ne.s32.totalorder %s232, %s246
    %p248 = scmp.eq.s32.totalorder %s28, 0
    %p249 = por %p247, %p248
    %s251 = sadd.s32 %s250, 1
    %p254 = scmp.eq.s32.totalorder %s22, 1
    %p255 = scmp.ne.s32.totalorder %s250, %s252
    %p256 = scmp.eq.s32.totalorder %s22, 0
    %p257 = por %p255, %p256
    %p258 = scmp.ne.s32.totalorder %s250, %s252
    %p259 = scmp.eq.s32.totalorder %s27, 1
    %p260 = por %p258, %p259
    %p261 = scmp.ne.s32.totalorder %s252, %s253
    %p262 = scmp.eq.s32.totalorder %s27, 0
    %p263 = por %p261, %p262
    %p264 = scmp.ne.s32.totalorder %s252, %s253
    %p265 = scmp.eq.s32.totalorder %s28, 1
    %p266 = por %p264, %p265
    %p268 = scmp.ne.s32.totalorder %s253, %s267
    %p269 = scmp.eq.s32.totalorder %s28, 0
    %p270 = por %p268, %p269
    %s272 = sadd.s32 %s271, 1
    %p275 = scmp.eq.s32.totalorder %s22, 1
    %p276 = scmp.ne.s32.totalorder %s271, %s273
    %p277 = scmp.eq.s32.totalorder %s22, 0
    %p278 = por %p276, %p277
    %p279 = scmp.ne.s32.totalorder %s271, %s273
    %p280 = scmp.eq.s32.totalorder %s27, 1
    %p281 = por %p279, %p280
    %p282 = scmp.ne.s32.totalorder %s273, %s274
    %p283 = scmp.eq.s32.totalorder %s27, 0
    %p284 = por %p282, %p283
    %p285 = scmp.ne.s32.totalorder %s273, %s274
    %p286 = scmp.eq.s32.totalorder %s28, 1
    %p287 = por %p285, %p286
    %p289 = scmp.ne.s32.totalorder %s274, %s288
    %p290 = scmp.eq.s32.totalorder %s28, 0
    %p291 = por %p289, %p290
    %s293 = sadd.s32 %s292, 1
    %p296 = scmp.eq.s32.totalorder %s22, 1
    %p297 = scmp.ne.s32.totalorder %s292, %s294
    %p298 = scmp.eq.s32.totalorder %s22, 0
    %p299 = por %p297, %p298
    %p300 = scmp.ne.s32.totalorder %s292, %s294
    %p301 = scmp.eq.s32.totalorder %s27, 1
    %p302 = por %p300, %p301
    %p303 = scmp.ne.s32.totalorder %s294, %s295
    %p304 = scmp.eq.s32.totalorder %s27, 0
    %p305 = por %p303, %p304
    %p306 = scmp.ne.s32.totalorder %s294, %s295
    %p307 = scmp.eq.s32.totalorder %s28, 1
    %p308 = por %p306, %p307
    %p310 = scmp.ne.s32.totalorder %s295, %s309
    %p311 = scmp.eq.s32.totalorder %s28, 0
    %p312 = por %p310, %p311
    %s314 = sadd.s32 %s313, 1
    %p317 = scmp.eq.s32.totalorder %s22, 1
    %p318 = scmp.ne.s32.totalorder %s313, %s315
    %p319 = scmp.eq.s32.totalorder %s22, 0
    %p320 = por %p318, %p319
    %p321 = scmp.ne.s32.totalorder %s313, %s315
    %p322 = scmp.eq.s32.totalorder %s27, 1
    %p323 = por %p321, %p322
    %p324 = scmp.ne.s32.totalorder %s315, %s316
    %p325 = scmp.eq.s32.totalorder %s27, 0
    %p326 = por %p324, %p325
    %p327 = scmp.ne.s32.totalorder %s315, %s316
    %p328 = scmp.eq.s32.totalorder %s28, 1
    %p329 = por %p327, %p328
    %p331 = scmp.ne.s32.totalorder %s316, %s330
    %p332 = scmp.eq.s32.totalorder %s28, 0
    %p333 = por %p331, %p332
    %s334 = ssub.s32 %s22, %s29
    %p335 = scmp.eq.s32.totalorder %s334, 0
    %s337 = sadd.s32 %s336, 1
    %s338 = scalar_select %p335, %s336, %s337
    %p341 = pneg %p335
    %p342 = scmp.eq.s32.totalorder %s22, 1
    %p343 = por %p341, %p342
    %p344 = scmp.ne.s32.totalorder %s336, %s339
    %p345 = scmp.eq.s32.totalorder %s22, 0
    %p346 = por %p344, %p345
    %p347 = scmp.ne.s32.totalorder %s336, %s339
    %p348 = scmp.eq.s32.totalorder %s27, 1
    %p349 = por %p347, %p348
    %p350 = scmp.ne.s32.totalorder %s339, %s340
    %p351 = scmp.eq.s32.totalorder %s27, 0
    %p352 = por %p350, %p351
    %p353 = scmp.ne.s32.totalorder %s339, %s340
    %p354 = scmp.eq.s32.totalorder %s28, 1
    %p355 = por %p353, %p354
    %p357 = scmp.ne.s32.totalorder %s340, %s356
    %p358 = scmp.eq.s32.totalorder %s28, 0
    %p359 = por %p357, %p358
    %s360 = ssub.s32 %s22, %s29
    %p361 = scmp.eq.s32.totalorder %s360, 0
    %s363 = sadd.s32 %s362, 1
    %s364 = scalar_select %p361, %s362, %s363
    %p367 = pneg %p361
    %p368 = scmp.eq.s32.totalorder %s22, 1
    %p369 = por %p367, %p368
    %p370 = scmp.ne.s32.totalorder %s362, %s365
    %p371 = scmp.eq.s32.totalorder %s22, 0
    %p372 = por %p370, %p371
    %p373 = scmp.ne.s32.totalorder %s362, %s365
    %p374 = scmp.eq.s32.totalorder %s27, 1
    %p375 = por %p373, %p374
    %p376 = scmp.ne.s32.totalorder %s365, %s366
    %p377 = scmp.eq.s32.totalorder %s27, 0
    %p378 = por %p376, %p377
    %p379 = scmp.ne.s32.totalorder %s365, %s366
    %p380 = scmp.eq.s32.totalorder %s28, 1
    %p381 = por %p379, %p380
    %p383 = scmp.ne.s32.totalorder %s366, %s382
    %p384 = scmp.eq.s32.totalorder %s28, 0
    %p385 = por %p383, %p384
    %p386 = scmp.le.s32.totalorder 1, %s22
    %p387 = scmp.lt.s32.totalorder %s22, 3
    %p388 = pnand %p386, %p387
    %p389 = pneg %p388
    // Predicated region
    $region9: #{bottleneck_forward.1} parent=5 // pred_check
      _
    $region10: #{bottleneck_forward.1} parent=5 // pred_check_branch
      %391 = sbr.rel (%p388) target = $region12
    $region11: #{bottleneck_forward.1} parent=5 // pred_region
      %s392 = ssub.s32 %s22, 1
      // Predicated region
      $region13: #{bottleneck_forward.1} parent=11 // pred_check
        %p393 = pneg %p95
      $region14: #{bottleneck_forward.1} parent=11 // pred_check_branch
        %395 = sbr.rel (%p393) target = $region16
      $region15: #{bottleneck_forward.1} parent=11 // pred_region
        _
      $region16: #{bottleneck_forward.1} parent=11 // pred_fallthru
        _
      // Predicated region
      $region17: #{bottleneck_forward.1} parent=11 // pred_check
        %p396 = pneg %p116
      $region18: #{bottleneck_forward.1} parent=11 // pred_check_branch
        %398 = sbr.rel (%p396) target = $region20
      $region19: #{bottleneck_forward.1} parent=11 // pred_region
        _
      $region20: #{bottleneck_forward.1} parent=11 // pred_fallthru
        _
      // Predicated region
      $region21: #{bottleneck_forward.1} parent=11 // pred_check
        %p399 = pneg %p137
      $region22: #{bottleneck_forward.1} parent=11 // pred_check_branch
        %401 = sbr.rel (%p399) target = $region24
      $region23: #{bottleneck_forward.1} parent=11 // pred_region
        _
      $region24: #{bottleneck_forward.1} parent=11 // pred_fallthru
        _
      // Predicated region
      $region25: #{bottleneck_forward.1} parent=11 // pred_check
        %p402 = pneg %p158
      $region26: #{bottleneck_forward.1} parent=11 // pred_check_branch
        %404 = sbr.rel (%p402) target = $region28
      $region27: #{bottleneck_forward.1} parent=11 // pred_region
        _
      $region28: #{bottleneck_forward.1} parent=11 // pred_fallthru
        _
      // Predicated region
      $region29: #{bottleneck_forward.1} parent=11 // pred_check
        %p405 = pneg %p179
      $region30: #{bottleneck_forward.1} parent=11 // pred_check_branch
        %407 = sbr.rel (%p405) target = $region32
      $region31: #{bottleneck_forward.1} parent=11 // pred_region
        _
      $region32: #{bottleneck_forward.1} parent=11 // pred_fallthru
        _
      // Predicated region
      $region33: #{bottleneck_forward.1} parent=11 // pred_check
        %p408 = pneg %p200
      $region34: #{bottleneck_forward.1} parent=11 // pred_check_branch
        %410 = sbr.rel (%p408) target = $region36
      $region35: #{bottleneck_forward.1} parent=11 // pred_region
        _
      $region36: #{bottleneck_forward.1} parent=11 // pred_fallthru
        _
      // Predicated region
      $region37: #{bottleneck_forward.1} parent=11 // pred_check
        %p411 = pneg %p221
      $region38: #{bottleneck_forward.1} parent=11 // pred_check_branch
        %413 = sbr.rel (%p411) target = $region40
      $region39: #{bottleneck_forward.1} parent=11 // pred_region
        _
      $region40: #{bottleneck_forward.1} parent=11 // pred_fallthru
        _
      // Predicated region
      $region41: #{bottleneck_forward.1} parent=11 // pred_check
        %p414 = pneg %p242
      $region42: #{bottleneck_forward.1} parent=11 // pred_check_branch
        %416 = sbr.rel (%p414) target = $region44
      $region43: #{bottleneck_forward.1} parent=11 // pred_region
        _
      $region44: #{bottleneck_forward.1} parent=11 // pred_fallthru
        _
      // Predicated region
      $region45: #{bottleneck_forward.1} parent=11 // pred_check
        %p417 = pneg %p263
      $region46: #{bottleneck_forward.1} parent=11 // pred_check_branch
        %419 = sbr.rel (%p417) target = $region48
      $region47: #{bottleneck_forward.1} parent=11 // pred_region
        _
      $region48: #{bottleneck_forward.1} parent=11 // pred_fallthru
        _
      // Predicated region
      $region49: #{bottleneck_forward.1} parent=11 // pred_check
        %p420 = pneg %p284
      $region50: #{bottleneck_forward.1} parent=11 // pred_check_branch
        %422 = sbr.rel (%p420) target = $region52
      $region51: #{bottleneck_forward.1} parent=11 // pred_region
        _
      $region52: #{bottleneck_forward.1} parent=11 // pred_fallthru
        _
      // Predicated region
      $region53: #{bottleneck_forward.1} parent=11 // pred_check
        %p423 = pneg %p305
      $region54: #{bottleneck_forward.1} parent=11 // pred_check_branch
        %425 = sbr.rel (%p423) target = $region56
      $region55: #{bottleneck_forward.1} parent=11 // pred_region
        _
      $region56: #{bottleneck_forward.1} parent=11 // pred_fallthru
        _
      // Predicated region
      $region57: #{bottleneck_forward.1} parent=11 // pred_check
        %p426 = pneg %p326
      $region58: #{bottleneck_forward.1} parent=11 // pred_check_branch
        %428 = sbr.rel (%p426) target = $region60
      $region59: #{bottleneck_forward.1} parent=11 // pred_region
        _
      $region60: #{bottleneck_forward.1} parent=11 // pred_fallthru
        _
    $region12: #{bottleneck_forward.1} parent=5 // pred_fallthru
      _
    %p429 = scmp.lt.s32.totalorder %s22, 2
    // Predicated region
    $region61: #{bottleneck_forward.1} parent=5 // pred_check
      %p430 = pneg %p429
    $region62: #{bottleneck_forward.1} parent=5 // pred_check_branch
      %432 = sbr.rel (%p430) target = $region64
    $region63: #{bottleneck_forward.1} parent=5 // pred_region
      // Predicated region
      $region65: #{bottleneck_forward.1} parent=63 // pred_check
        %p433 = pneg %p42
      $region66: #{bottleneck_forward.1} parent=63 // pred_check_branch
        %435 = sbr.rel (%p433) target = $region68
      $region67: #{bottleneck_forward.1} parent=63 // pred_region
        %p436 = scmp.lt.s32.totalorder %s22, 1
        %s437 = scalar_select %p436, %s22, 1
        %s438 = smul.addr %s437, 4
        %s439 = smul.addr %s438, 8
        %s440 = scalar_lea.vmem %s0, %s439
      $region68: #{bottleneck_forward.1} parent=63 // pred_fallthru
        _
      // Predicated region
      $region69: #{bottleneck_forward.1} parent=63 // pred_check
        %p441 = pneg %p68
      $region70: #{bottleneck_forward.1} parent=63 // pred_check_branch
        %443 = sbr.rel (%p441) target = $region72
      $region71: #{bottleneck_forward.1} parent=63 // pred_region
        %p444 = scmp.lt.s32.totalorder %s22, 1
        %s445 = scalar_select %p444, %s22, 1
        %s446 = smul.addr %s445, 4
        %s447 = smul.addr %s446, 8
        %s448 = scalar_lea.vmem %s1, %s447
      $region72: #{bottleneck_forward.1} parent=63 // pred_fallthru
        _
    $region64: #{bottleneck_forward.1} parent=5 // pred_fallthru
      _
    %p449 = scmp.le.s32.totalorder 1, %s22
    %p450 = scmp.lt.s32.totalorder %s22, 3
    %p451 = pnand %p449, %p450
    %p452 = pneg %p451
    // Predicated region
    $region73: #{bottleneck_forward.1} parent=5 // pred_check
      _
    $region74: #{bottleneck_forward.1} parent=5 // pred_check_branch
      %454 = sbr.rel (%p451) target = $region76
    $region75: #{bottleneck_forward.1} parent=5 // pred_region
      %s455 = ssub.s32 %s22, 1
      %p456 = scmp.lt.s32.totalorder %s27, 1
      %s457 = scalar_select %p456, %s27, 1
      %s458 = smul.addr %s457, 4
      %s459 = smul.addr %s458, 8
      %s460 = scalar_lea.vmem %s0, %s459
      %p461 = pneg %p48
      %p462 = pneg %p45
      %p463 = scmp.lt.s32.totalorder %s27, 1
      %s464 = scalar_select %p463, %s27, 1
      %s465 = smul.addr %s464, 4
      %s466 = smul.addr %s465, 8
      %s467 = scalar_lea.vmem %s1, %s466
      %p468 = pneg %p74
      %p469 = pneg %p71
      %p470 = pneg %p95
      %p471 = pneg %p92
      %p472 = pneg %p116
      %p473 = pneg %p113
      %p474 = pneg %p137
      %p475 = pneg %p134
      %p476 = pneg %p158
      %p477 = pneg %p155
      %p478 = pneg %p179
      %p479 = pneg %p176
      %p480 = pneg %p200
      %p481 = pneg %p197
      %p482 = pneg %p221
      %p483 = pneg %p218
      %p484 = pneg %p242
      %p485 = pneg %p239
      %p486 = pneg %p263
      %p487 = pneg %p260
      %p488 = pneg %p284
      %p489 = pneg %p281
      %p490 = pneg %p305
      %p491 = pneg %p302
      %p492 = pneg %p326
      %p493 = pneg %p323
      %p494 = pneg %p352
      %p495 = pneg %p349
      %p496 = scmp.lt.s32.totalorder %s27, 1
      %s497 = scalar_select %p496, %s27, 1
      %s498 = smul.addr %s497, 4
      %s499 = smul.addr %s498, 8
      %s500 = scalar_lea.vmem %s14, %s499
      %p501 = pneg %p378
      %p502 = pneg %p375
      %p503 = scmp.lt.s32.totalorder %s27, 1
      %s504 = scalar_select %p503, %s27, 1
      %s505 = smul.addr %s504, 4
      %s506 = smul.addr %s505, 8
      %s507 = scalar_lea.vmem %s15, %s506
      %p508 = scmp.lt.s32.totalorder %s27, 1
      %s509 = scalar_select %p508, %s27, 1
      %s510 = smul.addr %s509, 4
      %s511 = smul.addr %s510, 8
      %s512 = scalar_lea.vmem %s0, %s511
      %p513 = scmp.lt.s32.totalorder %s27, 1
      %s514 = scalar_select %p513, %s27, 1
      %s515 = smul.addr %s514, 4
      %s516 = smul.addr %s515, 8
      %s517 = scalar_lea.vmem %s1, %s516
      %p518 = scmp.lt.s32.totalorder %s27, 1
      %s519 = scalar_select %p518, %s27, 1
      %s520 = smul.addr %s519, 4
      %s521 = smul.addr %s520, 8
      %s522 = scalar_lea.vmem %s14, %s521
      %p523 = scmp.lt.s32.totalorder %s27, 1
      %s524 = scalar_select %p523, %s27, 1
      %s525 = smul.addr %s524, 4
      %s526 = smul.addr %s525, 8
      %s527 = scalar_lea.vmem %s15, %s526
      %v528 = vld [vmem:[%s512] sm:$0xff]
      %v529 = vld [vmem:[%s512 + $0x8] sm:$0xff]
      %v530 = vld [vmem:[%s512 + $0x10] sm:$0xff]
      %v531 = vld [vmem:[%s512 + $0x18] sm:$0xff]
      %v532 = vld [vmem:[%s517] sm:$0xff]
      %v533 = vld [vmem:[%s517 + $0x8] sm:$0xff]
      %v534 = vld [vmem:[%s517 + $0x10] sm:$0xff]
      %v535 = vld [vmem:[%s517 + $0x18] sm:$0xff]
      %v536 = vld [vmem:[%s5] sm:$0xff]
      %v537 = vld [vmem:[%s5 + $0x8] sm:$0xff]
      %v538 = vld [vmem:[%s5 + $0x10] sm:$0xff]
      %v539 = vld [vmem:[%s5 + $0x18] sm:$0xff]
      %v540 = vld [vmem:[%s5 + $0x20] sm:$0xff]
      %v541 = vld [vmem:[%s5 + $0x28] sm:$0xff]
      %v542 = vld [vmem:[%s5 + $0x30] sm:$0xff]
      %v543 = vld [vmem:[%s5 + $0x38] sm:$0xff]
      %v544 = vld [vmem:[%s5 + $0x40] sm:$0xff]
      %v545 = vld [vmem:[%s5 + $0x48] sm:$0xff]
      %v546 = vld [vmem:[%s5 + $0x50] sm:$0xff]
      %v547 = vld [vmem:[%s5 + $0x58] sm:$0xff]
      %v548 = vld [vmem:[%s5 + $0x60] sm:$0xff]
      %v549 = vld [vmem:[%s5 + $0x68] sm:$0xff]
      %v550 = vld [vmem:[%s5 + $0x70] sm:$0xff]
      %v551 = vld [vmem:[%s5 + $0x78] sm:$0xff]
      %552 = vmatprep.subr.mxu0 0.0
      %553 = vmatpush1.msra.mxu0 %v536
      %554 = vmatprep.subr.mxu0 0.0
      %555 = vmatpush1.msra.mxu0 %v537
      %556 = vmatprep.subr.mxu0 0.0
      %557 = vmatpush1.msra.mxu0 %v538
      %558 = vmatprep.subr.mxu0 0.0
      %559 = vmatpush1.msra.mxu0 %v539
      %560 = vmatprep.subr.mxu0 0.0
      %561 = vmatpush1.msra.mxu0 %v540
      %562 = vmatprep.subr.mxu0 0.0
      %563 = vmatpush1.msra.mxu0 %v541
      %564 = vmatprep.subr.mxu0 0.0
      %565 = vmatpush1.msra.mxu0 %v542
      %566 = vmatprep.subr.mxu0 0.0
      %567 = vmatpush1.msra.mxu0 %v543
      %568 = vmatprep.subr.mxu0 0.0
      %569 = vmatpush1.msra.mxu0 %v544
      %570 = vmatprep.subr.mxu0 0.0
      %571 = vmatpush1.msra.mxu0 %v545
      %572 = vmatprep.subr.mxu0 0.0
      %573 = vmatpush1.msra.mxu0 %v546
      %574 = vmatprep.subr.mxu0 0.0
      %575 = vmatpush1.msra.mxu0 %v547
      %576 = vmatprep.subr.mxu0 0.0
      %577 = vmatpush1.msra.mxu0 %v548
      %578 = vmatprep.subr.mxu0 0.0
      %579 = vmatpush1.msra.mxu0 %v549
      %580 = vmatprep.subr.mxu0 0.0
      %581 = vmatpush1.msra.mxu0 %v550
      %582 = vmatprep.subr.mxu0 0.0
      %583 = vmatpush1.msra.mxu0 %v551
      %584 = vmatprep.subr.mxu0 0.0
      %585 = vmatpush1.msra.mxu0 0.0
      %586 = vmatprep.subr.mxu0 0.0
      %587 = vmatpush1.msra.mxu0 0.0
      %588 = vmatprep.subr.mxu0 0.0
      %589 = vmatpush1.msra.mxu0 0.0
      %590 = vmatprep.subr.mxu0 0.0
      %591 = vmatpush1.msra.mxu0 0.0
      %592 = vmatprep.subr.mxu0 0.0
      %593 = vmatpush1.msra.mxu0 0.0
      %594 = vmatprep.subr.mxu0 0.0
      %595 = vmatpush1.msra.mxu0 0.0
      %596 = vmatprep.subr.mxu0 0.0
      %597 = vmatpush1.msra.mxu0 0.0
      %598 = vmatprep.subr.mxu0 0.0
      %599 = vmatpush1.msra.mxu0 0.0
      %600 = vmatprep.subr.mxu0 0.0
      %601 = vmatpush1.msra.mxu0 0.0
      %602 = vmatprep.subr.mxu0 0.0
      %603 = vmatpush1.msra.mxu0 0.0
      %604 = vmatprep.subr.mxu0 0.0
      %605 = vmatpush1.msra.mxu0 0.0
      %606 = vmatprep.subr.mxu0 0.0
      %607 = vmatpush1.msra.mxu0 0.0
      %608 = vmatprep.subr.mxu0 0.0
      %609 = vmatpush1.msra.mxu0 0.0
      %610 = vmatprep.subr.mxu0 0.0
      %611 = vmatpush1.msra.mxu0 0.0
      %612 = vmatprep.subr.mxu0 0.0
      %613 = vmatpush1.msra.mxu0 0.0
      %614 = vmatprep.subr.mxu0 0.0
      %615 = vmatpush1.msra.mxu0 0.0
      %616 = vmatprep.mubr.f32.mxu0 0.0
      %617 = vmatmul.mubr.f32.gmra.mrb[0].mxu0 %v532
      %v618 = vpop.f32.mrb[0].mxu0
      %v619 = vadd.f32 0.0, %v618
      %v620 = vpop.f32.mrb[0].mxu0
      %621 = vmatprep.mubr.f32.mxu0 0.0
      %622 = vmatmul.mubr.f32.gmra.mrb[0].mxu0 %v533
      %v623 = vpop.f32.mrb[0].mxu0
      %v624 = vadd.f32 0.0, %v623
      %v625 = vpop.f32.mrb[0].mxu0
      %626 = vmatprep.mubr.f32.mxu0 0.0
      %627 = vmatmul.mubr.f32.gmra.mrb[0].mxu0 %v534
      %v628 = vpop.f32.mrb[0].mxu0
      %v629 = vadd.f32 0.0, %v628
      %v630 = vpop.f32.mrb[0].mxu0
      %631 = vmatprep.mubr.f32.mxu0 0.0
      %632 = vmatmul.mubr.f32.gmra.mrb[0].mxu0 %v535
      %v633 = vpop.f32.mrb[0].mxu0
      %v634 = vadd.f32 0.0, %v633
      %v635 = vpop.f32.mrb[0].mxu0
      %636 = vdwg.mxu0
      %v637 = vld [vmem:[%s6] sm:$0xff]
      %vm638 = vcmask 64512
      %v640 = vsel %vm638, %v619, 0
      %v643 = vsel %vm638, %v624, 0
      %v646 = vsel %vm638, %v629, 0
      %v649 = vsel %vm638, %v634, 0
      %651 = vmatprep.subr.mxu0 0.0
      %652 = vmatpush1.msra.mxu0 %v637
      %653 = vmatprep.subr.mxu0 0.0
      %654 = vmatpush1.msra.mxu0 0.0
      %655 = vmatprep.subr.mxu0 0.0
      %656 = vmatpush1.msra.mxu0 0.0
      %657 = vmatprep.subr.mxu0 0.0
      %658 = vmatpush1.msra.mxu0 0.0
      %659 = vmatprep.subr.mxu0 0.0
      %660 = vmatpush1.msra.mxu0 0.0
      %661 = vmatprep.subr.mxu0 0.0
      %662 = vmatpush1.msra.mxu0 0.0
      %663 = vmatprep.subr.mxu0 0.0
      %664 = vmatpush1.msra.mxu0 0.0
      %665 = vmatprep.subr.mxu0 0.0
      %666 = vmatpush1.msra.mxu0 0.0
      %667 = vmatprep.subr.mxu0 0.0
      %668 = vmatpush1.msra.mxu0 0.0
      %669 = vmatprep.subr.mxu0 0.0
      %670 = vmatpush1.msra.mxu0 0.0
      %671 = vmatprep.subr.mxu0 0.0
      %672 = vmatpush1.msra.mxu0 0.0
      %673 = vmatprep.subr.mxu0 0.0
      %674 = vmatpush1.msra.mxu0 0.0
      %675 = vmatprep.subr.mxu0 0.0
      %676 = vmatpush1.msra.mxu0 0.0
      %677 = vmatprep.subr.mxu0 0.0
      %678 = vmatpush1.msra.mxu0 0.0
      %679 = vmatprep.subr.mxu0 0.0
      %680 = vmatpush1.msra.mxu0 0.0
      %681 = vmatprep.subr.mxu0 0.0
      %682 = vmatpush1.msra.mxu0 0.0
      %683 = vmatprep.subr.mxu0 0.0
      %684 = vmatpush1.msra.mxu0 0.0
      %685 = vmatprep.subr.mxu0 0.0
      %686 = vmatpush1.msra.mxu0 0.0
      %687 = vmatprep.subr.mxu0 0.0
      %688 = vmatpush1.msra.mxu0 0.0
      %689 = vmatprep.subr.mxu0 0.0
      %690 = vmatpush1.msra.mxu0 0.0
      %691 = vmatprep.subr.mxu0 0.0
      %692 = vmatpush1.msra.mxu0 0.0
      %693 = vmatprep.subr.mxu0 0.0
      %694 = vmatpush1.msra.mxu0 0.0
      %695 = vmatprep.subr.mxu0 0.0
      %696 = vmatpush1.msra.mxu0 0.0
      %697 = vmatprep.subr.mxu0 0.0
      %698 = vmatpush1.msra.mxu0 0.0
      %699 = vmatprep.subr.mxu0 0.0
      %700 = vmatpush1.msra.mxu0 0.0
      %701 = vmatprep.subr.mxu0 0.0
      %702 = vmatpush1.msra.mxu0 0.0
      %703 = vmatprep.subr.mxu0 0.0
      %704 = vmatpush1.msra.mxu0 0.0
      %705 = vmatprep.subr.mxu0 0.0
      %706 = vmatpush1.msra.mxu0 0.0
      %707 = vmatprep.subr.mxu0 0.0
      %708 = vmatpush1.msra.mxu0 0.0
      %709 = vmatprep.subr.mxu0 0.0
      %710 = vmatpush1.msra.mxu0 0.0
      %711 = vmatprep.subr.mxu0 0.0
      %712 = vmatpush1.msra.mxu0 0.0
      %713 = vmatprep.subr.mxu0 0.0
      %714 = vmatpush1.msra.mxu0 0.0
      %715 = vmatprep.mubr.f32.mxu0 0.0
      %716 = vmatmul.mubr.f32.gmra.mrb[0].mxu0 %v640
      %v717 = vpop.f32.mrb[0].mxu0
      %v718 = vadd.f32 0.0, %v717
      %v719 = vpop.f32.mrb[0].mxu0
      %720 = vmatprep.mubr.f32.mxu0 0.0
      %721 = vmatmul.mubr.f32.gmra.mrb[0].mxu0 %v643
      %v722 = vpop.f32.mrb[0].mxu0
      %v723 = vadd.f32 0.0, %v722
      %v724 = vpop.f32.mrb[0].mxu0
      %725 = vmatprep.mubr.f32.mxu0 0.0
      %726 = vmatmul.mubr.f32.gmra.mrb[0].mxu0 %v646
      %v727 = vpop.f32.mrb[0].mxu0
      %v728 = vadd.f32 0.0, %v727
      %v729 = vpop.f32.mrb[0].mxu0
      %730 = vmatprep.mubr.f32.mxu0 0.0
      %731 = vmatmul.mubr.f32.gmra.mrb[0].mxu0 %v649
      %v732 = vpop.f32.mrb[0].mxu0
      %v733 = vadd.f32 0.0, %v732
      %v734 = vpop.f32.mrb[0].mxu0
      %735 = vdwg.mxu0
      %v736 = vmax.f32 %v619, 0.0
      %v737 = vmax.f32 %v624, 0.0
      %v738 = vmax.f32 %v629, 0.0
      %v739 = vmax.f32 %v634, 0.0
      %v740 = vmin.f32 %v736, 1.0
      %v741 = vmin.f32 %v737, 1.0
      %v742 = vmin.f32 %v738, 1.0
      %v743 = vmin.f32 %v739, 1.0
      %v744 = vmax.f32 %v718, 0.0
      %v745 = vmax.f32 %v723, 0.0
      %v746 = vmax.f32 %v728, 0.0
      %v747 = vmax.f32 %v733, 0.0
      %v748 = vmin.f32 %v744, 1.0
      %v749 = vmin.f32 %v745, 1.0
      %v750 = vmin.f32 %v746, 1.0
      %v751 = vmin.f32 %v747, 1.0
      %v752 = vadd.f32 %v718, 1e-08
      %v753 = vadd.f32 %v723, 1e-08
      %v754 = vadd.f32 %v728, 1e-08
      %v755 = vadd.f32 %v733, 1e-08
      %v756 = vrcp.pop %v752
      %v757 = vrcp.pop %v753
      %v758 = vrcp.pop %v754
      %v759 = vrcp.pop %v755
      %v760 = vmul.f32 %v756, 16.0
      %v761 = vmul.f32 %v757, 16.0
      %v762 = vmul.f32 %v758, 16.0
      %v763 = vmul.f32 %v759, 16.0
      %v764 = vmul.f32 %v760, %v748
      %v765 = vmul.f32 %v761, %v749
      %v766 = vmul.f32 %v762, %v750
      %v767 = vmul.f32 %v763, %v751
      %v768 = vmul.f32 %v528, %v532
      %v769 = vmul.f32 %v529, %v533
      %v770 = vmul.f32 %v530, %v534
      %v771 = vmul.f32 %v531, %v535
      %v772 = vld [vmem:[%s2] sm:$0xff]
      %v773 = vld [vmem:[%s2 + $0x8] sm:$0xff]
      %v774 = vld [vmem:[%s2 + $0x10] sm:$0xff]
      %v775 = vld [vmem:[%s2 + $0x18] sm:$0xff]
      %v776 = vld [vmem:[%s2 + $0x20] sm:$0xff]
      %v777 = vld [vmem:[%s2 + $0x28] sm:$0xff]
      %v778 = vld [vmem:[%s2 + $0x30] sm:$0xff]
      %v779 = vld [vmem:[%s2 + $0x38] sm:$0xff]
      %v780 = vld [vmem:[%s2 + $0x40] sm:$0xff]
      %v781 = vld [vmem:[%s2 + $0x48] sm:$0xff]
      %v782 = vld [vmem:[%s2 + $0x50] sm:$0xff]
      %v783 = vld [vmem:[%s2 + $0x58] sm:$0xff]
      %v784 = vld [vmem:[%s2 + $0x60] sm:$0xff]
      %v785 = vld [vmem:[%s2 + $0x68] sm:$0xff]
      %v786 = vld [vmem:[%s2 + $0x70] sm:$0xff]
      %v787 = vld [vmem:[%s2 + $0x78] sm:$0xff]
      %788 = vmatprep.subr.mxu0 0.0
      %789 = vmatpush1.msra.mxu0 %v772
      %790 = vmatprep.subr.mxu0 0.0
      %791 = vmatpush1.msra.mxu0 %v773
      %792 = vmatprep.subr.mxu0 0.0
      %793 = vmatpush1.msra.mxu0 %v774
      %794 = vmatprep.subr.mxu0 0.0
      %795 = vmatpush1.msra.mxu0 %v775
      %796 = vmatprep.subr.mxu0 0.0
      %797 = vmatpush1.msra.mxu0 %v776
      %798 = vmatprep.subr.mxu0 0.0
      %799 = vmatpush1.msra.mxu0 %v777
      %800 = vmatprep.subr.mxu0 0.0
      %801 = vmatpush1.msra.mxu0 %v778
      %802 = vmatprep.subr.mxu0 0.0
      %803 = vmatpush1.msra.mxu0 %v779
      %804 = vmatprep.subr.mxu0 0.0
      %805 = vmatpush1.msra.mxu0 %v780
      %806 = vmatprep.subr.mxu0 0.0
      %807 = vmatpush1.msra.mxu0 %v781
      %808 = vmatprep.subr.mxu0 0.0
      %809 = vmatpush1.msra.mxu0 %v782
      %810 = vmatprep.subr.mxu0 0.0
      %811 = vmatpush1.msra.mxu0 %v783
      %812 = vmatprep.subr.mxu0 0.0
      %813 = vmatpush1.msra.mxu0 %v784
      %814 = vmatprep.subr.mxu0 0.0
      %815 = vmatpush1.msra.mxu0 %v785
      %816 = vmatprep.subr.mxu0 0.0
      %817 = vmatpush1.msra.mxu0 %v786
      %818 = vmatprep.subr.mxu0 0.0
      %819 = vmatpush1.msra.mxu0 %v787
      %820 = vmatprep.subr.mxu0 0.0
      %821 = vmatpush1.msra.mxu0 0.0
      %822 = vmatprep.subr.mxu0 0.0
      %823 = vmatpush1.msra.mxu0 0.0
      %824 = vmatprep.subr.mxu0 0.0
      %825 = vmatpush1.msra.mxu0 0.0
      %826 = vmatprep.subr.mxu0 0.0
      %827 = vmatpush1.msra.mxu0 0.0
      %828 = vmatprep.subr.mxu0 0.0
      %829 = vmatpush1.msra.mxu0 0.0
      %830 = vmatprep.subr.mxu0 0.0
      %831 = vmatpush1.msra.mxu0 0.0
      %832 = vmatprep.subr.mxu0 0.0
      %833 = vmatpush1.msra.mxu0 0.0
      %834 = vmatprep.subr.mxu0 0.0
      %835 = vmatpush1.msra.mxu0 0.0
      %836 = vmatprep.subr.mxu0 0.0
      %837 = vmatpush1.msra.mxu0 0.0
      %838 = vmatprep.subr.mxu0 0.0
      %839 = vmatpush1.msra.mxu0 0.0
      %840 = vmatprep.subr.mxu0 0.0
      %841 = vmatpush1.msra.mxu0 0.0
      %842 = vmatprep.subr.mxu0 0.0
      %843 = vmatpush1.msra.mxu0 0.0
      %844 = vmatprep.subr.mxu0 0.0
      %845 = vmatpush1.msra.mxu0 0.0
      %846 = vmatprep.subr.mxu0 0.0
      %847 = vmatpush1.msra.mxu0 0.0
      %848 = vmatprep.subr.mxu0 0.0
      %849 = vmatpush1.msra.mxu0 0.0
      %850 = vmatprep.subr.mxu0 0.0
      %851 = vmatpush1.msra.mxu0 0.0
      %852 = vmatprep.mubr.f32.mxu0 0.0
      %853 = vmatmul.mubr.f32.gmra.mrb[0].mxu0 %v768
      %v854 = vpop.f32.mrb[0].mxu0
      %v855 = vadd.f32 0.0, %v854
      %v856 = vpop.f32.mrb[0].mxu0
      %857 = vmatprep.mubr.f32.mxu0 0.0
      %858 = vmatmul.mubr.f32.gmra.mrb[0].mxu0 %v769
      %v859 = vpop.f32.mrb[0].mxu0
      %v860 = vadd.f32 0.0, %v859
      %v861 = vpop.f32.mrb[0].mxu0
      %862 = vmatprep.mubr.f32.mxu0 0.0
      %863 = vmatmul.mubr.f32.gmra.mrb[0].mxu0 %v770
      %v864 = vpop.f32.mrb[0].mxu0
      %v865 = vadd.f32 0.0, %v864
      %v866 = vpop.f32.mrb[0].mxu0
      %867 = vmatprep.mubr.f32.mxu0 0.0
      %868 = vmatmul.mubr.f32.gmra.mrb[0].mxu0 %v771
      %v869 = vpop.f32.mrb[0].mxu0
      %v870 = vadd.f32 0.0, %v869
      %v871 = vpop.f32.mrb[0].mxu0
      %872 = vdwg.mxu0
      %v873 = vmul.f32 %v855, %v764
      %v874 = vmul.f32 %v860, %v765
      %v875 = vmul.f32 %v865, %v766
      %v876 = vmul.f32 %v870, %v767
      %v877 = vld [vmem:[%s8] sm:$0x1]
      %v879 = vlaneseq
      %v880 = vshrl.u32 %v879, 7
      %v881 = vsub.s32 0, %v880
      %v882 = vrot.slane %v877, %v881
      %v884 = vmul.f32 %v873, %v882
      %v885 = vmul.f32 %v874, %v882
      %v886 = vmul.f32 %v875, %v882
      %v887 = vmul.f32 %v876, %v882
      %v888 = vld [vmem:[%s9] sm:$0x1]
      %v890 = vlaneseq
      %v891 = vshrl.u32 %v890, 7
      %v892 = vsub.s32 0, %v891
      %v893 = vrot.slane %v888, %v892
      %v895 = vadd.f32 %v884, %v893
      %v896 = vadd.f32 %v885, %v893
      %v897 = vadd.f32 %v886, %v893
      %v898 = vadd.f32 %v887, %v893
      %v899 = vmax.f32 %v895, 0.0
      %v900 = vmax.f32 %v896, 0.0
      %v901 = vmax.f32 %v897, 0.0
      %v902 = vmax.f32 %v898, 0.0
      %vm903 = vcmask 326656
      %904 = vst.msk [vmem:[#allocation2] sm:$0xff] %vm903, 0.0
      %vm905 = vcmask 320512
      %906 = vst.msk [vmem:[#allocation2 + $0x8] sm:$0x3] %vm905, 0.0
      %907 = vst.msk [vmem:[#allocation2 + $0x10] sm:$0xff] %vm903, 0.0
      %908 = vst.msk [vmem:[#allocation2 + $0x18] sm:$0x3] %vm905, 0.0
      %909 = vst.msk [vmem:[#allocation2 + $0x20] sm:$0xff] %vm903, 0.0
      %910 = vst.msk [vmem:[#allocation2 + $0x28] sm:$0x3] %vm905, 0.0
      %911 = vst.msk [vmem:[#allocation2 + $0x30] sm:$0xff] %vm903, 0.0
      %912 = vst.msk [vmem:[#allocation2 + $0x38] sm:$0x3] %vm905, 0.0
      %913 = vst.msk [vmem:[#allocation2 + $0x40] sm:$0xff] %vm903, 0.0
      %914 = vst.msk [vmem:[#allocation2 + $0x48] sm:$0x3] %vm905, 0.0
      %915 = vst.msk [vmem:[#allocation2 + $0x50] sm:$0xff] %vm903, 0.0
      %916 = vst.msk [vmem:[#allocation2 + $0x58] sm:$0x3] %vm905, 0.0
      %vm917 = vcmask 80896
      %918 = vst.msk [vmem:[#allocation3] sm:$0xff] %vm917, 0.0
      %vm919 = vcmask 74752
      %920 = vst.msk [vmem:[#allocation3 + $0x8] sm:$0x3] %vm919, 0.0
      %921 = vst.msk [vmem:[#allocation3 + $0x10] sm:$0xff] %vm917, 0.0
      %922 = vst.msk [vmem:[#allocation3 + $0x18] sm:$0x3] %vm919, 0.0
      %923 = vst.msk [vmem:[#allocation3 + $0x20] sm:$0xff] %vm917, 0.0
      %924 = vst.msk [vmem:[#allocation3 + $0x28] sm:$0x3] %vm919, 0.0
      %925 = vst.msk [vmem:[#allocation3 + $0x30] sm:$0xff] %vm917, 0.0
      %926 = vst.msk [vmem:[#allocation3 + $0x38] sm:$0x3] %vm919, 0.0
      %927 = vst.msk [vmem:[#allocation3 + $0x40] sm:$0xff] %vm917, 0.0
      %928 = vst.msk [vmem:[#allocation3 + $0x48] sm:$0x3] %vm919, 0.0
      %929 = vst.msk [vmem:[#allocation3 + $0x50] sm:$0xff] %vm917, 0.0
      %930 = vst.msk [vmem:[#allocation3 + $0x58] sm:$0x3] %vm919, 0.0
      %v931 = vmul.f32 %v899, %v748
      %v932 = vmul.f32 %v900, %v749
      %v933 = vmul.f32 %v901, %v750
      %v934 = vmul.f32 %v902, %v751
      %939 = vrot.lane.b32.xlu0 %v931, 4
      %v940 = vpop.permute.xlu0 %939
      %941 = vrot.lane.b32.xlu0 %v932, 4
      %v942 = vpop.permute.xlu0 %941
      %943 = vrot.lane.b32.xlu0 %v933, 4
      %v944 = vpop.permute.xlu0 %943
      %945 = vrot.lane.b32.xlu0 %v934, 4
      %v946 = vpop.permute.xlu0 %945
      %s951 = scalar_lea.vmem [#allocation2], 16
      %vm952 = vcmask 293920
      %953 = vst.msk [vmem:[%s951 + $0x1] sm:$0xff] %vm952, %v940
      %954 = vst.msk [vmem:[%s951 + $0x11] sm:$0xff] %vm952, %v942
      %955 = vst.msk [vmem:[%s951 + $0x21] sm:$0xff] %vm952, %v944
      %956 = vst.msk [vmem:[%s951 + $0x31] sm:$0xff] %vm952, %v946
      %961 = vrot.lane.b32.xlu0 %v740, 1
      %v962 = vpop.permute.xlu0 %961
      %963 = vrot.lane.b32.xlu0 %v741, 1
      %v964 = vpop.permute.xlu0 %963
      %965 = vrot.lane.b32.xlu0 %v742, 1
      %v966 = vpop.permute.xlu0 %965
      %967 = vrot.lane.b32.xlu0 %v743, 1
      %v968 = vpop.permute.xlu0 %967
      %s973 = scalar_lea.vmem [#allocation3], 16
      %vm974 = vcmask 72712
      %975 = vst.msk [vmem:[%s973 + $0x1] sm:$0xff] %vm974, %v962
      %976 = vst.msk [vmem:[%s973 + $0x11] sm:$0xff] %vm974, %v964
      %977 = vst.msk [vmem:[%s973 + $0x21] sm:$0xff] %vm974, %v966
      %978 = vst.msk [vmem:[%s973 + $0x31] sm:$0xff] %vm974, %v968
      %v979 = vld [vmem:[#allocation2] sm:$0xff]
      %v980 = vld [vmem:[#allocation2 + $0x8] sm:$0x3]
      %v981 = vld [vmem:[#allocation2 + $0x10] sm:$0xff]
      %v982 = vld [vmem:[#allocation2 + $0x18] sm:$0x3]
      %v983 = vld [vmem:[#allocation2 + $0x20] sm:$0xff]
      %v984 = vld [vmem:[#allocation2 + $0x28] sm:$0x3]
      %v985 = vld [vmem:[#allocation2 + $0x30] sm:$0xff]
      %v986 = vld [vmem:[#allocation2 + $0x38] sm:$0x3]
      %v987 = vld [vmem:[#allocation2 + $0x40] sm:$0xff]
      %v988 = vld [vmem:[#allocation2 + $0x48] sm:$0x3]
      %v989 = vld [vmem:[#allocation2 + $0x50] sm:$0xff]
      %v990 = vld [vmem:[#allocation2 + $0x58] sm:$0x3]
      %v991 = vld [vmem:[#allocation3] sm:$0xff]
      %v992 = vld [vmem:[#allocation3 + $0x8] sm:$0x3]
      %v993 = vld [vmem:[#allocation3 + $0x10] sm:$0xff]
      %v994 = vld [vmem:[#allocation3 + $0x18] sm:$0x3]
      %v995 = vld [vmem:[#allocation3 + $0x20] sm:$0xff]
      %v996 = vld [vmem:[#allocation3 + $0x28] sm:$0x3]
      %v997 = vld [vmem:[#allocation3 + $0x30] sm:$0xff]
      %v998 = vld [vmem:[#allocation3 + $0x38] sm:$0x3]
      %v999 = vld [vmem:[#allocation3 + $0x40] sm:$0xff]
      %v1000 = vld [vmem:[#allocation3 + $0x48] sm:$0x3]
      %v1001 = vld [vmem:[#allocation3 + $0x50] sm:$0xff]
      %v1002 = vld [vmem:[#allocation3 + $0x58] sm:$0x3]
      %vm1003 = vcmask 261120
      %1004 = vst.msk [vmem:[#allocation4] sm:$0xff] %vm1003, %v979
      %1005 = vst.msk [vmem:[#allocation4 + $0x38] sm:$0xff] %vm1003, %v981
      %1006 = vst.msk [vmem:[#allocation4 + $0x70] sm:$0xff] %vm1003, %v983
      %1007 = vst.msk [vmem:[#allocation4 + $0xa8] sm:$0xff] %vm1003, %v985
      %v1008 = vadd.f32 %v991, 0.0
      %v1009 = vadd.f32 %v993, 0.0
      %v1010 = vadd.f32 %v995, 0.0
      %v1011 = vadd.f32 %v997, 0.0
      %1016 = vrot.lane.b32.xlu0 %v979, 28
      %v1017 = vpop.permute.xlu0 %1016
      %1018 = vrot.lane.b32.xlu0 %v981, 28
      %v1019 = vpop.permute.xlu0 %1018
      %1020 = vrot.lane.b32.xlu0 %v983, 28
      %v1021 = vpop.permute.xlu0 %1020
      %1022 = vrot.lane.b32.xlu0 %v985, 28
      %v1023 = vpop.permute.xlu0 %1022
      %vm1028 = vcmask 523520
      %1029 = vst.msk [vmem:[#allocation4] sm:$0xff] %vm1028, %v1017
      %1030 = vst.msk [vmem:[#allocation4 + $0x38] sm:$0xff] %vm1028, %v1019
      %1031 = vst.msk [vmem:[#allocation4 + $0x70] sm:$0xff] %vm1028, %v1021
      %1032 = vst.msk [vmem:[#allocation4 + $0xa8] sm:$0xff] %vm1028, %v1023
      %1037 = vrot.lane.b32.xlu0 %v991, 127
      %v1038 = vpop.permute.xlu0 %1037
      %1039 = vrot.lane.b32.xlu0 %v993, 127
      %v1040 = vpop.permute.xlu0 %1039
      %1041 = vrot.lane.b32.xlu0 %v995, 127
      %v1042 = vpop.permute.xlu0 %1041
      %1043 = vrot.lane.b32.xlu0 %v997, 127
      %v1044 = vpop.permute.xlu0 %1043
      %v1049 = vadd.f32 %v1008, %v1038
      %v1050 = vadd.f32 %v1009, %v1040
      %v1051 = vadd.f32 %v1010, %v1042
      %v1052 = vadd.f32 %v1011, %v1044
      %1053 = vrot.lane.b32.xlu0 %v979, 56
      %v1054 = vpop.permute.xlu0 %1053
      %1055 = vrot.lane.b32.xlu0 %v981, 56
      %v1056 = vpop.permute.xlu0 %1055
      %1057 = vrot.lane.b32.xlu0 %v983, 56
      %v1058 = vpop.permute.xlu0 %1057
      %1059 = vrot.lane.b32.xlu0 %v985, 56
      %v1060 = vpop.permute.xlu0 %1059
      %vm1065 = vcmask 785920
      %1066 = vst.msk [vmem:[#allocation4] sm:$0xff] %vm1065, %v1054
      %1067 = vst.msk [vmem:[#allocation4 + $0x38] sm:$0xff] %vm1065, %v1056
      %1068 = vst.msk [vmem:[#allocation4 + $0x70] sm:$0xff] %vm1065, %v1058
      %1069 = vst.msk [vmem:[#allocation4 + $0xa8] sm:$0xff] %vm1065, %v1060
      %1070 = vrot.lane.b32.xlu0 %v991, 126
      %v1071 = vpop.permute.xlu0 %1070
      %1072 = vrot.lane.b32.xlu0 %v993, 126
      %v1073 = vpop.permute.xlu0 %1072
      %1074 = vrot.lane.b32.xlu0 %v995, 126
      %v1075 = vpop.permute.xlu0 %1074
      %1076 = vrot.lane.b32.xlu0 %v997, 126
      %v1077 = vpop.permute.xlu0 %1076
      %v1082 = vadd.f32 %v1049, %v1071
      %v1083 = vadd.f32 %v1050, %v1073
      %v1084 = vadd.f32 %v1051, %v1075
      %v1085 = vadd.f32 %v1052, %v1077
      %vm1090 = vcmask 1046528
      %v1091 = vrot.slane %v979, 1
      %v1092 = vrot.slane %v980, 1
      %v1093 = vsel %vm1090, %v1091, %v1092
      %v1094 = vrot.slane %v981, 1
      %v1095 = vrot.slane %v982, 1
      %v1096 = vsel %vm1090, %v1094, %v1095
      %v1097 = vrot.slane %v983, 1
      %v1098 = vrot.slane %v984, 1
      %v1099 = vsel %vm1090, %v1097, %v1098
      %v1100 = vrot.slane %v985, 1
      %v1101 = vrot.slane %v986, 1
      %v1102 = vsel %vm1090, %v1100, %v1101
      %1103 = vrot.lane.b32.xlu0 %v1093, 96
      %v1104 = vpop.permute.xlu0 %1103
      %1105 = vrot.lane.b32.xlu0 %v1096, 96
      %v1106 = vpop.permute.xlu0 %1105
      %1107 = vrot.lane.b32.xlu0 %v1099, 96
      %v1108 = vpop.permute.xlu0 %1107
      %1109 = vrot.lane.b32.xlu0 %v1102, 96
      %v1110 = vpop.permute.xlu0 %1109
      %vm1115 = vcmask 1048320
      %1116 = vst.msk [vmem:[#allocation4] sm:$0xff] %vm1115, %v1104
      %1117 = vst.msk [vmem:[#allocation4 + $0x38] sm:$0xff] %vm1115, %v1106
      %1118 = vst.msk [vmem:[#allocation4 + $0x70] sm:$0xff] %vm1115, %v1108
      %1119 = vst.msk [vmem:[#allocation4 + $0xa8] sm:$0xff] %vm1115, %v1110
      %v1124 = vrot.slane %v991, 1
      %v1125 = vrot.slane %v992, 1
      %v1126 = vsel %vm1090, %v1124, %v1125
      %v1127 = vrot.slane %v993, 1
      %v1128 = vrot.slane %v994, 1
      %v1129 = vsel %vm1090, %v1127, %v1128
      %v1130 = vrot.slane %v995, 1
      %v1131 = vrot.slane %v996, 1
      %v1132 = vsel %vm1090, %v1130, %v1131
      %v1133 = vrot.slane %v997, 1
      %v1134 = vrot.slane %v998, 1
      %v1135 = vsel %vm1090, %v1133, %v1134
      %v1140 = vadd.f32 %v1082, %v1126
      %v1141 = vadd.f32 %v1083, %v1129
      %v1142 = vadd.f32 %v1084, %v1132
      %v1143 = vadd.f32 %v1085, %v1135
      %1144 = vrot.lane.b32.xlu0 %v1093, 124
      %v1145 = vpop.permute.xlu0 %1144
      %1146 = vrot.lane.b32.xlu0 %v1096, 124
      %v1147 = vpop.permute.xlu0 %1146
      %1148 = vrot.lane.b32.xlu0 %v1099, 124
      %v1149 = vpop.permute.xlu0 %1148
      %1150 = vrot.lane.b32.xlu0 %v1102, 124
      %v1151 = vpop.permute.xlu0 %1150
      %1156 = vst.msk [vmem:[#allocation4 + $0x8] sm:$0xff] %vm1003, %v1145
      %1157 = vst.msk [vmem:[#allocation4 + $0x40] sm:$0xff] %vm1003, %v1147
      %1158 = vst.msk [vmem:[#allocation4 + $0x78] sm:$0xff] %vm1003, %v1149
      %1159 = vst.msk [vmem:[#allocation4 + $0xb0] sm:$0xff] %vm1003, %v1151
      %1160 = vrot.lane.b32.xlu0 %v1126, 127
      %v1161 = vpop.permute.xlu0 %1160
      %1162 = vrot.lane.b32.xlu0 %v1129, 127
      %v1163 = vpop.permute.xlu0 %1162
      %1164 = vrot.lane.b32.xlu0 %v1132, 127
      %v1165 = vpop.permute.xlu0 %1164
      %1166 = vrot.lane.b32.xlu0 %v1135, 127
      %v1167 = vpop.permute.xlu0 %1166
      %v1172 = vadd.f32 %v1140, %v1161
      %v1173 = vadd.f32 %v1141, %v1163
      %v1174 = vadd.f32 %v1142, %v1165
      %v1175 = vadd.f32 %v1143, %v1167
      %1176 = vrot.lane.b32.xlu0 %v1093, 24
      %v1177 = vpop.permute.xlu0 %1176
      %1178 = vrot.lane.b32.xlu0 %v1096, 24
      %v1179 = vpop.permute.xlu0 %1178
      %1180 = vrot.lane.b32.xlu0 %v1099, 24
      %v1181 = vpop.permute.xlu0 %1180
      %1182 = vrot.lane.b32.xlu0 %v1102, 24
      %v1183 = vpop.permute.xlu0 %1182
      %1188 = vst.msk [vmem:[#allocation4 + $0x8] sm:$0xff] %vm1028, %v1177
      %1189 = vst.msk [vmem:[#allocation4 + $0x40] sm:$0xff] %vm1028, %v1179
      %1190 = vst.msk [vmem:[#allocation4 + $0x78] sm:$0xff] %vm1028, %v1181
      %1191 = vst.msk [vmem:[#allocation4 + $0xb0] sm:$0xff] %vm1028, %v1183
      %1192 = vrot.lane.b32.xlu0 %v1126, 126
      %v1193 = vpop.permute.xlu0 %1192
      %1194 = vrot.lane.b32.xlu0 %v1129, 126
      %v1195 = vpop.permute.xlu0 %1194
      %1196 = vrot.lane.b32.xlu0 %v1132, 126
      %v1197 = vpop.permute.xlu0 %1196
      %1198 = vrot.lane.b32.xlu0 %v1135, 126
      %v1199 = vpop.permute.xlu0 %1198
      %v1204 = vadd.f32 %v1172, %v1193
      %v1205 = vadd.f32 %v1173, %v1195
      %v1206 = vadd.f32 %v1174, %v1197
      %v1207 = vadd.f32 %v1175, %v1199
      %vm1208 = vcmask 1045504
      %v1209 = vrot.slane %v979, 2
      %v1210 = vrot.slane %v980, 2
      %v1211 = vsel %vm1208, %v1209, %v1210
      %v1212 = vrot.slane %v981, 2
      %v1213 = vrot.slane %v982, 2
      %v1214 = vsel %vm1208, %v1212, %v1213
      %v1215 = vrot.slane %v983, 2
      %v1216 = vrot.slane %v984, 2
      %v1217 = vsel %vm1208, %v1215, %v1216
      %v1218 = vrot.slane %v985, 2
      %v1219 = vrot.slane %v986, 2
      %v1220 = vsel %vm1208, %v1218, %v1219
      %1221 = vrot.lane.b32.xlu0 %v1211, 64
      %v1222 = vpop.permute.xlu0 %1221
      %1223 = vrot.lane.b32.xlu0 %v1214, 64
      %v1224 = vpop.permute.xlu0 %1223
      %1225 = vrot.lane.b32.xlu0 %v1217, 64
      %v1226 = vpop.permute.xlu0 %1225
      %1227 = vrot.lane.b32.xlu0 %v1220, 64
      %v1228 = vpop.permute.xlu0 %1227
      %1233 = vst.msk [vmem:[#allocation4 + $0x8] sm:$0xff] %vm1065, %v1222
      %1234 = vst.msk [vmem:[#allocation4 + $0x40] sm:$0xff] %vm1065, %v1224
      %1235 = vst.msk [vmem:[#allocation4 + $0x78] sm:$0xff] %vm1065, %v1226
      %1236 = vst.msk [vmem:[#allocation4 + $0xb0] sm:$0xff] %vm1065, %v1228
      %v1237 = vrot.slane %v991, 2
      %v1238 = vrot.slane %v992, 2
      %v1239 = vsel %vm1208, %v1237, %v1238
      %v1240 = vrot.slane %v993, 2
      %v1241 = vrot.slane %v994, 2
      %v1242 = vsel %vm1208, %v1240, %v1241
      %v1243 = vrot.slane %v995, 2
      %v1244 = vrot.slane %v996, 2
      %v1245 = vsel %vm1208, %v1243, %v1244
      %v1246 = vrot.slane %v997, 2
      %v1247 = vrot.slane %v998, 2
      %v1248 = vsel %vm1208, %v1246, %v1247
      %v1253 = vadd.f32 %v1204, %v1239
      %v1254 = vadd.f32 %v1205, %v1242
      %v1255 = vadd.f32 %v1206, %v1245
      %v1256 = vadd.f32 %v1207, %v1248
      %1257 = vrot.lane.b32.xlu0 %v1211, 92
      %v1258 = vpop.permute.xlu0 %1257
      %1259 = vrot.lane.b32.xlu0 %v1214, 92
      %v1260 = vpop.permute.xlu0 %1259
      %1261 = vrot.lane.b32.xlu0 %v1217, 92
      %v1262 = vpop.permute.xlu0 %1261
      %1263 = vrot.lane.b32.xlu0 %v1220, 92
      %v1264 = vpop.permute.xlu0 %1263
      %1269 = vst.msk [vmem:[#allocation4 + $0x8] sm:$0xff] %vm1115, %v1258
      %1270 = vst.msk [vmem:[#allocation4 + $0x40] sm:$0xff] %vm1115, %v1260
      %1271 = vst.msk [vmem:[#allocation4 + $0x78] sm:$0xff] %vm1115, %v1262
      %1272 = vst.msk [vmem:[#allocation4 + $0xb0] sm:$0xff] %vm1115, %v1264
      %1273 = vrot.lane.b32.xlu0 %v1239, 127
      %v1274 = vpop.permute.xlu0 %1273
      %1275 = vrot.lane.b32.xlu0 %v1242, 127
      %v1276 = vpop.permute.xlu0 %1275
      %1277 = vrot.lane.b32.xlu0 %v1245, 127
      %v1278 = vpop.permute.xlu0 %1277
      %1279 = vrot.lane.b32.xlu0 %v1248, 127
      %v1280 = vpop.permute.xlu0 %1279
      %v1285 = vadd.f32 %v1253, %v1274
      %v1286 = vadd.f32 %v1254, %v1276
      %v1287 = vadd.f32 %v1255, %v1278
      %v1288 = vadd.f32 %v1256, %v1280
      %1289 = vrot.lane.b32.xlu0 %v1211, 120
      %v1290 = vpop.permute.xlu0 %1289
      %1291 = vrot.lane.b32.xlu0 %v1214, 120
      %v1292 = vpop.permute.xlu0 %1291
      %1293 = vrot.lane.b32.xlu0 %v1217, 120
      %v1294 = vpop.permute.xlu0 %1293
      %1295 = vrot.lane.b32.xlu0 %v1220, 120
      %v1296 = vpop.permute.xlu0 %1295
      %1301 = vst.msk [vmem:[#allocation4 + $0x10] sm:$0xff] %vm1003, %v1290
      %1302 = vst.msk [vmem:[#allocation4 + $0x48] sm:$0xff] %vm1003, %v1292
      %1303 = vst.msk [vmem:[#allocation4 + $0x80] sm:$0xff] %vm1003, %v1294
      %1304 = vst.msk [vmem:[#allocation4 + $0xb8] sm:$0xff] %vm1003, %v1296
      %1305 = vrot.lane.b32.xlu0 %v1239, 126
      %v1306 = vpop.permute.xlu0 %1305
      %1307 = vrot.lane.b32.xlu0 %v1242, 126
      %v1308 = vpop.permute.xlu0 %1307
      %1309 = vrot.lane.b32.xlu0 %v1245, 126
      %v1310 = vpop.permute.xlu0 %1309
      %1311 = vrot.lane.b32.xlu0 %v1248, 126
      %v1312 = vpop.permute.xlu0 %1311
      %v1317 = vadd.f32 %v1285, %v1306
      %v1318 = vadd.f32 %v1286, %v1308
      %v1319 = vadd.f32 %v1287, %v1310
      %v1320 = vadd.f32 %v1288, %v1312
      %1322 = vrot.lane.b32.xlu0 %v981, 32
      %v1323 = vpop.permute.xlu0 %1322
      %1324 = vrot.lane.b32.xlu0 %v983, 32
      %v1325 = vpop.permute.xlu0 %1324
      %1326 = vrot.lane.b32.xlu0 %v985, 32
      %v1327 = vpop.permute.xlu0 %1326
      %1328 = vrot.lane.b32.xlu0 %v987, 32
      %v1329 = vpop.permute.xlu0 %1328
      %1334 = vst.msk [vmem:[#allocation4 + $0x10] sm:$0xff] %vm1028, %v1323
      %1335 = vst.msk [vmem:[#allocation4 + $0x48] sm:$0xff] %vm1028, %v1325
      %1336 = vst.msk [vmem:[#allocation4 + $0x80] sm:$0xff] %vm1028, %v1327
      %1337 = vst.msk [vmem:[#allocation4 + $0xb8] sm:$0xff] %vm1028, %v1329
      %v1338 = vadd.f32 %v1317, %v993
      %v1339 = vadd.f32 %v1318, %v995
      %v1340 = vadd.f32 %v1319, %v997
      %v1341 = vadd.f32 %v1320, %v999
      %1342 = vrot.lane.b32.xlu0 %v981, 60
      %v1343 = vpop.permute.xlu0 %1342
      %1344 = vrot.lane.b32.xlu0 %v983, 60
      %v1345 = vpop.permute.xlu0 %1344
      %1346 = vrot.lane.b32.xlu0 %v985, 60
      %v1347 = vpop.permute.xlu0 %1346
      %1348 = vrot.lane.b32.xlu0 %v987, 60
      %v1349 = vpop.permute.xlu0 %1348
      %1354 = vst.msk [vmem:[#allocation4 + $0x10] sm:$0xff] %vm1065, %v1343
      %1355 = vst.msk [vmem:[#allocation4 + $0x48] sm:$0xff] %vm1065, %v1345
      %1356 = vst.msk [vmem:[#allocation4 + $0x80] sm:$0xff] %vm1065, %v1347
      %1357 = vst.msk [vmem:[#allocation4 + $0xb8] sm:$0xff] %vm1065, %v1349
      %1359 = vrot.lane.b32.xlu0 %v999, 127
      %v1360 = vpop.permute.xlu0 %1359
      %v1362 = vadd.f32 %v1338, %v1040
      %v1363 = vadd.f32 %v1339, %v1042
      %v1364 = vadd.f32 %v1340, %v1044
      %v1365 = vadd.f32 %v1341, %v1360
      %1366 = vrot.lane.b32.xlu0 %v981, 88
      %v1367 = vpop.permute.xlu0 %1366
      %1368 = vrot.lane.b32.xlu0 %v983, 88
      %v1369 = vpop.permute.xlu0 %1368
      %1370 = vrot.lane.b32.xlu0 %v985, 88
      %v1371 = vpop.permute.xlu0 %1370
      %1372 = vrot.lane.b32.xlu0 %v987, 88
      %v1373 = vpop.permute.xlu0 %1372
      %1378 = vst.msk [vmem:[#allocation4 + $0x10] sm:$0xff] %vm1115, %v1367
      %1379 = vst.msk [vmem:[#allocation4 + $0x48] sm:$0xff] %vm1115, %v1369
      %1380 = vst.msk [vmem:[#allocation4 + $0x80] sm:$0xff] %vm1115, %v1371
      %1381 = vst.msk [vmem:[#allocation4 + $0xb8] sm:$0xff] %vm1115, %v1373
      %1382 = vrot.lane.b32.xlu0 %v999, 126
      %v1383 = vpop.permute.xlu0 %1382
      %v1385 = vadd.f32 %v1362, %v1073
      %v1386 = vadd.f32 %v1363, %v1075
      %v1387 = vadd.f32 %v1364, %v1077
      %v1388 = vadd.f32 %v1365, %v1383
      %v1390 = vrot.slane %v987, 1
      %v1391 = vrot.slane %v988, 1
      %v1392 = vsel %vm1090, %v1390, %v1391
      %1397 = vst.msk [vmem:[#allocation4 + $0x18] sm:$0xff] %vm1003, %v1096
      %1398 = vst.msk [vmem:[#allocation4 + $0x50] sm:$0xff] %vm1003, %v1099
      %1399 = vst.msk [vmem:[#allocation4 + $0x88] sm:$0xff] %vm1003, %v1102
      %1400 = vst.msk [vmem:[#allocation4 + $0xc0] sm:$0xff] %vm1003, %v1392
      %v1402 = vrot.slane %v999, 1
      %v1403 = vrot.slane %v1000, 1
      %v1404 = vsel %vm1090, %v1402, %v1403
      %v1406 = vadd.f32 %v1385, %v1129
      %v1407 = vadd.f32 %v1386, %v1132
      %v1408 = vadd.f32 %v1387, %v1135
      %v1409 = vadd.f32 %v1388, %v1404
      %1410 = vrot.lane.b32.xlu0 %v1096, 28
      %v1411 = vpop.permute.xlu0 %1410
      %1412 = vrot.lane.b32.xlu0 %v1099, 28
      %v1413 = vpop.permute.xlu0 %1412
      %1414 = vrot.lane.b32.xlu0 %v1102, 28
      %v1415 = vpop.permute.xlu0 %1414
      %1416 = vrot.lane.b32.xlu0 %v1392, 28
      %v1417 = vpop.permute.xlu0 %1416
      %1422 = vst.msk [vmem:[#allocation4 + $0x18] sm:$0xff] %vm1028, %v1411
      %1423 = vst.msk [vmem:[#allocation4 + $0x50] sm:$0xff] %vm1028, %v1413
      %1424 = vst.msk [vmem:[#allocation4 + $0x88] sm:$0xff] %vm1028, %v1415
      %1425 = vst.msk [vmem:[#allocation4 + $0xc0] sm:$0xff] %vm1028, %v1417
      %1426 = vrot.lane.b32.xlu0 %v1404, 127
      %v1427 = vpop.permute.xlu0 %1426
      %v1429 = vadd.f32 %v1406, %v1163
      %v1430 = vadd.f32 %v1407, %v1165
      %v1431 = vadd.f32 %v1408, %v1167
      %v1432 = vadd.f32 %v1409, %v1427
      %1433 = vrot.lane.b32.xlu0 %v1096, 56
      %v1434 = vpop.permute.xlu0 %1433
      %1435 = vrot.lane.b32.xlu0 %v1099, 56
      %v1436 = vpop.permute.xlu0 %1435
      %1437 = vrot.lane.b32.xlu0 %v1102, 56
      %v1438 = vpop.permute.xlu0 %1437
      %1439 = vrot.lane.b32.xlu0 %v1392, 56
      %v1440 = vpop.permute.xlu0 %1439
      %1445 = vst.msk [vmem:[#allocation4 + $0x18] sm:$0xff] %vm1065, %v1434
      %1446 = vst.msk [vmem:[#allocation4 + $0x50] sm:$0xff] %vm1065, %v1436
      %1447 = vst.msk [vmem:[#allocation4 + $0x88] sm:$0xff] %vm1065, %v1438
      %1448 = vst.msk [vmem:[#allocation4 + $0xc0] sm:$0xff] %vm1065, %v1440
      %1449 = vrot.lane.b32.xlu0 %v1404, 126
      %v1450 = vpop.permute.xlu0 %1449
      %v1452 = vadd.f32 %v1429, %v1195
      %v1453 = vadd.f32 %v1430, %v1197
      %v1454 = vadd.f32 %v1431, %v1199
      %v1455 = vadd.f32 %v1432, %v1450
      %v1456 = vrot.slane %v987, 2
      %v1457 = vrot.slane %v988, 2
      %v1458 = vsel %vm1208, %v1456, %v1457
      %1459 = vrot.lane.b32.xlu0 %v1214, 96
      %v1460 = vpop.permute.xlu0 %1459
      %1461 = vrot.lane.b32.xlu0 %v1217, 96
      %v1462 = vpop.permute.xlu0 %1461
      %1463 = vrot.lane.b32.xlu0 %v1220, 96
      %v1464 = vpop.permute.xlu0 %1463
      %1465 = vrot.lane.b32.xlu0 %v1458, 96
      %v1466 = vpop.permute.xlu0 %1465
      %1471 = vst.msk [vmem:[#allocation4 + $0x18] sm:$0xff] %vm1115, %v1460
      %1472 = vst.msk [vmem:[#allocation4 + $0x50] sm:$0xff] %vm1115, %v1462
      %1473 = vst.msk [vmem:[#allocation4 + $0x88] sm:$0xff] %vm1115, %v1464
      %1474 = vst.msk [vmem:[#allocation4 + $0xc0] sm:$0xff] %vm1115, %v1466
      %v1475 = vrot.slane %v999, 2
      %v1476 = vrot.slane %v1000, 2
      %v1477 = vsel %vm1208, %v1475, %v1476
      %v1479 = vadd.f32 %v1452, %v1242
      %v1480 = vadd.f32 %v1453, %v1245
      %v1481 = vadd.f32 %v1454, %v1248
      %v1482 = vadd.f32 %v1455, %v1477
      %1483 = vrot.lane.b32.xlu0 %v1214, 124
      %v1484 = vpop.permute.xlu0 %1483
      %1485 = vrot.lane.b32.xlu0 %v1217, 124
      %v1486 = vpop.permute.xlu0 %1485
      %1487 = vrot.lane.b32.xlu0 %v1220, 124
      %v1488 = vpop.permute.xlu0 %1487
      %1489 = vrot.lane.b32.xlu0 %v1458, 124
      %v1490 = vpop.permute.xlu0 %1489
      %1495 = vst.msk [vmem:[#allocation4 + $0x20] sm:$0xff] %vm1003, %v1484
      %1496 = vst.msk [vmem:[#allocation4 + $0x58] sm:$0xff] %vm1003, %v1486
      %1497 = vst.msk [vmem:[#allocation4 + $0x90] sm:$0xff] %vm1003, %v1488
      %1498 = vst.msk [vmem:[#allocation4 + $0xc8] sm:$0xff] %vm1003, %v1490
      %1499 = vrot.lane.b32.xlu0 %v1477, 127
      %v1500 = vpop.permute.xlu0 %1499
      %v1502 = vadd.f32 %v1479, %v1276
      %v1503 = vadd.f32 %v1480, %v1278
      %v1504 = vadd.f32 %v1481, %v1280
      %v1505 = vadd.f32 %v1482, %v1500
      %1506 = vrot.lane.b32.xlu0 %v1214, 24
      %v1507 = vpop.permute.xlu0 %1506
      %1508 = vrot.lane.b32.xlu0 %v1217, 24
      %v1509 = vpop.permute.xlu0 %1508
      %1510 = vrot.lane.b32.xlu0 %v1220, 24
      %v1511 = vpop.permute.xlu0 %1510
      %1512 = vrot.lane.b32.xlu0 %v1458, 24
      %v1513 = vpop.permute.xlu0 %1512
      %1518 = vst.msk [vmem:[#allocation4 + $0x20] sm:$0xff] %vm1028, %v1507
      %1519 = vst.msk [vmem:[#allocation4 + $0x58] sm:$0xff] %vm1028, %v1509
      %1520 = vst.msk [vmem:[#allocation4 + $0x90] sm:$0xff] %vm1028, %v1511
      %1521 = vst.msk [vmem:[#allocation4 + $0xc8] sm:$0xff] %vm1028, %v1513
      %1522 = vrot.lane.b32.xlu0 %v1477, 126
      %v1523 = vpop.permute.xlu0 %1522
      %v1525 = vadd.f32 %v1502, %v1308
      %v1526 = vadd.f32 %v1503, %v1310
      %v1527 = vadd.f32 %v1504, %v1312
      %v1528 = vadd.f32 %v1505, %v1523
      %1530 = vrot.lane.b32.xlu0 %v983, 64
      %v1531 = vpop.permute.xlu0 %1530
      %1532 = vrot.lane.b32.xlu0 %v985, 64
      %v1533 = vpop.permute.xlu0 %1532
      %1534 = vrot.lane.b32.xlu0 %v987, 64
      %v1535 = vpop.permute.xlu0 %1534
      %1536 = vrot.lane.b32.xlu0 %v989, 64
      %v1537 = vpop.permute.xlu0 %1536
      %1542 = vst.msk [vmem:[#allocation4 + $0x20] sm:$0xff] %vm1065, %v1531
      %1543 = vst.msk [vmem:[#allocation4 + $0x58] sm:$0xff] %vm1065, %v1533
      %1544 = vst.msk [vmem:[#allocation4 + $0x90] sm:$0xff] %vm1065, %v1535
      %1545 = vst.msk [vmem:[#allocation4 + $0xc8] sm:$0xff] %vm1065, %v1537
      %v1546 = vadd.f32 %v1525, %v995
      %v1547 = vadd.f32 %v1526, %v997
      %v1548 = vadd.f32 %v1527, %v999
      %v1549 = vadd.f32 %v1528, %v1001
      %1550 = vrot.lane.b32.xlu0 %v983, 92
      %v1551 = vpop.permute.xlu0 %1550
      %1552 = vrot.lane.b32.xlu0 %v985, 92
      %v1553 = vpop.permute.xlu0 %1552
      %1554 = vrot.lane.b32.xlu0 %v987, 92
      %v1555 = vpop.permute.xlu0 %1554
      %1556 = vrot.lane.b32.xlu0 %v989, 92
      %v1557 = vpop.permute.xlu0 %1556
      %1562 = vst.msk [vmem:[#allocation4 + $0x20] sm:$0xff] %vm1115, %v1551
      %1563 = vst.msk [vmem:[#allocation4 + $0x58] sm:$0xff] %vm1115, %v1553
      %1564 = vst.msk [vmem:[#allocation4 + $0x90] sm:$0xff] %vm1115, %v1555
      %1565 = vst.msk [vmem:[#allocation4 + $0xc8] sm:$0xff] %vm1115, %v1557
      %1567 = vrot.lane.b32.xlu0 %v1001, 127
      %v1568 = vpop.permute.xlu0 %1567
      %v1570 = vadd.f32 %v1546, %v1042
      %v1571 = vadd.f32 %v1547, %v1044
      %v1572 = vadd.f32 %v1548, %v1360
      %v1573 = vadd.f32 %v1549, %v1568
      %1574 = vrot.lane.b32.xlu0 %v983, 120
      %v1575 = vpop.permute.xlu0 %1574
      %1576 = vrot.lane.b32.xlu0 %v985, 120
      %v1577 = vpop.permute.xlu0 %1576
      %1578 = vrot.lane.b32.xlu0 %v987, 120
      %v1579 = vpop.permute.xlu0 %1578
      %1580 = vrot.lane.b32.xlu0 %v989, 120
      %v1581 = vpop.permute.xlu0 %1580
      %1586 = vst.msk [vmem:[#allocation4 + $0x28] sm:$0xff] %vm1003, %v1575
      %1587 = vst.msk [vmem:[#allocation4 + $0x60] sm:$0xff] %vm1003, %v1577
      %1588 = vst.msk [vmem:[#allocation4 + $0x98] sm:$0xff] %vm1003, %v1579
      %1589 = vst.msk [vmem:[#allocation4 + $0xd0] sm:$0xff] %vm1003, %v1581
      %1590 = vrot.lane.b32.xlu0 %v1001, 126
      %v1591 = vpop.permute.xlu0 %1590
      %v1593 = vadd.f32 %v1570, %v1075
      %v1594 = vadd.f32 %v1571, %v1077
      %v1595 = vadd.f32 %v1572, %v1383
      %v1596 = vadd.f32 %v1573, %v1591
      %v1598 = vrot.slane %v989, 1
      %v1599 = vrot.slane %v990, 1
      %v1600 = vsel %vm1090, %v1598, %v1599
      %1601 = vrot.lane.b32.xlu0 %v1099, 32
      %v1602 = vpop.permute.xlu0 %1601
      %1603 = vrot.lane.b32.xlu0 %v1102, 32
      %v1604 = vpop.permute.xlu0 %1603
      %1605 = vrot.lane.b32.xlu0 %v1392, 32
      %v1606 = vpop.permute.xlu0 %1605
      %1607 = vrot.lane.b32.xlu0 %v1600, 32
      %v1608 = vpop.permute.xlu0 %1607
      %1613 = vst.msk [vmem:[#allocation4 + $0x28] sm:$0xff] %vm1028, %v1602
      %1614 = vst.msk [vmem:[#allocation4 + $0x60] sm:$0xff] %vm1028, %v1604
      %1615 = vst.msk [vmem:[#allocation4 + $0x98] sm:$0xff] %vm1028, %v1606
      %1616 = vst.msk [vmem:[#allocation4 + $0xd0] sm:$0xff] %vm1028, %v1608
      %v1618 = vrot.slane %v1001, 1
      %v1619 = vrot.slane %v1002, 1
      %v1620 = vsel %vm1090, %v1618, %v1619
      %v1622 = vadd.f32 %v1593, %v1132
      %v1623 = vadd.f32 %v1594, %v1135
      %v1624 = vadd.f32 %v1595, %v1404
      %v1625 = vadd.f32 %v1596, %v1620
      %1626 = vrot.lane.b32.xlu0 %v1099, 60
      %v1627 = vpop.permute.xlu0 %1626
      %1628 = vrot.lane.b32.xlu0 %v1102, 60
      %v1629 = vpop.permute.xlu0 %1628
      %1630 = vrot.lane.b32.xlu0 %v1392, 60
      %v1631 = vpop.permute.xlu0 %1630
      %1632 = vrot.lane.b32.xlu0 %v1600, 60
      %v1633 = vpop.permute.xlu0 %1632
      %1638 = vst.msk [vmem:[#allocation4 + $0x28] sm:$0xff] %vm1065, %v1627
      %1639 = vst.msk [vmem:[#allocation4 + $0x60] sm:$0xff] %vm1065, %v1629
      %1640 = vst.msk [vmem:[#allocation4 + $0x98] sm:$0xff] %vm1065, %v1631
      %1641 = vst.msk [vmem:[#allocation4 + $0xd0] sm:$0xff] %vm1065, %v1633
      %1642 = vrot.lane.b32.xlu0 %v1620, 127
      %v1643 = vpop.permute.xlu0 %1642
      %v1645 = vadd.f32 %v1622, %v1165
      %v1646 = vadd.f32 %v1623, %v1167
      %v1647 = vadd.f32 %v1624, %v1427
      %v1648 = vadd.f32 %v1625, %v1643
      %1649 = vrot.lane.b32.xlu0 %v1099, 88
      %v1650 = vpop.permute.xlu0 %1649
      %1651 = vrot.lane.b32.xlu0 %v1102, 88
      %v1652 = vpop.permute.xlu0 %1651
      %1653 = vrot.lane.b32.xlu0 %v1392, 88
      %v1654 = vpop.permute.xlu0 %1653
      %1655 = vrot.lane.b32.xlu0 %v1600, 88
      %v1656 = vpop.permute.xlu0 %1655
      %1661 = vst.msk [vmem:[#allocation4 + $0x28] sm:$0xff] %vm1115, %v1650
      %1662 = vst.msk [vmem:[#allocation4 + $0x60] sm:$0xff] %vm1115, %v1652
      %1663 = vst.msk [vmem:[#allocation4 + $0x98] sm:$0xff] %vm1115, %v1654
      %1664 = vst.msk [vmem:[#allocation4 + $0xd0] sm:$0xff] %vm1115, %v1656
      %1665 = vrot.lane.b32.xlu0 %v1620, 126
      %v1666 = vpop.permute.xlu0 %1665
      %v1668 = vadd.f32 %v1645, %v1197
      %v1669 = vadd.f32 %v1646, %v1199
      %v1670 = vadd.f32 %v1647, %v1450
      %v1671 = vadd.f32 %v1648, %v1666
      %v1672 = vrot.slane %v989, 2
      %v1673 = vrot.slane %v990, 2
      %v1674 = vsel %vm1208, %v1672, %v1673
      %1679 = vst.msk [vmem:[#allocation4 + $0x30] sm:$0xff] %vm1003, %v1217
      %1680 = vst.msk [vmem:[#allocation4 + $0x68] sm:$0xff] %vm1003, %v1220
      %1681 = vst.msk [vmem:[#allocation4 + $0xa0] sm:$0xff] %vm1003, %v1458
      %1682 = vst.msk [vmem:[#allocation4 + $0xd8] sm:$0xff] %vm1003, %v1674
      %v1683 = vrot.slane %v1001, 2
      %v1684 = vrot.slane %v1002, 2
      %v1685 = vsel %vm1208, %v1683, %v1684
      %v1687 = vadd.f32 %v1668, %v1245
      %v1688 = vadd.f32 %v1669, %v1248
      %v1689 = vadd.f32 %v1670, %v1477
      %v1690 = vadd.f32 %v1671, %v1685
      %1691 = vrot.lane.b32.xlu0 %v1217, 28
      %v1692 = vpop.permute.xlu0 %1691
      %1693 = vrot.lane.b32.xlu0 %v1220, 28
      %v1694 = vpop.permute.xlu0 %1693
      %1695 = vrot.lane.b32.xlu0 %v1458, 28
      %v1696 = vpop.permute.xlu0 %1695
      %1697 = vrot.lane.b32.xlu0 %v1674, 28
      %v1698 = vpop.permute.xlu0 %1697
      %1703 = vst.msk [vmem:[#allocation4 + $0x30] sm:$0xff] %vm1028, %v1692
      %1704 = vst.msk [vmem:[#allocation4 + $0x68] sm:$0xff] %vm1028, %v1694
      %1705 = vst.msk [vmem:[#allocation4 + $0xa0] sm:$0xff] %vm1028, %v1696
      %1706 = vst.msk [vmem:[#allocation4 + $0xd8] sm:$0xff] %vm1028, %v1698
      %1707 = vrot.lane.b32.xlu0 %v1685, 127
      %v1708 = vpop.permute.xlu0 %1707
      %v1710 = vadd.f32 %v1687, %v1278
      %v1711 = vadd.f32 %v1688, %v1280
      %v1712 = vadd.f32 %v1689, %v1500
      %v1713 = vadd.f32 %v1690, %v1708
      %1714 = vrot.lane.b32.xlu0 %v1217, 56
      %v1715 = vpop.permute.xlu0 %1714
      %1716 = vrot.lane.b32.xlu0 %v1220, 56
      %v1717 = vpop.permute.xlu0 %1716
      %1718 = vrot.lane.b32.xlu0 %v1458, 56
      %v1719 = vpop.permute.xlu0 %1718
      %1720 = vrot.lane.b32.xlu0 %v1674, 56
      %v1721 = vpop.permute.xlu0 %1720
      %1726 = vst.msk [vmem:[#allocation4 + $0x30] sm:$0xff] %vm1065, %v1715
      %1727 = vst.msk [vmem:[#allocation4 + $0x68] sm:$0xff] %vm1065, %v1717
      %1728 = vst.msk [vmem:[#allocation4 + $0xa0] sm:$0xff] %vm1065, %v1719
      %1729 = vst.msk [vmem:[#allocation4 + $0xd8] sm:$0xff] %vm1065, %v1721
      %1730 = vrot.lane.b32.xlu0 %v1685, 126
      %v1731 = vpop.permute.xlu0 %1730
      %v1733 = vadd.f32 %v1710, %v1310
      %v1734 = vadd.f32 %v1711, %v1312
      %v1735 = vadd.f32 %v1712, %v1523
      %v1736 = vadd.f32 %v1713, %v1731
      %v1737 = vmul.f32 %v1733, 4.0
      %v1738 = vmul.f32 %v1734, 4.0
      %v1739 = vmul.f32 %v1735, 4.0
      %v1740 = vmul.f32 %v1736, 4.0
      %v1741 = vld [vmem:[%s6] sm:$0xff]
      %v1743 = vsel %vm638, %v1737, 0
      %v1746 = vsel %vm638, %v1738, 0
      %v1749 = vsel %vm638, %v1739, 0
      %v1752 = vsel %vm638, %v1740, 0
      %1754 = vmatprep.subr.mxu0 0.0
      %1755 = vmatpush1.msra.mxu0 %v1741
      %1756 = vmatprep.subr.mxu0 0.0
      %1757 = vmatpush1.msra.mxu0 0.0
      %1758 = vmatprep.subr.mxu0 0.0
      %1759 = vmatpush1.msra.mxu0 0.0
      %1760 = vmatprep.subr.mxu0 0.0
      %1761 = vmatpush1.msra.mxu0 0.0
      %1762 = vmatprep.subr.mxu0 0.0
      %1763 = vmatpush1.msra.mxu0 0.0
      %1764 = vmatprep.subr.mxu0 0.0
      %1765 = vmatpush1.msra.mxu0 0.0
      %1766 = vmatprep.subr.mxu0 0.0
      %1767 = vmatpush1.msra.mxu0 0.0
      %1768 = vmatprep.subr.mxu0 0.0
      %1769 = vmatpush1.msra.mxu0 0.0
      %1770 = vmatprep.subr.mxu0 0.0
      %1771 = vmatpush1.msra.mxu0 0.0
      %1772 = vmatprep.subr.mxu0 0.0
      %1773 = vmatpush1.msra.mxu0 0.0
      %1774 = vmatprep.subr.mxu0 0.0
      %1775 = vmatpush1.msra.mxu0 0.0
      %1776 = vmatprep.subr.mxu0 0.0
      %1777 = vmatpush1.msra.mxu0 0.0
      %1778 = vmatprep.subr.mxu0 0.0
      %1779 = vmatpush1.msra.mxu0 0.0
      %1780 = vmatprep.subr.mxu0 0.0
      %1781 = vmatpush1.msra.mxu0 0.0
      %1782 = vmatprep.subr.mxu0 0.0
      %1783 = vmatpush1.msra.mxu0 0.0
      %1784 = vmatprep.subr.mxu0 0.0
      %1785 = vmatpush1.msra.mxu0 0.0
      %1786 = vmatprep.subr.mxu0 0.0
      %1787 = vmatpush1.msra.mxu0 0.0
      %1788 = vmatprep.subr.mxu0 0.0
      %1789 = vmatpush1.msra.mxu0 0.0
      %1790 = vmatprep.subr.mxu0 0.0
      %1791 = vmatpush1.msra.mxu0 0.0
      %1792 = vmatprep.subr.mxu0 0.0
      %1793 = vmatpush1.msra.mxu0 0.0
      %1794 = vmatprep.subr.mxu0 0.0
      %1795 = vmatpush1.msra.mxu0 0.0
      %1796 = vmatprep.subr.mxu0 0.0
      %1797 = vmatpush1.msra.mxu0 0.0
      %1798 = vmatprep.subr.mxu0 0.0
      %1799 = vmatpush1.msra.mxu0 0.0
      %1800 = vmatprep.subr.mxu0 0.0
      %1801 = vmatpush1.msra.mxu0 0.0
      %1802 = vmatprep.subr.mxu0 0.0
      %1803 = vmatpush1.msra.mxu0 0.0
      %1804 = vmatprep.subr.mxu0 0.0
      %1805 = vmatpush1.msra.mxu0 0.0
      %1806 = vmatprep.subr.mxu0 0.0
      %1807 = vmatpush1.msra.mxu0 0.0
      %1808 = vmatprep.subr.mxu0 0.0
      %1809 = vmatpush1.msra.mxu0 0.0
      %1810 = vmatprep.subr.mxu0 0.0
      %1811 = vmatpush1.msra.mxu0 0.0
      %1812 = vmatprep.subr.mxu0 0.0
      %1813 = vmatpush1.msra.mxu0 0.0
      %1814 = vmatprep.subr.mxu0 0.0
      %1815 = vmatpush1.msra.mxu0 0.0
      %1816 = vmatprep.subr.mxu0 0.0
      %1817 = vmatpush1.msra.mxu0 0.0
      %1818 = vmatprep.mubr.f32.mxu0 0.0
      %1819 = vmatmul.mubr.f32.gmra.mrb[0].mxu0 %v1743
      %v1820 = vpop.f32.mrb[0].mxu0
      %v1821 = vadd.f32 0.0, %v1820
      %v1822 = vpop.f32.mrb[0].mxu0
      %1823 = vmatprep.mubr.f32.mxu0 0.0
      %1824 = vmatmul.mubr.f32.gmra.mrb[0].mxu0 %v1746
      %v1825 = vpop.f32.mrb[0].mxu0
      %v1826 = vadd.f32 0.0, %v1825
      %v1827 = vpop.f32.mrb[0].mxu0
      %1828 = vmatprep.mubr.f32.mxu0 0.0
      %1829 = vmatmul.mubr.f32.gmra.mrb[0].mxu0 %v1749
      %v1830 = vpop.f32.mrb[0].mxu0
      %v1831 = vadd.f32 0.0, %v1830
      %v1832 = vpop.f32.mrb[0].mxu0
      %1833 = vmatprep.mubr.f32.mxu0 0.0
      %1834 = vmatmul.mubr.f32.gmra.mrb[0].mxu0 %v1752
      %v1835 = vpop.f32.mrb[0].mxu0
      %v1836 = vadd.f32 0.0, %v1835
      %v1837 = vpop.f32.mrb[0].mxu0
      %1838 = vdwg.mxu0
      %v1839 = vmax.f32 %v1737, 0.0
      %v1840 = vmax.f32 %v1738, 0.0
      %v1841 = vmax.f32 %v1739, 0.0
      %v1842 = vmax.f32 %v1740, 0.0
      %v1843 = vmin.f32 %v1839, 1.0
      %v1844 = vmin.f32 %v1840, 1.0
      %v1845 = vmin.f32 %v1841, 1.0
      %v1846 = vmin.f32 %v1842, 1.0
      %v1847 = vmax.f32 %v1821, 0.0
      %v1848 = vmax.f32 %v1826, 0.0
      %v1849 = vmax.f32 %v1831, 0.0
      %v1850 = vmax.f32 %v1836, 0.0
      %v1851 = vmin.f32 %v1847, 1.0
      %v1852 = vmin.f32 %v1848, 1.0
      %v1853 = vmin.f32 %v1849, 1.0
      %v1854 = vmin.f32 %v1850, 1.0
      %v1855 = vadd.f32 %v1821, 1e-08
      %v1856 = vadd.f32 %v1826, 1e-08
      %v1857 = vadd.f32 %v1831, 1e-08
      %v1858 = vadd.f32 %v1836, 1e-08
      %v1859 = vrcp.pop %v1855
      %v1860 = vrcp.pop %v1856
      %v1861 = vrcp.pop %v1857
      %v1862 = vrcp.pop %v1858
      %v1863 = vmul.f32 %v1859, 108.0
      %v1864 = vmul.f32 %v1860, 108.0
      %v1865 = vmul.f32 %v1861, 108.0
      %v1866 = vmul.f32 %v1862, 108.0
      %v1867 = vmul.f32 %v1863, %v1851
      %v1868 = vmul.f32 %v1864, %v1852
      %v1869 = vmul.f32 %v1865, %v1853
      %v1870 = vmul.f32 %v1866, %v1854
      %v1871 = vld [vmem:[#allocation4] sm:$0xff]
      %v1872 = vld [vmem:[#allocation4 + $0x8] sm:$0xff]
      %v1873 = vld [vmem:[#allocation4 + $0x10] sm:$0xff]
      %v1874 = vld [vmem:[#allocation4 + $0x18] sm:$0xff]
      %v1875 = vld [vmem:[#allocation4 + $0x20] sm:$0xff]
      %v1876 = vld [vmem:[#allocation4 + $0x28] sm:$0xff]
      %v1877 = vld [vmem:[#allocation4 + $0x30] sm:$0xff]
      %v1878 = vld [vmem:[#allocation4 + $0x38] sm:$0xff]
      %v1879 = vld [vmem:[#allocation4 + $0x40] sm:$0xff]
      %v1880 = vld [vmem:[#allocation4 + $0x48] sm:$0xff]
      %v1881 = vld [vmem:[#allocation4 + $0x50] sm:$0xff]
      %v1882 = vld [vmem:[#allocation4 + $0x58] sm:$0xff]
      %v1883 = vld [vmem:[#allocation4 + $0x60] sm:$0xff]
      %v1884 = vld [vmem:[#allocation4 + $0x68] sm:$0xff]
      %v1885 = vld [vmem:[#allocation4 + $0x70] sm:$0xff]
      %v1886 = vld [vmem:[#allocation4 + $0x78] sm:$0xff]
      %v1887 = vld [vmem:[#allocation4 + $0x80] sm:$0xff]
      %v1888 = vld [vmem:[#allocation4 + $0x88] sm:$0xff]
      %v1889 = vld [vmem:[#allocation4 + $0x90] sm:$0xff]
      %v1890 = vld [vmem:[#allocation4 + $0x98] sm:$0xff]
      %v1891 = vld [vmem:[#allocation4 + $0xa0] sm:$0xff]
      %v1892 = vld [vmem:[#allocation4 + $0xa8] sm:$0xff]
      %v1893 = vld [vmem:[#allocation4 + $0xb0] sm:$0xff]
      %v1894 = vld [vmem:[#allocation4 + $0xb8] sm:$0xff]
      %v1895 = vld [vmem:[#allocation4 + $0xc0] sm:$0xff]
      %v1896 = vld [vmem:[#allocation4 + $0xc8] sm:$0xff]
      %v1897 = vld [vmem:[#allocation4 + $0xd0] sm:$0xff]
      %v1898 = vld [vmem:[#allocation4 + $0xd8] sm:$0xff]
      %v1899 = vld [vmem:[%s3] sm:$0xff]
      %v1900 = vld [vmem:[%s3 + $0x8] sm:$0xff]
      %v1901 = vld [vmem:[%s3 + $0x10] sm:$0xff]
      %v1902 = vld [vmem:[%s3 + $0x18] sm:$0xff]
      %v1903 = vld [vmem:[%s3 + $0x20] sm:$0xff]
      %v1904 = vld [vmem:[%s3 + $0x28] sm:$0xff]
      %v1905 = vld [vmem:[%s3 + $0x30] sm:$0xff]
      %v1906 = vld [vmem:[%s3 + $0x38] sm:$0xff]
      %v1907 = vld [vmem:[%s3 + $0x40] sm:$0xff]
      %v1908 = vld [vmem:[%s3 + $0x48] sm:$0xff]
      %v1909 = vld [vmem:[%s3 + $0x50] sm:$0xff]
      %v1910 = vld [vmem:[%s3 + $0x58] sm:$0xff]
      %v1911 = vld [vmem:[%s3 + $0x60] sm:$0xff]
      %v1912 = vld [vmem:[%s3 + $0x68] sm:$0xff]
      %v1913 = vld [vmem:[%s3 + $0x70] sm:$0xff]
      %v1914 = vld [vmem:[%s3 + $0x78] sm:$0xff]
      %v1915 = vld [vmem:[%s3 + $0x80] sm:$0xff]
      %v1916 = vld [vmem:[%s3 + $0x88] sm:$0xff]
      %v1917 = vld [vmem:[%s3 + $0x90] sm:$0xff]
      %v1918 = vld [vmem:[%s3 + $0x98] sm:$0xff]
      %v1919 = vld [vmem:[%s3 + $0xa0] sm:$0xff]
      %v1920 = vld [vmem:[%s3 + $0xa8] sm:$0xff]
      %v1921 = vld [vmem:[%s3 + $0xb0] sm:$0xff]
      %v1922 = vld [vmem:[%s3 + $0xb8] sm:$0xff]
      %v1923 = vld [vmem:[%s3 + $0xc0] sm:$0xff]
      %v1924 = vld [vmem:[%s3 + $0xc8] sm:$0xff]
      %v1925 = vld [vmem:[%s3 + $0xd0] sm:$0xff]
      %v1926 = vld [vmem:[%s3 + $0xd8] sm:$0xff]
      %v1927 = vld [vmem:[%s3 + $0xe0] sm:$0xff]
      %v1928 = vld [vmem:[%s3 + $0xe8] sm:$0xff]
      %v1929 = vld [vmem:[%s3 + $0xf0] sm:$0xff]
      %v1930 = vld [vmem:[%s3 + $0xf8] sm:$0xff]
      %v1931 = vld [vmem:[%s3 + $0x100] sm:$0xff]
      %v1932 = vld [vmem:[%s3 + $0x108] sm:$0xff]
      %v1933 = vld [vmem:[%s3 + $0x110] sm:$0xff]
      %v1934 = vld [vmem:[%s3 + $0x118] sm:$0xff]
      %v1935 = vld [vmem:[%s3 + $0x120] sm:$0xff]
      %v1936 = vld [vmem:[%s3 + $0x128] sm:$0xff]
      %v1937 = vld [vmem:[%s3 + $0x130] sm:$0xff]
      %v1938 = vld [vmem:[%s3 + $0x138] sm:$0xff]
      %v1939 = vld [vmem:[%s3 + $0x140] sm:$0xff]
      %v1940 = vld [vmem:[%s3 + $0x148] sm:$0xff]
      %v1941 = vld [vmem:[%s3 + $0x150] sm:$0xff]
      %v1942 = vld [vmem:[%s3 + $0x158] sm:$0xff]
      %v1943 = vld [vmem:[%s3 + $0x160] sm:$0xff]
      %v1944 = vld [vmem:[%s3 + $0x168] sm:$0xff]
      %v1945 = vld [vmem:[%s3 + $0x170] sm:$0xff]
      %v1946 = vld [vmem:[%s3 + $0x178] sm:$0xff]
      %v1947 = vld [vmem:[%s3 + $0x180] sm:$0xff]
      %v1948 = vld [vmem:[%s3 + $0x188] sm:$0xff]
      %v1949 = vld [vmem:[%s3 + $0x190] sm:$0xff]
      %v1950 = vld [vmem:[%s3 + $0x198] sm:$0xff]
      %v1951 = vld [vmem:[%s3 + $0x1a0] sm:$0xff]
      %v1952 = vld [vmem:[%s3 + $0x1a8] sm:$0xff]
      %v1953 = vld [vmem:[%s3 + $0x1b0] sm:$0xff]
      %v1954 = vld [vmem:[%s3 + $0x1b8] sm:$0xff]
      %v1955 = vld [vmem:[%s3 + $0x1c0] sm:$0xff]
      %v1956 = vld [vmem:[%s3 + $0x1c8] sm:$0xff]
      %v1957 = vld [vmem:[%s3 + $0x1d0] sm:$0xff]
      %v1958 = vld [vmem:[%s3 + $0x1d8] sm:$0xff]
      %v1959 = vld [vmem:[%s3 + $0x1e0] sm:$0xff]
      %v1960 = vld [vmem:[%s3 + $0x1e8] sm:$0xff]
      %v1961 = vld [vmem:[%s3 + $0x1f0] sm:$0xff]
      %v1962 = vld [vmem:[%s3 + $0x1f8] sm:$0xff]
      %v1963 = vld [vmem:[%s3 + $0x200] sm:$0xff]
      %v1964 = vld [vmem:[%s3 + $0x208] sm:$0xff]
      %v1965 = vld [vmem:[%s3 + $0x210] sm:$0xff]
      %v1966 = vld [vmem:[%s3 + $0x218] sm:$0xff]
      %v1967 = vld [vmem:[%s3 + $0x220] sm:$0xff]
      %v1968 = vld [vmem:[%s3 + $0x228] sm:$0xff]
      %v1969 = vld [vmem:[%s3 + $0x230] sm:$0xff]
      %v1970 = vld [vmem:[%s3 + $0x238] sm:$0xff]
      %v1971 = vld [vmem:[%s3 + $0x240] sm:$0xff]
      %v1972 = vld [vmem:[%s3 + $0x248] sm:$0xff]
      %v1973 = vld [vmem:[%s3 + $0x250] sm:$0xff]
      %v1974 = vld [vmem:[%s3 + $0x258] sm:$0xff]
      %v1975 = vld [vmem:[%s3 + $0x260] sm:$0xff]
      %v1976 = vld [vmem:[%s3 + $0x268] sm:$0xff]
      %v1977 = vld [vmem:[%s3 + $0x270] sm:$0xff]
      %v1978 = vld [vmem:[%s3 + $0x278] sm:$0xff]
      %v1979 = vld [vmem:[%s3 + $0x280] sm:$0xff]
      %v1980 = vld [vmem:[%s3 + $0x288] sm:$0xff]
      %v1981 = vld [vmem:[%s3 + $0x290] sm:$0xff]
      %v1982 = vld [vmem:[%s3 + $0x298] sm:$0xff]
      %v1983 = vld [vmem:[%s3 + $0x2a0] sm:$0xff]
      %v1984 = vld [vmem:[%s3 + $0x2a8] sm:$0xff]
      %v1985 = vld [vmem:[%s3 + $0x2b0] sm:$0xff]
      %v1986 = vld [vmem:[%s3 + $0x2b8] sm:$0xff]
      %v1987 = vld [vmem:[%s3 + $0x2c0] sm:$0xff]
      %v1988 = vld [vmem:[%s3 + $0x2c8] sm:$0xff]
      %v1989 = vld [vmem:[%s3 + $0x2d0] sm:$0xff]
      %v1990 = vld [vmem:[%s3 + $0x2d8] sm:$0xff]
      %v1991 = vld [vmem:[%s3 + $0x2e0] sm:$0xff]
      %v1992 = vld [vmem:[%s3 + $0x2e8] sm:$0xff]
      %v1993 = vld [vmem:[%s3 + $0x2f0] sm:$0xff]
      %v1994 = vld [vmem:[%s3 + $0x2f8] sm:$0xff]
      %v1995 = vld [vmem:[%s3 + $0x300] sm:$0xff]
      %v1996 = vld [vmem:[%s3 + $0x308] sm:$0xff]
      %v1997 = vld [vmem:[%s3 + $0x310] sm:$0xff]
      %v1998 = vld [vmem:[%s3 + $0x318] sm:$0xff]
      %v1999 = vld [vmem:[%s3 + $0x320] sm:$0xff]
      %v2000 = vld [vmem:[%s3 + $0x328] sm:$0xff]
      %v2001 = vld [vmem:[%s3 + $0x330] sm:$0xff]
      %v2002 = vld [vmem:[%s3 + $0x338] sm:$0xff]
      %v2003 = vld [vmem:[%s3 + $0x340] sm:$0xff]
      %v2004 = vld [vmem:[%s3 + $0x348] sm:$0xff]
      %v2005 = vld [vmem:[%s3 + $0x350] sm:$0xff]
      %v2006 = vld [vmem:[%s3 + $0x358] sm:$0xff]
      %vm2007 = vcmask 785408
      %v2009 = vsel %vm2007, %v1877, 0
      %v2012 = vsel %vm2007, %v1884, 0
      %v2015 = vsel %vm2007, %v1891, 0
      %v2018 = vsel %vm2007, %v1898, 0
      %2020 = vmatprep.subr.mxu0 0.0
      %2021 = vmatpush1.msra.mxu0 %v1899
      %2022 = vmatprep.subr.mxu0 0.0
      %2023 = vmatpush1.msra.mxu0 %v1900
      %2024 = vmatprep.subr.mxu0 0.0
      %2025 = vmatpush1.msra.mxu0 %v1901
      %2026 = vmatprep.subr.mxu0 0.0
      %2027 = vmatpush1.msra.mxu0 %v1902
      %2028 = vmatprep.subr.mxu0 0.0
      %2029 = vmatpush1.msra.mxu0 %v1903
      %2030 = vmatprep.subr.mxu0 0.0
      %2031 = vmatpush1.msra.mxu0 %v1904
      %2032 = vmatprep.subr.mxu0 0.0
      %2033 = vmatpush1.msra.mxu0 %v1905
      %2034 = vmatprep.subr.mxu0 0.0
      %2035 = vmatpush1.msra.mxu0 %v1906
      %2036 = vmatprep.subr.mxu0 0.0
      %2037 = vmatpush1.msra.mxu0 %v1907
      %2038 = vmatprep.subr.mxu0 0.0
      %2039 = vmatpush1.msra.mxu0 %v1908
      %2040 = vmatprep.subr.mxu0 0.0
      %2041 = vmatpush1.msra.mxu0 %v1909
      %2042 = vmatprep.subr.mxu0 0.0
      %2043 = vmatpush1.msra.mxu0 %v1910
      %2044 = vmatprep.subr.mxu0 0.0
      %2045 = vmatpush1.msra.mxu0 %v1911
      %2046 = vmatprep.subr.mxu0 0.0
      %2047 = vmatpush1.msra.mxu0 %v1912
      %2048 = vmatprep.subr.mxu0 0.0
      %2049 = vmatpush1.msra.mxu0 %v1913
      %2050 = vmatprep.subr.mxu0 0.0
      %2051 = vmatpush1.msra.mxu0 %v1914
      %2052 = vmatprep.subr.mxu0 0.0
      %2053 = vmatpush1.msra.mxu0 %v1915
      %2054 = vmatprep.subr.mxu0 0.0
      %2055 = vmatpush1.msra.mxu0 %v1916
      %2056 = vmatprep.subr.mxu0 0.0
      %2057 = vmatpush1.msra.mxu0 %v1917
      %2058 = vmatprep.subr.mxu0 0.0
      %2059 = vmatpush1.msra.mxu0 %v1918
      %2060 = vmatprep.subr.mxu0 0.0
      %2061 = vmatpush1.msra.mxu0 %v1919
      %2062 = vmatprep.subr.mxu0 0.0
      %2063 = vmatpush1.msra.mxu0 %v1920
      %2064 = vmatprep.subr.mxu0 0.0
      %2065 = vmatpush1.msra.mxu0 %v1921
      %2066 = vmatprep.subr.mxu0 0.0
      %2067 = vmatpush1.msra.mxu0 %v1922
      %2068 = vmatprep.subr.mxu0 0.0
      %2069 = vmatpush1.msra.mxu0 %v1923
      %2070 = vmatprep.subr.mxu0 0.0
      %2071 = vmatpush1.msra.mxu0 %v1924
      %2072 = vmatprep.subr.mxu0 0.0
      %2073 = vmatpush1.msra.mxu0 %v1925
      %2074 = vmatprep.subr.mxu0 0.0
      %2075 = vmatpush1.msra.mxu0 %v1926
      %2076 = vmatprep.subr.mxu0 0.0
      %2077 = vmatpush1.msra.mxu0 %v1927
      %2078 = vmatprep.subr.mxu0 0.0
      %2079 = vmatpush1.msra.mxu0 %v1928
      %2080 = vmatprep.subr.mxu0 0.0
      %2081 = vmatpush1.msra.mxu0 %v1929
      %2082 = vmatprep.subr.mxu0 0.0
      %2083 = vmatpush1.msra.mxu0 %v1930
      %2084 = vmatprep.mubr.f32.mxu0 %v1872
      %2085 = vmatmul.mubr.f32.gmra.mrb[0].mxu0 %v1871
      %v2086 = vpop.f32.mrb[0].mxu0
      %v2087 = vadd.f32 0.0, %v2086
      %v2088 = vpop.f32.mrb[0].mxu0
      %2089 = vmatprep.mubr.f32.mxu0 %v1879
      %2090 = vmatmul.mubr.f32.gmra.mrb[0].mxu0 %v1878
      %v2091 = vpop.f32.mrb[0].mxu0
      %v2092 = vadd.f32 0.0, %v2091
      %v2093 = vpop.f32.mrb[0].mxu0
      %2094 = vmatprep.mubr.f32.mxu0 %v1886
      %2095 = vmatmul.mubr.f32.gmra.mrb[0].mxu0 %v1885
      %v2096 = vpop.f32.mrb[0].mxu0
      %v2097 = vadd.f32 0.0, %v2096
      %v2098 = vpop.f32.mrb[0].mxu0
      %2099 = vmatprep.mubr.f32.mxu0 %v1893
      %2100 = vmatmul.mubr.f32.gmra.mrb[0].mxu0 %v1892
      %v2101 = vpop.f32.mrb[0].mxu0
      %v2102 = vadd.f32 0.0, %v2101
      %v2103 = vpop.f32.mrb[0].mxu0
      %2104 = vdwg.mxu0
      %2105 = vmatprep.subr.mxu0 0.0
      %2106 = vmatpush1.msra.mxu0 %v1931
      %2107 = vmatprep.subr.mxu0 0.0
      %2108 = vmatpush1.msra.mxu0 %v1932
      %2109 = vmatprep.subr.mxu0 0.0
      %2110 = vmatpush1.msra.mxu0 %v1933
      %2111 = vmatprep.subr.mxu0 0.0
      %2112 = vmatpush1.msra.mxu0 %v1934
      %2113 = vmatprep.subr.mxu0 0.0
      %2114 = vmatpush1.msra.mxu0 %v1935
      %2115 = vmatprep.subr.mxu0 0.0
      %2116 = vmatpush1.msra.mxu0 %v1936
      %2117 = vmatprep.subr.mxu0 0.0
      %2118 = vmatpush1.msra.mxu0 %v1937
      %2119 = vmatprep.subr.mxu0 0.0
      %2120 = vmatpush1.msra.mxu0 %v1938
      %2121 = vmatprep.subr.mxu0 0.0
      %2122 = vmatpush1.msra.mxu0 %v1939
      %2123 = vmatprep.subr.mxu0 0.0
      %2124 = vmatpush1.msra.mxu0 %v1940
      %2125 = vmatprep.subr.mxu0 0.0
      %2126 = vmatpush1.msra.mxu0 %v1941
      %2127 = vmatprep.subr.mxu0 0.0
      %2128 = vmatpush1.msra.mxu0 %v1942
      %2129 = vmatprep.subr.mxu0 0.0
      %2130 = vmatpush1.msra.mxu0 %v1943
      %2131 = vmatprep.subr.mxu0 0.0
      %2132 = vmatpush1.msra.mxu0 %v1944
      %2133 = vmatprep.subr.mxu0 0.0
      %2134 = vmatpush1.msra.mxu0 %v1945
      %2135 = vmatprep.subr.mxu0 0.0
      %2136 = vmatpush1.msra.mxu0 %v1946
      %2137 = vmatprep.subr.mxu0 0.0
      %2138 = vmatpush1.msra.mxu0 %v1947
      %2139 = vmatprep.subr.mxu0 0.0
      %2140 = vmatpush1.msra.mxu0 %v1948
      %2141 = vmatprep.subr.mxu0 0.0
      %2142 = vmatpush1.msra.mxu0 %v1949
      %2143 = vmatprep.subr.mxu0 0.0
      %2144 = vmatpush1.msra.mxu0 %v1950
      %2145 = vmatprep.subr.mxu0 0.0
      %2146 = vmatpush1.msra.mxu0 %v1951
      %2147 = vmatprep.subr.mxu0 0.0
      %2148 = vmatpush1.msra.mxu0 %v1952
      %2149 = vmatprep.subr.mxu0 0.0
      %2150 = vmatpush1.msra.mxu0 %v1953
      %2151 = vmatprep.subr.mxu0 0.0
      %2152 = vmatpush1.msra.mxu0 %v1954
      %2153 = vmatprep.subr.mxu0 0.0
      %2154 = vmatpush1.msra.mxu0 %v1955
      %2155 = vmatprep.subr.mxu0 0.0
      %2156 = vmatpush1.msra.mxu0 %v1956
      %2157 = vmatprep.subr.mxu0 0.0
      %2158 = vmatpush1.msra.mxu0 %v1957
      %2159 = vmatprep.subr.mxu0 0.0
      %2160 = vmatpush1.msra.mxu0 %v1958
      %2161 = vmatprep.subr.mxu0 0.0
      %2162 = vmatpush1.msra.mxu0 %v1959
      %2163 = vmatprep.subr.mxu0 0.0
      %2164 = vmatpush1.msra.mxu0 %v1960
      %2165 = vmatprep.subr.mxu0 0.0
      %2166 = vmatpush1.msra.mxu0 %v1961
      %2167 = vmatprep.subr.mxu0 0.0
      %2168 = vmatpush1.msra.mxu0 %v1962
      %2169 = vmatprep.mubr.f32.mxu0 %v1874
      %2170 = vmatmul.mubr.f32.gmra.mrb[0].mxu0 %v1873
      %v2171 = vpop.f32.mrb[0].mxu0
      %v2172 = vadd.f32 %v2087, %v2171
      %v2173 = vpop.f32.mrb[0].mxu0
      %2174 = vmatprep.mubr.f32.mxu0 %v1881
      %2175 = vmatmul.mubr.f32.gmra.mrb[0].mxu0 %v1880
      %v2176 = vpop.f32.mrb[0].mxu0
      %v2177 = vadd.f32 %v2092, %v2176
      %v2178 = vpop.f32.mrb[0].mxu0
      %2179 = vmatprep.mubr.f32.mxu0 %v1888
      %2180 = vmatmul.mubr.f32.gmra.mrb[0].mxu0 %v1887
      %v2181 = vpop.f32.mrb[0].mxu0
      %v2182 = vadd.f32 %v2097, %v2181
      %v2183 = vpop.f32.mrb[0].mxu0
      %2184 = vmatprep.mubr.f32.mxu0 %v1895
      %2185 = vmatmul.mubr.f32.gmra.mrb[0].mxu0 %v1894
      %v2186 = vpop.f32.mrb[0].mxu0
      %v2187 = vadd.f32 %v2102, %v2186
      %v2188 = vpop.f32.mrb[0].mxu0
      %2189 = vdwg.mxu0
      %2190 = vmatprep.subr.mxu0 0.0
      %2191 = vmatpush1.msra.mxu0 %v1963
      %2192 = vmatprep.subr.mxu0 0.0
      %2193 = vmatpush1.msra.mxu0 %v1964
      %2194 = vmatprep.subr.mxu0 0.0
      %2195 = vmatpush1.msra.mxu0 %v1965
      %2196 = vmatprep.subr.mxu0 0.0
      %2197 = vmatpush1.msra.mxu0 %v1966
      %2198 = vmatprep.subr.mxu0 0.0
      %2199 = vmatpush1.msra.mxu0 %v1967
      %2200 = vmatprep.subr.mxu0 0.0
      %2201 = vmatpush1.msra.mxu0 %v1968
      %2202 = vmatprep.subr.mxu0 0.0
      %2203 = vmatpush1.msra.mxu0 %v1969
      %2204 = vmatprep.subr.mxu0 0.0
      %2205 = vmatpush1.msra.mxu0 %v1970
      %2206 = vmatprep.subr.mxu0 0.0
      %2207 = vmatpush1.msra.mxu0 %v1971
      %2208 = vmatprep.subr.mxu0 0.0
      %2209 = vmatpush1.msra.mxu0 %v1972
      %2210 = vmatprep.subr.mxu0 0.0
      %2211 = vmatpush1.msra.mxu0 %v1973
      %2212 = vmatprep.subr.mxu0 0.0
      %2213 = vmatpush1.msra.mxu0 %v1974
      %2214 = vmatprep.subr.mxu0 0.0
      %2215 = vmatpush1.msra.mxu0 %v1975
      %2216 = vmatprep.subr.mxu0 0.0
      %2217 = vmatpush1.msra.mxu0 %v1976
      %2218 = vmatprep.subr.mxu0 0.0
      %2219 = vmatpush1.msra.mxu0 %v1977
      %2220 = vmatprep.subr.mxu0 0.0
      %2221 = vmatpush1.msra.mxu0 %v1978
      %2222 = vmatprep.subr.mxu0 0.0
      %2223 = vmatpush1.msra.mxu0 %v1979
      %2224 = vmatprep.subr.mxu0 0.0
      %2225 = vmatpush1.msra.mxu0 %v1980
      %2226 = vmatprep.subr.mxu0 0.0
      %2227 = vmatpush1.msra.mxu0 %v1981
      %2228 = vmatprep.subr.mxu0 0.0
      %2229 = vmatpush1.msra.mxu0 %v1982
      %2230 = vmatprep.subr.mxu0 0.0
      %2231 = vmatpush1.msra.mxu0 %v1983
      %2232 = vmatprep.subr.mxu0 0.0
      %2233 = vmatpush1.msra.mxu0 %v1984
      %2234 = vmatprep.subr.mxu0 0.0
      %2235 = vmatpush1.msra.mxu0 %v1985
      %2236 = vmatprep.subr.mxu0 0.0
      %2237 = vmatpush1.msra.mxu0 %v1986
      %2238 = vmatprep.subr.mxu0 0.0
      %2239 = vmatpush1.msra.mxu0 %v1987
      %2240 = vmatprep.subr.mxu0 0.0
      %2241 = vmatpush1.msra.mxu0 %v1988
      %2242 = vmatprep.subr.mxu0 0.0
      %2243 = vmatpush1.msra.mxu0 %v1989
      %2244 = vmatprep.subr.mxu0 0.0
      %2245 = vmatpush1.msra.mxu0 %v1990
      %2246 = vmatprep.subr.mxu0 0.0
      %2247 = vmatpush1.msra.mxu0 %v1991
      %2248 = vmatprep.subr.mxu0 0.0
      %2249 = vmatpush1.msra.mxu0 %v1992
      %2250 = vmatprep.subr.mxu0 0.0
      %2251 = vmatpush1.msra.mxu0 %v1993
      %2252 = vmatprep.subr.mxu0 0.0
      %2253 = vmatpush1.msra.mxu0 %v1994
      %2254 = vmatprep.mubr.f32.mxu0 %v1876
      %2255 = vmatmul.mubr.f32.gmra.mrb[0].mxu0 %v1875
      %v2256 = vpop.f32.mrb[0].mxu0
      %v2257 = vadd.f32 %v2172, %v2256
      %v2258 = vpop.f32.mrb[0].mxu0
      %2259 = vmatprep.mubr.f32.mxu0 %v1883
      %2260 = vmatmul.mubr.f32.gmra.mrb[0].mxu0 %v1882
      %v2261 = vpop.f32.mrb[0].mxu0
      %v2262 = vadd.f32 %v2177, %v2261
      %v2263 = vpop.f32.mrb[0].mxu0
      %2264 = vmatprep.mubr.f32.mxu0 %v1890
      %2265 = vmatmul.mubr.f32.gmra.mrb[0].mxu0 %v1889
      %v2266 = vpop.f32.mrb[0].mxu0
      %v2267 = vadd.f32 %v2182, %v2266
      %v2268 = vpop.f32.mrb[0].mxu0
      %2269 = vmatprep.mubr.f32.mxu0 %v1897
      %2270 = vmatmul.mubr.f32.gmra.mrb[0].mxu0 %v1896
      %v2271 = vpop.f32.mrb[0].mxu0
      %v2272 = vadd.f32 %v2187, %v2271
      %v2273 = vpop.f32.mrb[0].mxu0
      %2274 = vdwg.mxu0
      %2275 = vmatprep.subr.mxu0 0.0
      %2276 = vmatpush1.msra.mxu0 %v1995
      %2277 = vmatprep.subr.mxu0 0.0
      %2278 = vmatpush1.msra.mxu0 %v1996
      %2279 = vmatprep.subr.mxu0 0.0
      %2280 = vmatpush1.msra.mxu0 %v1997
      %2281 = vmatprep.subr.mxu0 0.0
      %2282 = vmatpush1.msra.mxu0 %v1998
      %2283 = vmatprep.subr.mxu0 0.0
      %2284 = vmatpush1.msra.mxu0 %v1999
      %2285 = vmatprep.subr.mxu0 0.0
      %2286 = vmatpush1.msra.mxu0 %v2000
      %2287 = vmatprep.subr.mxu0 0.0
      %2288 = vmatpush1.msra.mxu0 %v2001
      %2289 = vmatprep.subr.mxu0 0.0
      %2290 = vmatpush1.msra.mxu0 %v2002
      %2291 = vmatprep.subr.mxu0 0.0
      %2292 = vmatpush1.msra.mxu0 %v2003
      %2293 = vmatprep.subr.mxu0 0.0
      %2294 = vmatpush1.msra.mxu0 %v2004
      %2295 = vmatprep.subr.mxu0 0.0
      %2296 = vmatpush1.msra.mxu0 %v2005
      %2297 = vmatprep.subr.mxu0 0.0
      %2298 = vmatpush1.msra.mxu0 %v2006
      %2299 = vmatprep.subr.mxu0 0.0
      %2300 = vmatpush1.msra.mxu0 0.0
      %2301 = vmatprep.subr.mxu0 0.0
      %2302 = vmatpush1.msra.mxu0 0.0
      %2303 = vmatprep.subr.mxu0 0.0
      %2304 = vmatpush1.msra.mxu0 0.0
      %2305 = vmatprep.subr.mxu0 0.0
      %2306 = vmatpush1.msra.mxu0 0.0
      %2307 = vmatprep.subr.mxu0 0.0
      %2308 = vmatpush1.msra.mxu0 0.0
      %2309 = vmatprep.subr.mxu0 0.0
      %2310 = vmatpush1.msra.mxu0 0.0
      %2311 = vmatprep.subr.mxu0 0.0
      %2312 = vmatpush1.msra.mxu0 0.0
      %2313 = vmatprep.subr.mxu0 0.0
      %2314 = vmatpush1.msra.mxu0 0.0
      %2315 = vmatprep.subr.mxu0 0.0
      %2316 = vmatpush1.msra.mxu0 0.0
      %2317 = vmatprep.subr.mxu0 0.0
      %2318 = vmatpush1.msra.mxu0 0.0
      %2319 = vmatprep.subr.mxu0 0.0
      %2320 = vmatpush1.msra.mxu0 0.0
      %2321 = vmatprep.subr.mxu0 0.0
      %2322 = vmatpush1.msra.mxu0 0.0
      %2323 = vmatprep.subr.mxu0 0.0
      %2324 = vmatpush1.msra.mxu0 0.0
      %2325 = vmatprep.subr.mxu0 0.0
      %2326 = vmatpush1.msra.mxu0 0.0
      %2327 = vmatprep.subr.mxu0 0.0
      %2328 = vmatpush1.msra.mxu0 0.0
      %2329 = vmatprep.subr.mxu0 0.0
      %2330 = vmatpush1.msra.mxu0 0.0
      %2331 = vmatprep.subr.mxu0 0.0
      %2332 = vmatpush1.msra.mxu0 0.0
      %2333 = vmatprep.subr.mxu0 0.0
      %2334 = vmatpush1.msra.mxu0 0.0
      %2335 = vmatprep.subr.mxu0 0.0
      %2336 = vmatpush1.msra.mxu0 0.0
      %2337 = vmatprep.subr.mxu0 0.0
      %2338 = vmatpush1.msra.mxu0 0.0
      %2339 = vmatprep.mubr.f32.mxu0 0.0
      %2340 = vmatmul.mubr.f32.gmra.mrb[0].mxu0 %v2009
      %v2341 = vpop.f32.mrb[0].mxu0
      %v2342 = vadd.f32 %v2257, %v2341
      %v2343 = vpop.f32.mrb[0].mxu0
      %2344 = vmatprep.mubr.f32.mxu0 0.0
      %2345 = vmatmul.mubr.f32.gmra.mrb[0].mxu0 %v2012
      %v2346 = vpop.f32.mrb[0].mxu0
      %v2347 = vadd.f32 %v2262, %v2346
      %v2348 = vpop.f32.mrb[0].mxu0
      %2349 = vmatprep.mubr.f32.mxu0 0.0
      %2350 = vmatmul.mubr.f32.gmra.mrb[0].mxu0 %v2015
      %v2351 = vpop.f32.mrb[0].mxu0
      %v2352 = vadd.f32 %v2267, %v2351
      %v2353 = vpop.f32.mrb[0].mxu0
      %2354 = vmatprep.mubr.f32.mxu0 0.0
      %2355 = vmatmul.mubr.f32.gmra.mrb[0].mxu0 %v2018
      %v2356 = vpop.f32.mrb[0].mxu0
      %v2357 = vadd.f32 %v2272, %v2356
      %v2358 = vpop.f32.mrb[0].mxu0
      %2359 = vdwg.mxu0
      %v2360 = vmul.f32 %v2342, %v1867
      %v2361 = vmul.f32 %v2347, %v1868
      %v2362 = vmul.f32 %v2352, %v1869
      %v2363 = vmul.f32 %v2357, %v1870
      %v2364 = vld [vmem:[%s10] sm:$0x1]
      %v2366 = vlaneseq
      %v2367 = vshrl.u32 %v2366, 7
      %v2368 = vsub.s32 0, %v2367
      %v2369 = vrot.slane %v2364, %v2368
      %v2371 = vmul.f32 %v2360, %v2369
      %v2372 = vmul.f32 %v2361, %v2369
      %v2373 = vmul.f32 %v2362, %v2369
      %v2374 = vmul.f32 %v2363, %v2369
      %v2375 = vld [vmem:[%s11] sm:$0x1]
      %v2377 = vlaneseq
      %v2378 = vshrl.u32 %v2377, 7
      %v2379 = vsub.s32 0, %v2378
      %v2380 = vrot.slane %v2375, %v2379
      %v2382 = vadd.f32 %v2371, %v2380
      %v2383 = vadd.f32 %v2372, %v2380
      %v2384 = vadd.f32 %v2373, %v2380
      %v2385 = vadd.f32 %v2374, %v2380
      %v2386 = vmax.f32 %v2382, 0.0
      %v2387 = vmax.f32 %v2383, 0.0
      %v2388 = vmax.f32 %v2384, 0.0
      %v2389 = vmax.f32 %v2385, 0.0
      %v2390 = vmul.f32 %v1843, 4.0
      %v2391 = vmul.f32 %v1844, 4.0
      %v2392 = vmul.f32 %v1845, 4.0
      %v2393 = vmul.f32 %v1846, 4.0
      %v2394 = vld [vmem:[%s7] sm:$0xff]
      %v2396 = vsel %vm638, %v2390, 0
      %v2399 = vsel %vm638, %v2391, 0
      %v2402 = vsel %vm638, %v2392, 0
      %v2405 = vsel %vm638, %v2393, 0
      %2407 = vmatprep.subr.mxu0 0.0
      %2408 = vmatpush1.msra.mxu0 %v2394
      %2409 = vmatprep.subr.mxu0 0.0
      %2410 = vmatpush1.msra.mxu0 0.0
      %2411 = vmatprep.subr.mxu0 0.0
      %2412 = vmatpush1.msra.mxu0 0.0
      %2413 = vmatprep.subr.mxu0 0.0
      %2414 = vmatpush1.msra.mxu0 0.0
      %2415 = vmatprep.subr.mxu0 0.0
      %2416 = vmatpush1.msra.mxu0 0.0
      %2417 = vmatprep.subr.mxu0 0.0
      %2418 = vmatpush1.msra.mxu0 0.0
      %2419 = vmatprep.subr.mxu0 0.0
      %2420 = vmatpush1.msra.mxu0 0.0
      %2421 = vmatprep.subr.mxu0 0.0
      %2422 = vmatpush1.msra.mxu0 0.0
      %2423 = vmatprep.subr.mxu0 0.0
      %2424 = vmatpush1.msra.mxu0 0.0
      %2425 = vmatprep.subr.mxu0 0.0
      %2426 = vmatpush1.msra.mxu0 0.0
      %2427 = vmatprep.subr.mxu0 0.0
      %2428 = vmatpush1.msra.mxu0 0.0
      %2429 = vmatprep.subr.mxu0 0.0
      %2430 = vmatpush1.msra.mxu0 0.0
      %2431 = vmatprep.subr.mxu0 0.0
      %2432 = vmatpush1.msra.mxu0 0.0
      %2433 = vmatprep.subr.mxu0 0.0
      %2434 = vmatpush1.msra.mxu0 0.0
      %2435 = vmatprep.subr.mxu0 0.0
      %2436 = vmatpush1.msra.mxu0 0.0
      %2437 = vmatprep.subr.mxu0 0.0
      %2438 = vmatpush1.msra.mxu0 0.0
      %2439 = vmatprep.subr.mxu0 0.0
      %2440 = vmatpush1.msra.mxu0 0.0
      %2441 = vmatprep.subr.mxu0 0.0
      %2442 = vmatpush1.msra.mxu0 0.0
      %2443 = vmatprep.subr.mxu0 0.0
      %2444 = vmatpush1.msra.mxu0 0.0
      %2445 = vmatprep.subr.mxu0 0.0
      %2446 = vmatpush1.msra.mxu0 0.0
      %2447 = vmatprep.subr.mxu0 0.0
      %2448 = vmatpush1.msra.mxu0 0.0
      %2449 = vmatprep.subr.mxu0 0.0
      %2450 = vmatpush1.msra.mxu0 0.0
      %2451 = vmatprep.subr.mxu0 0.0
      %2452 = vmatpush1.msra.mxu0 0.0
      %2453 = vmatprep.subr.mxu0 0.0
      %2454 = vmatpush1.msra.mxu0 0.0
      %2455 = vmatprep.subr.mxu0 0.0
      %2456 = vmatpush1.msra.mxu0 0.0
      %2457 = vmatprep.subr.mxu0 0.0
      %2458 = vmatpush1.msra.mxu0 0.0
      %2459 = vmatprep.subr.mxu0 0.0
      %2460 = vmatpush1.msra.mxu0 0.0
      %2461 = vmatprep.subr.mxu0 0.0
      %2462 = vmatpush1.msra.mxu0 0.0
      %2463 = vmatprep.subr.mxu0 0.0
      %2464 = vmatpush1.msra.mxu0 0.0
      %2465 = vmatprep.subr.mxu0 0.0
      %2466 = vmatpush1.msra.mxu0 0.0
      %2467 = vmatprep.subr.mxu0 0.0
      %2468 = vmatpush1.msra.mxu0 0.0
      %2469 = vmatprep.subr.mxu0 0.0
      %2470 = vmatpush1.msra.mxu0 0.0
      %2471 = vmatprep.mubr.f32.mxu0 0.0
      %2472 = vmatmul.mubr.f32.gmra.mrb[0].mxu0 %v2396
      %v2473 = vpop.f32.mrb[0].mxu0
      %v2474 = vadd.f32 0.0, %v2473
      %v2475 = vpop.f32.mrb[0].mxu0
      %2476 = vmatprep.mubr.f32.mxu0 0.0
      %2477 = vmatmul.mubr.f32.gmra.mrb[0].mxu0 %v2399
      %v2478 = vpop.f32.mrb[0].mxu0
      %v2479 = vadd.f32 0.0, %v2478
      %v2480 = vpop.f32.mrb[0].mxu0
      %2481 = vmatprep.mubr.f32.mxu0 0.0
      %2482 = vmatmul.mubr.f32.gmra.mrb[0].mxu0 %v2402
      %v2483 = vpop.f32.mrb[0].mxu0
      %v2484 = vadd.f32 0.0, %v2483
      %v2485 = vpop.f32.mrb[0].mxu0
      %2486 = vmatprep.mubr.f32.mxu0 0.0
      %2487 = vmatmul.mubr.f32.gmra.mrb[0].mxu0 %v2405
      %v2488 = vpop.f32.mrb[0].mxu0
      %v2489 = vadd.f32 0.0, %v2488
      %v2490 = vpop.f32.mrb[0].mxu0
      %2491 = vdwg.mxu0
      %v2492 = vmax.f32 %v2474, 0.0
      %v2493 = vmax.f32 %v2479, 0.0
      %v2494 = vmax.f32 %v2484, 0.0
      %v2495 = vmax.f32 %v2489, 0.0
      %v2496 = vmin.f32 %v2492, 1.0
      %v2497 = vmin.f32 %v2493, 1.0
      %v2498 = vmin.f32 %v2494, 1.0
      %v2499 = vmin.f32 %v2495, 1.0
      %v2500 = vadd.f32 %v2474, 1e-08
      %v2501 = vadd.f32 %v2479, 1e-08
      %v2502 = vadd.f32 %v2484, 1e-08
      %v2503 = vadd.f32 %v2489, 1e-08
      %v2504 = vrcp.pop %v2500
      %v2505 = vrcp.pop %v2501
      %v2506 = vrcp.pop %v2502
      %v2507 = vrcp.pop %v2503
      %v2508 = vmul.f32 %v2504, 4.0
      %v2509 = vmul.f32 %v2505, 4.0
      %v2510 = vmul.f32 %v2506, 4.0
      %v2511 = vmul.f32 %v2507, 4.0
      %v2512 = vmul.f32 %v2508, %v2496
      %v2513 = vmul.f32 %v2509, %v2497
      %v2514 = vmul.f32 %v2510, %v2498
      %v2515 = vmul.f32 %v2511, %v2499
      %v2516 = vmul.f32 %v2386, %v1851
      %v2517 = vmul.f32 %v2387, %v1852
      %v2518 = vmul.f32 %v2388, %v1853
      %v2519 = vmul.f32 %v2389, %v1854
      %v2520 = vld [vmem:[%s4] sm:$0xff]
      %v2521 = vld [vmem:[%s4 + $0x8] sm:$0xff]
      %v2522 = vld [vmem:[%s4 + $0x10] sm:$0xff]
      %v2523 = vld [vmem:[%s4 + $0x18] sm:$0xff]
      %v2525 = vsel %vm1003, %v2516, 0
      %v2528 = vsel %vm1003, %v2517, 0
      %v2531 = vsel %vm1003, %v2518, 0
      %v2534 = vsel %vm1003, %v2519, 0
      %2536 = vmatprep.subr.mxu0 0.0
      %2537 = vmatpush1.msra.mxu0 %v2520
      %2538 = vmatprep.subr.mxu0 0.0
      %2539 = vmatpush1.msra.mxu0 %v2521
      %2540 = vmatprep.subr.mxu0 0.0
      %2541 = vmatpush1.msra.mxu0 %v2522
      %2542 = vmatprep.subr.mxu0 0.0
      %2543 = vmatpush1.msra.mxu0 %v2523
      %2544 = vmatprep.subr.mxu0 0.0
      %2545 = vmatpush1.msra.mxu0 0.0
      %2546 = vmatprep.subr.mxu0 0.0
      %2547 = vmatpush1.msra.mxu0 0.0
      %2548 = vmatprep.subr.mxu0 0.0
      %2549 = vmatpush1.msra.mxu0 0.0
      %2550 = vmatprep.subr.mxu0 0.0
      %2551 = vmatpush1.msra.mxu0 0.0
      %2552 = vmatprep.subr.mxu0 0.0
      %2553 = vmatpush1.msra.mxu0 0.0
      %2554 = vmatprep.subr.mxu0 0.0
      %2555 = vmatpush1.msra.mxu0 0.0
      %2556 = vmatprep.subr.mxu0 0.0
      %2557 = vmatpush1.msra.mxu0 0.0
      %2558 = vmatprep.subr.mxu0 0.0
      %2559 = vmatpush1.msra.mxu0 0.0
      %2560 = vmatprep.subr.mxu0 0.0
      %2561 = vmatpush1.msra.mxu0 0.0
      %2562 = vmatprep.subr.mxu0 0.0
      %2563 = vmatpush1.msra.mxu0 0.0
      %2564 = vmatprep.subr.mxu0 0.0
      %2565 = vmatpush1.msra.mxu0 0.0
      %2566 = vmatprep.subr.mxu0 0.0
      %2567 = vmatpush1.msra.mxu0 0.0
      %2568 = vmatprep.subr.mxu0 0.0
      %2569 = vmatpush1.msra.mxu0 0.0
      %2570 = vmatprep.subr.mxu0 0.0
      %2571 = vmatpush1.msra.mxu0 0.0
      %2572 = vmatprep.subr.mxu0 0.0
      %2573 = vmatpush1.msra.mxu0 0.0
      %2574 = vmatprep.subr.mxu0 0.0
      %2575 = vmatpush1.msra.mxu0 0.0
      %2576 = vmatprep.subr.mxu0 0.0
      %2577 = vmatpush1.msra.mxu0 0.0
      %2578 = vmatprep.subr.mxu0 0.0
      %2579 = vmatpush1.msra.mxu0 0.0
      %2580 = vmatprep.subr.mxu0 0.0
      %2581 = vmatpush1.msra.mxu0 0.0
      %2582 = vmatprep.subr.mxu0 0.0
      %2583 = vmatpush1.msra.mxu0 0.0
      %2584 = vmatprep.subr.mxu0 0.0
      %2585 = vmatpush1.msra.mxu0 0.0
      %2586 = vmatprep.subr.mxu0 0.0
      %2587 = vmatpush1.msra.mxu0 0.0
      %2588 = vmatprep.subr.mxu0 0.0
      %2589 = vmatpush1.msra.mxu0 0.0
      %2590 = vmatprep.subr.mxu0 0.0
      %2591 = vmatpush1.msra.mxu0 0.0
      %2592 = vmatprep.subr.mxu0 0.0
      %2593 = vmatpush1.msra.mxu0 0.0
      %2594 = vmatprep.subr.mxu0 0.0
      %2595 = vmatpush1.msra.mxu0 0.0
      %2596 = vmatprep.subr.mxu0 0.0
      %2597 = vmatpush1.msra.mxu0 0.0
      %2598 = vmatprep.subr.mxu0 0.0
      %2599 = vmatpush1.msra.mxu0 0.0
      %2600 = vmatprep.mubr.f32.mxu0 0.0
      %2601 = vmatmul.mubr.f32.gmra.mrb[0].mxu0 %v2525
      %v2602 = vpop.f32.mrb[0].mxu0
      %v2603 = vadd.f32 0.0, %v2602
      %v2604 = vpop.f32.mrb[0].mxu0
      %2605 = vmatprep.mubr.f32.mxu0 0.0
      %2606 = vmatmul.mubr.f32.gmra.mrb[0].mxu0 %v2528
      %v2607 = vpop.f32.mrb[0].mxu0
      %v2608 = vadd.f32 0.0, %v2607
      %v2609 = vpop.f32.mrb[0].mxu0
      %2610 = vmatprep.mubr.f32.mxu0 0.0
      %2611 = vmatmul.mubr.f32.gmra.mrb[0].mxu0 %v2531
      %v2612 = vpop.f32.mrb[0].mxu0
      %v2613 = vadd.f32 0.0, %v2612
      %v2614 = vpop.f32.mrb[0].mxu0
      %2615 = vmatprep.mubr.f32.mxu0 0.0
      %2616 = vmatmul.mubr.f32.gmra.mrb[0].mxu0 %v2534
      %v2617 = vpop.f32.mrb[0].mxu0
      %v2618 = vadd.f32 0.0, %v2617
      %v2619 = vpop.f32.mrb[0].mxu0
      %2620 = vdwg.mxu0
      %v2621 = vmul.f32 %v2603, %v2512
      %v2622 = vmul.f32 %v2608, %v2513
      %v2623 = vmul.f32 %v2613, %v2514
      %v2624 = vmul.f32 %v2618, %v2515
      %v2625 = vld [vmem:[%s12] sm:$0x1]
      %v2627 = vlaneseq
      %v2628 = vshrl.u32 %v2627, 7
      %v2629 = vsub.s32 0, %v2628
      %v2630 = vrot.slane %v2625, %v2629
      %v2632 = vmul.f32 %v2621, %v2630
      %v2633 = vmul.f32 %v2622, %v2630
      %v2634 = vmul.f32 %v2623, %v2630
      %v2635 = vmul.f32 %v2624, %v2630
      %v2636 = vld [vmem:[%s13] sm:$0x1]
      %v2638 = vlaneseq
      %v2639 = vshrl.u32 %v2638, 7
      %v2640 = vsub.s32 0, %v2639
      %v2641 = vrot.slane %v2636, %v2640
      %v2643 = vadd.f32 %v2632, %v2641
      %v2644 = vadd.f32 %v2633, %v2641
      %v2645 = vadd.f32 %v2634, %v2641
      %v2646 = vadd.f32 %v2635, %v2641
      %v2647 = vadd.f32 %v2643, %v528
      %v2648 = vadd.f32 %v2644, %v529
      %v2649 = vadd.f32 %v2645, %v530
      %v2650 = vadd.f32 %v2646, %v531
      %v2651 = vmax.f32 %v2647, 0.0
      %v2652 = vmax.f32 %v2648, 0.0
      %v2653 = vmax.f32 %v2649, 0.0
      %v2654 = vmax.f32 %v2650, 0.0
      %2655 = vst [vmem:[%s522] sm:$0xff] %v2651
      %2656 = vst [vmem:[%s522 + $0x8] sm:$0xff] %v2652
      %2657 = vst [vmem:[%s522 + $0x10] sm:$0xff] %v2653
      %2658 = vst [vmem:[%s522 + $0x18] sm:$0xff] %v2654
      %v2659 = vadd.f32 %v2496, %v532
      %v2660 = vadd.f32 %v2497, %v533
      %v2661 = vadd.f32 %v2498, %v534
      %v2662 = vadd.f32 %v2499, %v535
      %2663 = vst [vmem:[%s527] sm:$0xff] %v2659
      %2664 = vst [vmem:[%s527 + $0x8] sm:$0xff] %v2660
      %2665 = vst [vmem:[%s527 + $0x10] sm:$0xff] %v2661
      %2666 = vst [vmem:[%s527 + $0x18] sm:$0xff] %v2662
      %p2667 = scmp.lt.s32.totalorder %s27, 1
      %s2668 = scalar_select %p2667, %s27, 1
      %s2669 = smul.addr %s2668, 4
      %s2670 = smul.addr %s2669, 8
      %s2671 = scalar_lea.vmem %s14, %s2670
      %p2672 = scmp.lt.s32.totalorder %s27, 1
      %s2673 = scalar_select %p2672, %s27, 1
      %s2674 = smul.addr %s2673, 4
      %s2675 = smul.addr %s2674, 8
      %s2676 = scalar_lea.vmem %s15, %s2675
      // Predicated region
      $region77: #{bottleneck_forward.1} parent=75 // pred_check
        %p2677 = pneg %p349
      $region78: #{bottleneck_forward.1} parent=75 // pred_check_branch
        %2679 = sbr.rel (%p2677) target = $region80
      $region79: #{bottleneck_forward.1} parent=75 // pred_region
        _
      $region80: #{bottleneck_forward.1} parent=75 // pred_fallthru
        _
      // Predicated region
      $region81: #{bottleneck_forward.1} parent=75 // pred_check
        %p2680 = pneg %p375
      $region82: #{bottleneck_forward.1} parent=75 // pred_check_branch
        %2682 = sbr.rel (%p2680) target = $region84
      $region83: #{bottleneck_forward.1} parent=75 // pred_region
        _
      $region84: #{bottleneck_forward.1} parent=75 // pred_fallthru
        _
    $region76: #{bottleneck_forward.1} parent=5 // pred_fallthru
      _
    %p2683 = scmp.le.s32.totalorder 2, %s22
    // Predicated region
    $region85: #{bottleneck_forward.1} parent=5 // pred_check
      %p2684 = pneg %p2683
    $region86: #{bottleneck_forward.1} parent=5 // pred_check_branch
      %2686 = sbr.rel (%p2684) target = $region88
    $region87: #{bottleneck_forward.1} parent=5 // pred_region
      %s2687 = ssub.s32 %s22, 2
      // Predicated region
      $region89: #{bottleneck_forward.1} parent=87 // pred_check
        %p2688 = pneg %p355
      $region90: #{bottleneck_forward.1} parent=87 // pred_check_branch
        %2690 = sbr.rel (%p2688) target = $region92
      $region91: #{bottleneck_forward.1} parent=87 // pred_region
        %p2691 = scmp.lt.s32.totalorder %s28, 1
        %s2692 = scalar_select %p2691, %s28, 1
        %s2693 = smul.addr %s2692, 4
        %s2694 = smul.addr %s2693, 8
        %s2695 = scalar_lea.vmem %s14, %s2694
      $region92: #{bottleneck_forward.1} parent=87 // pred_fallthru
        _
      // Predicated region
      $region93: #{bottleneck_forward.1} parent=87 // pred_check
        %p2696 = pneg %p381
      $region94: #{bottleneck_forward.1} parent=87 // pred_check_branch
        %2698 = sbr.rel (%p2696) target = $region96
      $region95: #{bottleneck_forward.1} parent=87 // pred_region
        %p2699 = scmp.lt.s32.totalorder %s28, 1
        %s2700 = scalar_select %p2699, %s28, 1
        %s2701 = smul.addr %s2700, 4
        %s2702 = smul.addr %s2701, 8
        %s2703 = scalar_lea.vmem %s15, %s2702
      $region96: #{bottleneck_forward.1} parent=87 // pred_fallthru
        _
    $region88: #{bottleneck_forward.1} parent=5 // pred_fallthru
      _
  $region6: #{bottleneck_forward.1} parent=0 // loop_footer
    %s26 = sadd.s32 1, %s22
  $region7: #{bottleneck_forward.1} parent=0 // loop_footer_branch
    %21 = sbr.rel target = $region3
  $region8: #{bottleneck_forward.1} parent=0 // loop_exit
    _

</llo_original>
